<compile_context>
chip_gen: v6e
topology: v6e:2x2x1
jax: 0.10.0
libtpu: 0.0.40
codegen_flags: <defaults>
</compile_context>

<pallas_src>
import functools

import jax
import jax.numpy as jnp
from jax.experimental import pallas as pl
from jax.experimental.pallas import tpu as pltpu


# ----------------------------- small deterministic config -----------------------------
class Cfg:
    hidden_size = 32                 # encoder hidden size
    pred_hidden_size = 64            # predictor hidden size
    pred_num_attention_heads = 4     # head_dim = 16
    pred_mlp_ratio = 4.0             # mlp hidden = 256
    pred_num_hidden_layers = 2
    pred_num_mask_tokens = 2
    crop_size = 16
    patch_size = 4                   # grid_size = 4
    frames_per_clip = 2
    tubelet_size = 1                 # grid_depth = 2, num_patches = 2*4*4 = 32
    layer_norm_eps = 1e-6
    qkv_bias = True
    drop_path_rate = 0.0             # DropPath is identity in eval mode anyway
    hidden_act = "gelu"              # exact (erf) gelu, like torch ACT2FN["gelu"]


# ------------------------------- in-kernel math helpers --------------------------------
def _erf_poly(x):
    # Abramowitz & Stegun 7.1.26, max abs err ~1.5e-7 (float32-accurate).
    a1, a2, a3, a4, a5 = 0.254829592, -0.284496736, 1.421413741, -1.453152027, 1.061405429
    p = 0.3275911
    sgn = jnp.where(x >= 0.0, 1.0, -1.0)
    ax = jnp.abs(x)
    t = 1.0 / (1.0 + p * ax)
    poly = ((((a5 * t + a4) * t + a3) * t + a2) * t + a1) * t
    return sgn * (1.0 - poly * jnp.exp(-ax * ax))


def _gelu_exact(x):
    # TODO(synk): torch ACT2FN["gelu"] is the exact erf gelu; lax.erf lowering in Mosaic is
    # not guaranteed, so a float32-accurate erf polynomial (err ~1e-7) is used in-kernel.
    return 0.5 * x * (1.0 + _erf_poly(x * 0.7071067811865476))


# ----------------------------------- Pallas kernels -----------------------------------
def _linear_kernel(x_ref, w_ref, b_ref, o_ref):
    acc = jnp.dot(x_ref[...], w_ref[...], preferred_element_type=jnp.float32)
    o_ref[...] = (acc + b_ref[...]).astype(o_ref.dtype)


def linear_pallas(x2d, w, b):
    """y = x2d @ w + b   (x2d: [M,K], w: [K,N], b: [N]) — tiny embedding projection."""
    M, K = x2d.shape
    N = w.shape[1]
    return pl.pallas_call(
        _linear_kernel,
        out_shape=jax.ShapeDtypeStruct((M, N), x2d.dtype),
        grid=(1,),
        in_specs=[
            pl.BlockSpec((M, K), lambda i: (0, 0)),
            pl.BlockSpec((K, N), lambda i: (0, 0)),
            pl.BlockSpec((1, N), lambda i: (0, 0)),
        ],
        out_specs=pl.BlockSpec((M, N), lambda i: (0, 0)),
        compiler_params=pltpu.CompilerParams(dimension_semantics=("arbitrary",)),
    )(x2d, w, b.reshape(1, N))


def _fused_stack_kernel(h_in_ref, cos_ref, sin_ref,
                        ln1g_ref, ln1b_ref, qkvw_ref, qkvb_ref,
                        projw_ref, projb_ref, ln2g_ref, ln2b_ref,
                        fc1w_ref, fc1b_ref, fc2w_ref, fc2b_ref,
                        lnfg_ref, lnfb_ref, outw_ref, outb_ref,
                        out_ref, acc_ref, *, num_heads, head_dim, eps):
    """One grid step == one (batch row, transformer layer).

    Residual stream lives in `acc_ref` (VMEM) across the layer axis.  Layer weights are
    layer-stacked, VMEM-resident refs indexed with `l` in-kernel (DMA'd once, not per step).
    The final LayerNorm + output projection run in the last-layer epilogue.
    """
    l = pl.program_id(1)
    D = num_heads * head_dim

    @pl.when(l == 0)
    def _():
        acc_ref[...] = h_in_ref[0].astype(jnp.float32)

    h = acc_ref[...]                              # [N, Dp] residual stream (f32)
    cos = cos_ref[0]                              # [N, Dp] RoPE cos (per-head tiled)
    sin = sin_ref[0]                              # [N, Dp] RoPE sin

    def ln(x, g, b):
        mu = jnp.mean(x, axis=-1, keepdims=True)
        var = jnp.mean(jnp.square(x - mu), axis=-1, keepdims=True)
        return (x - mu) * jax.lax.rsqrt(var + eps) * g + b

    # ---------------- attention block ----------------
    x = ln(h, ln1g_ref[l], ln1b_ref[l])
    # Fused [Dp, 5Dp] weight = [s*Wq | Wk | Wv | s*Wq@P | Wk@P]; RoPE swap + softmax scale
    # are pre-folded host-side, so rotation is purely elementwise here.
    qkv = jnp.dot(x, qkvw_ref[l], preferred_element_type=jnp.float32) + qkvb_ref[l]  # [N,5Dp]
    q = qkv[:, :D] * cos + qkv[:, 3 * D:4 * D] * sin          # already scaled by hd^-0.5
    k = qkv[:, D:2 * D] * cos + qkv[:, 4 * D:5 * D] * sin
    v = qkv[:, 2 * D:3 * D]

    projw = projw_ref[l]                                       # [Dp, Dp]
    attn = jnp.zeros_like(h)
    for hh in range(num_heads):                                # static loop over heads
        s0 = hh * head_dim
        qh = q[:, s0:s0 + head_dim]
        kh = k[:, s0:s0 + head_dim]
        vh = v[:, s0:s0 + head_dim]
        s = jnp.dot(qh, kh.T, preferred_element_type=jnp.float32)        # [N, N]
        s = s - jnp.max(s, axis=-1, keepdims=True)
        pexp = jnp.exp(s)
        # approx reciprocal (EUP): ~1e-4 relative error on the softmax normalization.
        pexp = pexp * pl.reciprocal(jnp.sum(pexp, axis=-1, keepdims=True), approx=True)
        ctx_h = jnp.dot(pexp, vh, preferred_element_type=jnp.float32)    # [N, hd]
        # accumulate the out-projection per head (no lane-axis concat of per-head tiles)
        attn = attn + jnp.dot(ctx_h, projw[s0:s0 + head_dim, :],
                              preferred_element_type=jnp.float32)
    h = h + attn + projb_ref[l]                  # drop_path is identity (eval / rate 0)

    # ------------------- MLP block --------------------
    x = ln(h, ln2g_ref[l], ln2b_ref[l])
    x = jnp.dot(x, fc1w_ref[l], preferred_element_type=jnp.float32) + fc1b_ref[l]    # [N, Dm]
    x = _gelu_exact(x)
    x = jnp.dot(x, fc2w_ref[l], preferred_element_type=jnp.float32) + fc2b_ref[l]
    h = h + x

    acc_ref[...] = h

    # ---------- last-layer epilogue: final LayerNorm + output projection ----------
    @pl.when(l == pl.num_programs(1) - 1)
    def _():
        y = ln(h, lnfg_ref[...], lnfb_ref[...])
        out_ref[0] = (jnp.dot(y, outw_ref[...], preferred_element_type=jnp.float32)
                      + outb_ref[...]).astype(out_ref.dtype)


def transformer_stack_pallas(params, cfg, h, cos_full, sin_full):
    B, N, Dp = h.shape
    L = cfg.pred_num_hidden_layers
    H = cfg.pred_num_attention_heads
    hd = Dp // H
    Dm = int(Dp * cfg.pred_mlp_ratio)
    D = cfg.hidden_size

    act_spec = pl.BlockSpec((1, N, Dp), lambda b, l: (b, 0, 0))
    # full-L, constant-index weight blocks -> DMA'd once, VMEM-resident for the whole grid
    res_spec = lambda r, c: pl.BlockSpec((L, r, c), lambda b, l: (0, 0, 0))
    const2 = lambda r, c: pl.BlockSpec((r, c), lambda b, l: (0, 0))

    # advisory cost hint for the XLA scheduler
    flops_layer = (2 * N * Dp * 5 * Dp                    # fused qkv(+rope) matmul
                   + H * (4 * N * N * hd + 2 * N * hd * Dp)  # scores + ctx + proj accumulation
                   + 4 * N * Dp * Dm)                      # fc1 + fc2
    flops = int(B * L * flops_layer + B * 2 * N * Dp * D)
    transcendentals = int(B * L * (H * N * N + N * Dm))
    bytes_accessed = int(4 * (3 * B * N * Dp + B * N * D
                              + L * (Dp * 5 * Dp + Dp * Dp + 2 * Dp * Dm + 9 * Dp + Dm)
                              + Dp * D + 2 * Dp + D))

    kernel = functools.partial(_fused_stack_kernel, num_heads=H, head_dim=hd,
                               eps=cfg.layer_norm_eps)
    return pl.pallas_call(
        kernel,
        out_shape=jax.ShapeDtypeStruct((B, N, D), jnp.float32),
        grid=(B, L),
        in_specs=[
            act_spec, act_spec, act_spec,                     # h_in, cos, sin
            res_spec(1, Dp), res_spec(1, Dp),                 # ln1 gamma / beta
            res_spec(Dp, 5 * Dp), res_spec(1, 5 * Dp),        # fused qkv(+rope-swap) w / b
            res_spec(Dp, Dp), res_spec(1, Dp),                # attn out-proj w / b
            res_spec(1, Dp), res_spec(1, Dp),                 # ln2 gamma / beta
            res_spec(Dp, Dm), res_spec(1, Dm),                # fc1 w / b
            res_spec(Dm, Dp), res_spec(1, Dp),                # fc2 w / b
            const2(1, Dp), const2(1, Dp),                     # final LN gamma / beta
            const2(Dp, D), const2(1, D),                      # output proj w / b
        ],
        out_specs=pl.BlockSpec((1, N, D), lambda b, l: (b, 0, 0)),
        scratch_shapes=[pltpu.VMEM((N, Dp), jnp.float32)],
        compiler_params=pltpu.CompilerParams(
            dimension_semantics=("parallel", "arbitrary"),
            vmem_limit_bytes=32 * 1024 * 1024),
        cost_estimate=pl.CostEstimate(flops=flops, transcendentals=transcendentals,
                                      bytes_accessed=bytes_accessed),
    )(h, cos_full, sin_full,
      params["ln1_g"], params["ln1_b"], params["qkv5_w"], params["qkv5_b"],
      params["proj_w"], params["proj_b"], params["ln2_g"], params["ln2_b"],
      params["fc1_w"], params["fc1_b"], params["fc2_w"], params["fc2_b"],
      params["ln_f_g"], params["ln_f_b"], params["out_w"], params["out_b"])


# ----------------------------------- pure-JAX glue -------------------------------------
def apply_masks(x, masks):
    # x: [B, N, D]; masks: list of [B, K] int index tensors
    return jnp.concatenate(
        [jnp.take_along_axis(x, m[..., None], axis=1) for m in masks], axis=0)


def build_pair_swap_matrix(dim):
    # (x @ P)[2i] = -x[2i+1], (x @ P)[2i+1] = x[2i]  — torch's unflatten/unbind/stack rotation.
    idx = jnp.arange(0, dim, 2)
    P = jnp.zeros((dim, dim), jnp.float32)
    P = P.at[idx + 1, idx].set(-1.0)
    P = P.at[idx, idx + 1].set(1.0)
    return P


def build_rope_tables(pos_masks, cfg, num_heads, head_dim):
    """cos/sin tables [B, N, num_heads*head_dim] matching the torch RoPE layout.

    rotate_queries_or_keys(x, pos) = x*cos_tiled + pair_swap(x)*sin_tiled (torch .repeat
    tile semantics); all heads share the same position ids so one head's pattern is tiled
    across heads; the un-rotated trailing dims of each head get cos=1, sin=0.
    """
    grid_size = cfg.crop_size // cfg.patch_size
    tokens_per_frame = grid_size * grid_size
    ids = pos_masks
    frame_ids = ids // tokens_per_frame
    rem = ids - tokens_per_frame * frame_ids
    height_ids = rem // grid_size
    width_ids = rem - grid_size * height_ids

    d_dim = int(2 * (head_dim // 3 // 2))
    half = d_dim // 2
    omega = jnp.arange(half, dtype=jnp.float32) / (d_dim / 2.0)
    omega = 1.0 / (10000.0 ** omega)

    def sub(pos):
        freq = pos.astype(jnp.float32)[..., None] * omega          # [B, N, half]
        return jnp.tile(jnp.cos(freq), (1, 1, 2)), jnp.tile(jnp.sin(freq), (1, 1, 2))

    cd, sd = sub(frame_ids)
    ch, sh = sub(height_ids)
    cw, sw = sub(width_ids)
    cos_parts, sin_parts = [cd, ch, cw], [sd, sh, sw]
    rest = head_dim - 3 * d_dim
    if rest > 0:
        cos_parts.append(jnp.ones(cd.shape[:2] + (rest,), jnp.float32))
        sin_parts.append(jnp.zeros(cd.shape[:2] + (rest,), jnp.float32))
    cos_head = jnp.concatenate(cos_parts, axis=-1)                 # [B, N, head_dim]
    sin_head = jnp.concatenate(sin_parts, axis=-1)
    return jnp.tile(cos_head, (1, 1, num_heads)), jnp.tile(sin_head, (1, 1, num_heads))


def vjepa2_predictor_forward(params, encoder_hidden_states, context_mask, target_mask,
                             cfg, mask_index=1):
    # TODO(synk): only len(context_mask) == len(target_mask) == 1 is supported (standard
    # usage); the multi-mask repeat path of the reference is not replicated here.
    D = cfg.hidden_size
    Dp = cfg.pred_hidden_size
    H = cfg.pred_num_attention_heads
    hd = Dp // H

    # apply_masks on encoder outputs with context masks (gather of kept patches)
    ehs = apply_masks(encoder_hidden_states, context_mask)          # [B, K_ctx, D]
    Bp, N_ctxt, _ = ehs.shape

    # --- VJEPA2PredictorEmbeddings ---
    ctx = linear_pallas(ehs.reshape(-1, D), params["embed_w"], params["embed_b"])
    ctx = ctx.reshape(Bp, N_ctxt, Dp)
    mi = mask_index % cfg.pred_num_mask_tokens
    token = params["mask_tokens"][mi]                               # [1, 1, Dp]
    K_tgt = target_mask[0].shape[1]
    # the repeated mask token is identical at every position -> gather == broadcast
    target = jnp.broadcast_to(token.reshape(1, 1, Dp), (Bp, K_tgt, Dp))
    embeddings = jnp.concatenate([ctx, target], axis=1)             # [B, N_tot, Dp]
    cm = jnp.concatenate(context_mask, axis=0)
    tm = jnp.concatenate(target_mask, axis=0)
    masks = jnp.concatenate([cm, tm], axis=1)                       # [B, N_tot]

    # --- sort tokens by position id ---
    argsort = jnp.argsort(masks, axis=1)
    pos_masks = jnp.take_along_axis(masks, argsort, axis=1)
    h = jnp.take_along_axis(embeddings, argsort[..., None], axis=1)

    # --- RoPE tables, hoisted out of the layer loop (shared by all layers and by q/k) ---
    cos_full, sin_full = build_rope_tables(pos_masks, cfg, H, hd)

    # --- fused transformer stack + final LN + output proj: ONE pallas_call ---
    out = transformer_stack_pallas(params, cfg, h, cos_full, sin_full)   # [B, N, D]

    # --- unsort, slice predicted tokens (LN/proj are per-token so they commute with both) ---
    rev = jnp.argsort(argsort, axis=1)
    out = jnp.take_along_axis(out, rev[..., None], axis=1)
    out = out[:, N_ctxt:]                                               # [B, K_tgt, D]
    return out


# --------------------------------- parameter init --------------------------------------
def init_params(key, cfg):
    D = cfg.hidden_size
    Dp = cfg.pred_hidden_size
    Dm = int(Dp * cfg.pred_mlp_ratio)
    L = cfg.pred_num_hidden_layers
    H = cfg.pred_num_attention_heads
    hd = Dp // H
    scale = hd ** -0.5

    def lin(k, fin, fout):
        kw, kb = jax.random.split(k)
        return (jax.random.normal(kw, (fin, fout), jnp.float32) * 0.02,
                jax.random.normal(kb, (fout,), jnp.float32) * 0.02)

    keys = jax.random.split(key, 4 + L)
    embed_w, embed_b = lin(keys[0], D, Dp)
    mask_tokens = jax.random.normal(keys[1], (cfg.pred_num_mask_tokens, 1, 1, Dp),
                                    jnp.float32) * 0.02
    out_w, out_b = lin(keys[2], Dp, D)

    P = build_pair_swap_matrix(Dp)                                  # RoPE pair-swap matrix

    qkv5_w, qkv5_b = [], []
    pw_l, pb_l = [], []
    f1w_l, f1b_l, f2w_l, f2b_l = [], [], [], []
    for i in range(L):
        lk = jax.random.split(keys[4 + i], 6)
        qw, qb = lin(lk[0], Dp, Dp)
        kw_, kb_ = lin(lk[1], Dp, Dp)
        vw, vb = lin(lk[2], Dp, Dp)
        # fold RoPE pair-swap and the 1/sqrt(head_dim) softmax scale into the fused weight:
        #   q_rope = (x@Wq+bq)*cos + (x@(Wq@P)+bq@P)*sin   (scale folded into q columns)
        qw_s, qb_s = qw * scale, qb * scale
        qkv5_w.append(jnp.concatenate([qw_s, kw_, vw, qw_s @ P, kw_ @ P], axis=1))  # [Dp,5Dp]
        qkv5_b.append(jnp.concatenate([qb_s, kb_, vb, qb_s @ P, kb_ @ P], axis=0))  # [5Dp]
        pw, pb = lin(lk[3], Dp, Dp); pw_l.append(pw); pb_l.append(pb)
        w1, b1 = lin(lk[4], Dp, Dm); f1w_l.append(w1); f1b_l.append(b1)
        w2, b2 = lin(lk[5], Dm, Dp); f2w_l.append(w2); f2b_l.append(b2)

    stack = lambda xs: jnp.stack(xs, axis=0)
    return dict(
        embed_w=embed_w, embed_b=embed_b, mask_tokens=mask_tokens,
        ln_f_g=jnp.ones((1, Dp), jnp.float32), ln_f_b=jnp.zeros((1, Dp), jnp.float32),
        out_w=out_w, out_b=out_b.reshape(1, D),
        ln1_g=jnp.ones((L, 1, Dp), jnp.float32), ln1_b=jnp.zeros((L, 1, Dp), jnp.float32),
        ln2_g=jnp.ones((L, 1, Dp), jnp.float32), ln2_b=jnp.zeros((L, 1, Dp), jnp.float32),
        qkv5_w=stack(qkv5_w), qkv5_b=stack(qkv5_b)[:, None, :],
        proj_w=stack(pw_l), proj_b=stack(pb_l)[:, None, :],
        fc1_w=stack(f1w_l), fc1_b=stack(f1b_l)[:, None, :],
        fc2_w=stack(f2w_l), fc2_b=stack(f2b_l)[:, None, :],
    )


# -------------------------------------- main --------------------------------------------
if __name__ == "__main__":
    cfg = Cfg()
    key = jax.random.PRNGKey(0)
    k_param, k_x, k_m = jax.random.split(key, 3)

    params = init_params(k_param, cfg)

    B = 2
    num_patches = (cfg.frames_per_clip // cfg.tubelet_size) * \
                  (cfg.crop_size // cfg.patch_size) ** 2             # 32
    K_ctx, K_tgt = 16, 8

    encoder_hidden_states = jax.random.normal(
        k_x, (B, num_patches, cfg.hidden_size), jnp.float32)

    # disjoint context / target patch indices per batch row
    perms = jnp.stack([jax.random.permutation(jax.random.fold_in(k_m, i), num_patches)
                       for i in range(B)])
    context_mask = [jnp.sort(perms[:, :K_ctx], axis=1).astype(jnp.int32)]              # [B, 16]
    target_mask = [jnp.sort(perms[:, K_ctx:K_ctx + K_tgt], axis=1).astype(jnp.int32)]  # [B, 8]

    fwd = jax.jit(functools.partial(vjepa2_predictor_forward, cfg=cfg, mask_index=1))
    out = fwd(params, encoder_hidden_states, context_mask, target_mask)
    out = jax.block_until_ready(out)

    assert out.shape == (B, K_tgt, cfg.hidden_size), out.shape
    assert bool(jnp.all(jnp.isfinite(out)))
    print("KERNEL_OK")
</pallas_src>

<mosaic_0001>
module attributes {stable_mosaic.version = 11 : i64} {
  func.func @_linear_kernel(%arg0: i32, %arg1: memref<32x32xf32, #tpu.memory_space<vmem>>, %arg2: memref<32x64xf32, #tpu.memory_space<vmem>>, %arg3: memref<1x64xf32, #tpu.memory_space<vmem>>, %arg4: memref<32x64xf32, #tpu.memory_space<vmem>>) attributes {dimension_semantics = [#tpu.dimension_semantics<arbitrary>], iteration_bounds = array<i64: 1>, scalar_prefetch = 0 : i64, scratch_operands = 0 : i64, tpu.core_type = #tpu.core_type<tc>, window_params = [{pipeline_mode = #tpu.pipeline_mode<synchronous>, transform_indices = @transform_0, window_bounds = array<i64: 32, 32>}, {pipeline_mode = #tpu.pipeline_mode<synchronous>, transform_indices = @transform_1, window_bounds = array<i64: 32, 64>}, {pipeline_mode = #tpu.pipeline_mode<synchronous>, transform_indices = @transform_2, window_bounds = array<i64: 1, 64>}, {pipeline_mode = #tpu.pipeline_mode<synchronous>, transform_indices = @transform_3, window_bounds = array<i64: 32, 64>}]} {
    %c0 = arith.constant 0 : index
    %c0_0 = arith.constant 0 : index
    %0 = vector.load %arg1[%c0, %c0_0] : memref<32x32xf32, #tpu.memory_space<vmem>>, vector<32x32xf32>
    %c0_1 = arith.constant 0 : index
    %c0_2 = arith.constant 0 : index
    %1 = vector.load %arg2[%c0_1, %c0_2] : memref<32x64xf32, #tpu.memory_space<vmem>>, vector<32x64xf32>
    %cst = arith.constant dense<0.000000e+00> : vector<32x64xf32>
    %2 = tpu.matmul %0, %1, %cst {dimension_numbers = #tpu.dot_dimension_numbers<[1], [0], [0], [1], [0, 0, 1, 1], [], []>} : vector<32x32xf32>, vector<32x64xf32>, vector<32x64xf32> -> vector<32x64xf32>
    %c0_3 = arith.constant 0 : index
    %c0_4 = arith.constant 0 : index
    %3 = vector.load %arg3[%c0_3, %c0_4] : memref<1x64xf32, #tpu.memory_space<vmem>>, vector<1x64xf32>
    %4 = vector.broadcast %3 : vector<1x64xf32> to vector<32x64xf32>
    %5 = arith.addf %2, %4 : vector<32x64xf32>
    %c0_5 = arith.constant 0 : index
    %c0_6 = arith.constant 0 : index
    %6 = vector.load %arg4[%c0_5, %c0_6] : memref<32x64xf32, #tpu.memory_space<vmem>>, vector<32x64xf32>
    tpu.vector_store %arg4[%c0_5, %c0_6], %5 {strides = array<i32>} : memref<32x64xf32, #tpu.memory_space<vmem>>, vector<32x64xf32>,
    return
  }
  func.func @transform_0(%arg0: i32) -> (i32, i32) {
    %c0_i32 = arith.constant 0 : i32
    %c0_i32_0 = arith.constant 0 : i32
    %c0_i32_1 = arith.constant 0 : i32
    return %c0_i32, %c0_i32_0 : i32, i32
  }
  func.func @transform_1(%arg0: i32) -> (i32, i32) {
    %c0_i32 = arith.constant 0 : i32
    %c0_i32_0 = arith.constant 0 : i32
    %c0_i32_1 = arith.constant 0 : i32
    return %c0_i32, %c0_i32_0 : i32, i32
  }
  func.func @transform_2(%arg0: i32) -> (i32, i32) {
    %c0_i32 = arith.constant 0 : i32
    %c0_i32_0 = arith.constant 0 : i32
    %c0_i32_1 = arith.constant 0 : i32
    return %c0_i32, %c0_i32_0 : i32, i32
  }
  func.func @transform_3(%arg0: i32) -> (i32, i32) {
    %c0_i32 = arith.constant 0 : i32
    %c0_i32_0 = arith.constant 0 : i32
    %c0_i32_1 = arith.constant 0 : i32
    return %c0_i32, %c0_i32_0 : i32, i32
  }
}

module attributes {stable_mosaic.version = 11 : i64} {
  func.func @_fused_stack_kernel(%arg0: i32, %arg1: i32, %arg2: memref<1x24x64xf32, #tpu.memory_space<vmem>>, %arg3: memref<1x24x64xf32, #tpu.memory_space<vmem>>, %arg4: memref<1x24x64xf32, #tpu.memory_space<vmem>>, %arg5: memref<2x1x64xf32, #tpu.memory_space<vmem>>, %arg6: memref<2x1x64xf32, #tpu.memory_space<vmem>>, %arg7: memref<2x64x320xf32, #tpu.memory_space<vmem>>, %arg8: memref<2x1x320xf32, #tpu.memory_space<vmem>>, %arg9: memref<2x64x64xf32, #tpu.memory_space<vmem>>, %arg10: memref<2x1x64xf32, #tpu.memory_space<vmem>>, %arg11: memref<2x1x64xf32, #tpu.memory_space<vmem>>, %arg12: memref<2x1x64xf32, #tpu.memory_space<vmem>>, %arg13: memref<2x64x256xf32, #tpu.memory_space<vmem>>, %arg14: memref<2x1x256xf32, #tpu.memory_space<vmem>>, %arg15: memref<2x256x64xf32, #tpu.memory_space<vmem>>, %arg16: memref<2x1x64xf32, #tpu.memory_space<vmem>>, %arg17: memref<1x64xf32, #tpu.memory_space<vmem>>, %arg18: memref<1x64xf32, #tpu.memory_space<vmem>>, %arg19: memref<64x32xf32, #tpu.memory_space<vmem>>, %arg20: memref<1x32xf32, #tpu.memory_space<vmem>>, %arg21: memref<1x24x32xf32, #tpu.memory_space<vmem>>, %arg22: memref<24x64xf32, #tpu.memory_space<vmem>>) attributes {dimension_semantics = [#tpu.dimension_semantics<parallel>, #tpu.dimension_semantics<arbitrary>], iteration_bounds = array<i64: 2, 2>, scalar_prefetch = 0 : i64, scratch_operands = 1 : i64, tpu.core_type = #tpu.core_type<tc>, window_params = [{transform_indices = @transform_0, window_bounds = array<i64: 1, 24, 64>}, {transform_indices = @transform_1, window_bounds = array<i64: 1, 24, 64>}, {transform_indices = @transform_2, window_bounds = array<i64: 1, 24, 64>}, {pipeline_mode = #tpu.pipeline_mode<synchronous>, transform_indices = @transform_3, window_bounds = array<i64: 2, 1, 64>}, {pipeline_mode = #tpu.pipeline_mode<synchronous>, transform_indices = @transform_4, window_bounds = array<i64: 2, 1, 64>}, {pipeline_mode = #tpu.pipeline_mode<synchronous>, transform_indices = @transform_5, window_bounds = array<i64: 2, 64, 320>}, {pipeline_mode = #tpu.pipeline_mode<synchronous>, transform_indices = @transform_6, window_bounds = array<i64: 2, 1, 320>}, {pipeline_mode = #tpu.pipeline_mode<synchronous>, transform_indices = @transform_7, window_bounds = array<i64: 2, 64, 64>}, {pipeline_mode = #tpu.pipeline_mode<synchronous>, transform_indices = @transform_8, window_bounds = array<i64: 2, 1, 64>}, {pipeline_mode = #tpu.pipeline_mode<synchronous>, transform_indices = @transform_9, window_bounds = array<i64: 2, 1, 64>}, {pipeline_mode = #tpu.pipeline_mode<synchronous>, transform_indices = @transform_10, window_bounds = array<i64: 2, 1, 64>}, {pipeline_mode = #tpu.pipeline_mode<synchronous>, transform_indices = @transform_11, window_bounds = array<i64: 2, 64, 256>}, {pipeline_mode = #tpu.pipeline_mode<synchronous>, transform_indices = @transform_12, window_bounds = array<i64: 2, 1, 256>}, {pipeline_mode = #tpu.pipeline_mode<synchronous>, transform_indices = @transform_13, window_bounds = array<i64: 2, 256, 64>}, {pipeline_mode = #tpu.pipeline_mode<synchronous>, transform_indices = @transform_14, window_bounds = array<i64: 2, 1, 64>}, {pipeline_mode = #tpu.pipeline_mode<synchronous>, transform_indices = @transform_15, window_bounds = array<i64: 1, 64>}, {pipeline_mode = #tpu.pipeline_mode<synchronous>, transform_indices = @transform_16, window_bounds = array<i64: 1, 64>}, {pipeline_mode = #tpu.pipeline_mode<synchronous>, transform_indices = @transform_17, window_bounds = array<i64: 64, 32>}, {pipeline_mode = #tpu.pipeline_mode<synchronous>, transform_indices = @transform_18, window_bounds = array<i64: 1, 32>}, {transform_indices = @transform_19, window_bounds = array<i64: 1, 24, 32>}]} {
    %c0_i32 = arith.constant 0 : i32
    %0 = arith.cmpi eq, %arg1, %c0_i32 : i32
    %1 = arith.extui %0 : i1 to i32
    %c0_i32_0 = arith.constant 0 : i32
    %2 = arith.cmpi ne, %1, %c0_i32_0 : i32
    scf.if %2 {
      %c0_84 = arith.constant 0 : index
      %c0_85 = arith.constant 0 : index
      %c0_86 = arith.constant 0 : index
      %234 = vector.load %arg2[%c0_84, %c0_85, %c0_86] : memref<1x24x64xf32, #tpu.memory_space<vmem>>, vector<1x24x64xf32>
      %235 = vector.shape_cast %234 : vector<1x24x64xf32> to vector<24x64xf32>
      %c0_87 = arith.constant 0 : index
      %c0_88 = arith.constant 0 : index
      %236 = vector.load %arg22[%c0_87, %c0_88] : memref<24x64xf32, #tpu.memory_space<vmem>>, vector<24x64xf32>
      tpu.vector_store %arg22[%c0_87, %c0_88], %235 {strides = array<i32>} : memref<24x64xf32, #tpu.memory_space<vmem>>, vector<24x64xf32>,
    } else {
    }
    %c0 = arith.constant 0 : index
    %c0_1 = arith.constant 0 : index
    %3 = vector.load %arg22[%c0, %c0_1] : memref<24x64xf32, #tpu.memory_space<vmem>>, vector<24x64xf32>
    %c0_2 = arith.constant 0 : index
    %c0_3 = arith.constant 0 : index
    %c0_4 = arith.constant 0 : index
    %4 = vector.load %arg3[%c0_2, %c0_3, %c0_4] : memref<1x24x64xf32, #tpu.memory_space<vmem>>, vector<1x24x64xf32>
    %5 = vector.shape_cast %4 : vector<1x24x64xf32> to vector<24x64xf32>
    %c0_5 = arith.constant 0 : index
    %c0_6 = arith.constant 0 : index
    %c0_7 = arith.constant 0 : index
    %6 = vector.load %arg4[%c0_5, %c0_6, %c0_7] : memref<1x24x64xf32, #tpu.memory_space<vmem>>, vector<1x24x64xf32>
    %7 = vector.shape_cast %6 : vector<1x24x64xf32> to vector<24x64xf32>
    %8 = arith.index_cast %arg1 : i32 to index
    %c0_8 = arith.constant 0 : index
    %c0_9 = arith.constant 0 : index
    %9 = vector.load %arg5[%8, %c0_8, %c0_9] : memref<2x1x64xf32, #tpu.memory_space<vmem>>, vector<1x1x64xf32>
    %10 = vector.shape_cast %9 : vector<1x1x64xf32> to vector<1x64xf32>
    %11 = arith.index_cast %arg1 : i32 to index
    %c0_10 = arith.constant 0 : index
    %c0_11 = arith.constant 0 : index
    %12 = vector.load %arg6[%11, %c0_10, %c0_11] : memref<2x1x64xf32, #tpu.memory_space<vmem>>, vector<1x1x64xf32>
    %13 = vector.shape_cast %12 : vector<1x1x64xf32> to vector<1x64xf32>
    %cst = arith.constant dense<0.000000e+00> : vector<24xf32>
    %14 = vector.multi_reduction <add>, %3, %cst [1] : vector<24x64xf32> to vector<24xf32>
    %15 = vector.shape_cast %14 : vector<24xf32> to vector<24x1xf32>
    %cst_12 = arith.constant 6.400000e+01 : f32
    %16 = vector.broadcast %cst_12 : f32 to vector<24x1xf32>
    %17 = arith.divf %15, %16 : vector<24x1xf32>
    %18 = vector.broadcast %17 : vector<24x1xf32> to vector<24x64xf32>
    %19 = arith.subf %3, %18 : vector<24x64xf32>
    %20 = arith.mulf %19, %19 : vector<24x64xf32>
    %cst_13 = arith.constant dense<0.000000e+00> : vector<24xf32>
    %21 = vector.multi_reduction <add>, %20, %cst_13 [1] : vector<24x64xf32> to vector<24xf32>
    %22 = vector.shape_cast %21 : vector<24xf32> to vector<24x1xf32>
    %cst_14 = arith.constant 6.400000e+01 : f32
    %23 = vector.broadcast %cst_14 : f32 to vector<24x1xf32>
    %24 = arith.divf %22, %23 : vector<24x1xf32>
    %25 = vector.broadcast %17 : vector<24x1xf32> to vector<24x64xf32>
    %26 = arith.subf %3, %25 : vector<24x64xf32>
    %cst_15 = arith.constant 9.99999997E-7 : f32
    %27 = vector.broadcast %cst_15 : f32 to vector<24x1xf32>
    %28 = arith.addf %24, %27 : vector<24x1xf32>
    %29 = math.rsqrt %28 : vector<24x1xf32>
    %30 = vector.broadcast %29 : vector<24x1xf32> to vector<24x64xf32>
    %31 = arith.mulf %26, %30 : vector<24x64xf32>
    %32 = vector.broadcast %10 : vector<1x64xf32> to vector<24x64xf32>
    %33 = arith.mulf %31, %32 : vector<24x64xf32>
    %34 = vector.broadcast %13 : vector<1x64xf32> to vector<24x64xf32>
    %35 = arith.addf %33, %34 : vector<24x64xf32>
    %36 = arith.index_cast %arg1 : i32 to index
    %c0_16 = arith.constant 0 : index
    %c0_17 = arith.constant 0 : index
    %37 = vector.load %arg7[%36, %c0_16, %c0_17] : memref<2x64x320xf32, #tpu.memory_space<vmem>>, vector<1x64x320xf32>
    %38 = vector.shape_cast %37 : vector<1x64x320xf32> to vector<64x320xf32>
    %cst_18 = arith.constant dense<0.000000e+00> : vector<24x320xf32>
    %39 = tpu.matmul %35, %38, %cst_18 {dimension_numbers = #tpu.dot_dimension_numbers<[1], [0], [0], [1], [0, 0, 1, 1], [], []>} : vector<24x64xf32>, vector<64x320xf32>, vector<24x320xf32> -> vector<24x320xf32>
    %40 = arith.index_cast %arg1 : i32 to index
    %c0_19 = arith.constant 0 : index
    %c0_20 = arith.constant 0 : index
    %41 = vector.load %arg8[%40, %c0_19, %c0_20] : memref<2x1x320xf32, #tpu.memory_space<vmem>>, vector<1x1x320xf32>
    %42 = vector.shape_cast %41 : vector<1x1x320xf32> to vector<1x320xf32>
    %43 = vector.broadcast %42 : vector<1x320xf32> to vector<24x320xf32>
    %44 = arith.addf %39, %43 : vector<24x320xf32>
    %45 = vector.extract_strided_slice %44 {offsets = [0, 0], sizes = [24, 64], strides = [1, 1]} : vector<24x320xf32> to vector<24x64xf32>
    %46 = arith.mulf %45, %5 : vector<24x64xf32>
    %47 = vector.extract_strided_slice %44 {offsets = [0, 192], sizes = [24, 64], strides = [1, 1]} : vector<24x320xf32> to vector<24x64xf32>
    %48 = arith.mulf %47, %7 : vector<24x64xf32>
    %49 = arith.addf %46, %48 : vector<24x64xf32>
    %50 = vector.extract_strided_slice %44 {offsets = [0, 64], sizes = [24, 64], strides = [1, 1]} : vector<24x320xf32> to vector<24x64xf32>
    %51 = arith.mulf %50, %5 : vector<24x64xf32>
    %52 = vector.extract_strided_slice %44 {offsets = [0, 256], sizes = [24, 64], strides = [1, 1]} : vector<24x320xf32> to vector<24x64xf32>
    %53 = arith.mulf %52, %7 : vector<24x64xf32>
    %54 = arith.addf %51, %53 : vector<24x64xf32>
    %55 = vector.extract_strided_slice %44 {offsets = [0, 128], sizes = [24, 64], strides = [1, 1]} : vector<24x320xf32> to vector<24x64xf32>
    %56 = arith.index_cast %arg1 : i32 to index
    %c0_21 = arith.constant 0 : index
    %c0_22 = arith.constant 0 : index
    %57 = vector.load %arg9[%56, %c0_21, %c0_22] : memref<2x64x64xf32, #tpu.memory_space<vmem>>, vector<1x64x64xf32>
    %58 = vector.shape_cast %57 : vector<1x64x64xf32> to vector<64x64xf32>
    %cst_23 = arith.constant 0.000000e+00 : f32
    %59 = vector.broadcast %cst_23 : f32 to vector<24x64xf32>
    %60 = vector.extract_strided_slice %49 {offsets = [0, 0], sizes = [24, 16], strides = [1, 1]} : vector<24x64xf32> to vector<24x16xf32>
    %61 = vector.extract_strided_slice %54 {offsets = [0, 0], sizes = [24, 16], strides = [1, 1]} : vector<24x64xf32> to vector<24x16xf32>
    %62 = vector.extract_strided_slice %55 {offsets = [0, 0], sizes = [24, 16], strides = [1, 1]} : vector<24x64xf32> to vector<24x16xf32>
    %63 = tpu.transpose %61, [1, 0] : vector<24x16xf32> -> vector<16x24xf32>
    %cst_24 = arith.constant dense<0.000000e+00> : vector<24x24xf32>
    %64 = tpu.matmul %60, %63, %cst_24 {dimension_numbers = #tpu.dot_dimension_numbers<[1], [0], [0], [1], [0, 0, 1, 1], [], []>} : vector<24x16xf32>, vector<16x24xf32>, vector<24x24xf32> -> vector<24x24xf32>
    %cst_25 = arith.constant dense<0xFF800000> : vector<24xf32>
    %65 = vector.multi_reduction <maximumf>, %64, %cst_25 [1] : vector<24x24xf32> to vector<24xf32>
    %66 = vector.shape_cast %65 : vector<24xf32> to vector<24x1xf32>
    %67 = vector.broadcast %66 : vector<24x1xf32> to vector<24x24xf32>
    %68 = arith.subf %64, %67 : vector<24x24xf32>
    %69 = math.exp %68 : vector<24x24xf32>
    %cst_26 = arith.constant dense<0.000000e+00> : vector<24xf32>
    %70 = vector.multi_reduction <add>, %69, %cst_26 [1] : vector<24x24xf32> to vector<24xf32>
    %71 = vector.shape_cast %70 : vector<24xf32> to vector<24x1xf32>
    %72 = tpu.reciprocal %71 {approx = true} : vector<24x1xf32> -> vector<24x1xf32>
    %73 = vector.broadcast %72 : vector<24x1xf32> to vector<24x24xf32>
    %74 = arith.mulf %69, %73 : vector<24x24xf32>
    %cst_27 = arith.constant dense<0.000000e+00> : vector<24x16xf32>
    %75 = tpu.matmul %74, %62, %cst_27 {dimension_numbers = #tpu.dot_dimension_numbers<[1], [0], [0], [1], [0, 0, 1, 1], [], []>} : vector<24x24xf32>, vector<24x16xf32>, vector<24x16xf32> -> vector<24x16xf32>
    %76 = vector.extract_strided_slice %58 {offsets = [0, 0], sizes = [16, 64], strides = [1, 1]} : vector<64x64xf32> to vector<16x64xf32>
    %cst_28 = arith.constant dense<0.000000e+00> : vector<24x64xf32>
    %77 = tpu.matmul %75, %76, %cst_28 {dimension_numbers = #tpu.dot_dimension_numbers<[1], [0], [0], [1], [0, 0, 1, 1], [], []>} : vector<24x16xf32>, vector<16x64xf32>, vector<24x64xf32> -> vector<24x64xf32>
    %78 = arith.addf %59, %77 : vector<24x64xf32>
    %79 = vector.extract_strided_slice %49 {offsets = [0, 16], sizes = [24, 16], strides = [1, 1]} : vector<24x64xf32> to vector<24x16xf32>
    %80 = vector.extract_strided_slice %54 {offsets = [0, 16], sizes = [24, 16], strides = [1, 1]} : vector<24x64xf32> to vector<24x16xf32>
    %81 = vector.extract_strided_slice %55 {offsets = [0, 16], sizes = [24, 16], strides = [1, 1]} : vector<24x64xf32> to vector<24x16xf32>
    %82 = tpu.transpose %80, [1, 0] : vector<24x16xf32> -> vector<16x24xf32>
    %cst_29 = arith.constant dense<0.000000e+00> : vector<24x24xf32>
    %83 = tpu.matmul %79, %82, %cst_29 {dimension_numbers = #tpu.dot_dimension_numbers<[1], [0], [0], [1], [0, 0, 1, 1], [], []>} : vector<24x16xf32>, vector<16x24xf32>, vector<24x24xf32> -> vector<24x24xf32>
    %cst_30 = arith.constant dense<0xFF800000> : vector<24xf32>
    %84 = vector.multi_reduction <maximumf>, %83, %cst_30 [1] : vector<24x24xf32> to vector<24xf32>
    %85 = vector.shape_cast %84 : vector<24xf32> to vector<24x1xf32>
    %86 = vector.broadcast %85 : vector<24x1xf32> to vector<24x24xf32>
    %87 = arith.subf %83, %86 : vector<24x24xf32>
    %88 = math.exp %87 : vector<24x24xf32>
    %cst_31 = arith.constant dense<0.000000e+00> : vector<24xf32>
    %89 = vector.multi_reduction <add>, %88, %cst_31 [1] : vector<24x24xf32> to vector<24xf32>
    %90 = vector.shape_cast %89 : vector<24xf32> to vector<24x1xf32>
    %91 = tpu.reciprocal %90 {approx = true} : vector<24x1xf32> -> vector<24x1xf32>
    %92 = vector.broadcast %91 : vector<24x1xf32> to vector<24x24xf32>
    %93 = arith.mulf %88, %92 : vector<24x24xf32>
    %cst_32 = arith.constant dense<0.000000e+00> : vector<24x16xf32>
    %94 = tpu.matmul %93, %81, %cst_32 {dimension_numbers = #tpu.dot_dimension_numbers<[1], [0], [0], [1], [0, 0, 1, 1], [], []>} : vector<24x24xf32>, vector<24x16xf32>, vector<24x16xf32> -> vector<24x16xf32>
    %95 = vector.extract_strided_slice %58 {offsets = [16, 0], sizes = [16, 64], strides = [1, 1]} : vector<64x64xf32> to vector<16x64xf32>
    %cst_33 = arith.constant dense<0.000000e+00> : vector<24x64xf32>
    %96 = tpu.matmul %94, %95, %cst_33 {dimension_numbers = #tpu.dot_dimension_numbers<[1], [0], [0], [1], [0, 0, 1, 1], [], []>} : vector<24x16xf32>, vector<16x64xf32>, vector<24x64xf32> -> vector<24x64xf32>
    %97 = arith.addf %78, %96 : vector<24x64xf32>
    %98 = vector.extract_strided_slice %49 {offsets = [0, 32], sizes = [24, 16], strides = [1, 1]} : vector<24x64xf32> to vector<24x16xf32>
    %99 = vector.extract_strided_slice %54 {offsets = [0, 32], sizes = [24, 16], strides = [1, 1]} : vector<24x64xf32> to vector<24x16xf32>
    %100 = vector.extract_strided_slice %55 {offsets = [0, 32], sizes = [24, 16], strides = [1, 1]} : vector<24x64xf32> to vector<24x16xf32>
    %101 = tpu.transpose %99, [1, 0] : vector<24x16xf32> -> vector<16x24xf32>
    %cst_34 = arith.constant dense<0.000000e+00> : vector<24x24xf32>
    %102 = tpu.matmul %98, %101, %cst_34 {dimension_numbers = #tpu.dot_dimension_numbers<[1], [0], [0], [1], [0, 0, 1, 1], [], []>} : vector<24x16xf32>, vector<16x24xf32>, vector<24x24xf32> -> vector<24x24xf32>
    %cst_35 = arith.constant dense<0xFF800000> : vector<24xf32>
    %103 = vector.multi_reduction <maximumf>, %102, %cst_35 [1] : vector<24x24xf32> to vector<24xf32>
    %104 = vector.shape_cast %103 : vector<24xf32> to vector<24x1xf32>
    %105 = vector.broadcast %104 : vector<24x1xf32> to vector<24x24xf32>
    %106 = arith.subf %102, %105 : vector<24x24xf32>
    %107 = math.exp %106 : vector<24x24xf32>
    %cst_36 = arith.constant dense<0.000000e+00> : vector<24xf32>
    %108 = vector.multi_reduction <add>, %107, %cst_36 [1] : vector<24x24xf32> to vector<24xf32>
    %109 = vector.shape_cast %108 : vector<24xf32> to vector<24x1xf32>
    %110 = tpu.reciprocal %109 {approx = true} : vector<24x1xf32> -> vector<24x1xf32>
    %111 = vector.broadcast %110 : vector<24x1xf32> to vector<24x24xf32>
    %112 = arith.mulf %107, %111 : vector<24x24xf32>
    %cst_37 = arith.constant dense<0.000000e+00> : vector<24x16xf32>
    %113 = tpu.matmul %112, %100, %cst_37 {dimension_numbers = #tpu.dot_dimension_numbers<[1], [0], [0], [1], [0, 0, 1, 1], [], []>} : vector<24x24xf32>, vector<24x16xf32>, vector<24x16xf32> -> vector<24x16xf32>
    %114 = vector.extract_strided_slice %58 {offsets = [32, 0], sizes = [16, 64], strides = [1, 1]} : vector<64x64xf32> to vector<16x64xf32>
    %cst_38 = arith.constant dense<0.000000e+00> : vector<24x64xf32>
    %115 = tpu.matmul %113, %114, %cst_38 {dimension_numbers = #tpu.dot_dimension_numbers<[1], [0], [0], [1], [0, 0, 1, 1], [], []>} : vector<24x16xf32>, vector<16x64xf32>, vector<24x64xf32> -> vector<24x64xf32>
    %116 = arith.addf %97, %115 : vector<24x64xf32>
    %117 = vector.extract_strided_slice %49 {offsets = [0, 48], sizes = [24, 16], strides = [1, 1]} : vector<24x64xf32> to vector<24x16xf32>
    %118 = vector.extract_strided_slice %54 {offsets = [0, 48], sizes = [24, 16], strides = [1, 1]} : vector<24x64xf32> to vector<24x16xf32>
    %119 = vector.extract_strided_slice %55 {offsets = [0, 48], sizes = [24, 16], strides = [1, 1]} : vector<24x64xf32> to vector<24x16xf32>
    %120 = tpu.transpose %118, [1, 0] : vector<24x16xf32> -> vector<16x24xf32>
    %cst_39 = arith.constant dense<0.000000e+00> : vector<24x24xf32>
    %121 = tpu.matmul %117, %120, %cst_39 {dimension_numbers = #tpu.dot_dimension_numbers<[1], [0], [0], [1], [0, 0, 1, 1], [], []>} : vector<24x16xf32>, vector<16x24xf32>, vector<24x24xf32> -> vector<24x24xf32>
    %cst_40 = arith.constant dense<0xFF800000> : vector<24xf32>
    %122 = vector.multi_reduction <maximumf>, %121, %cst_40 [1] : vector<24x24xf32> to vector<24xf32>
    %123 = vector.shape_cast %122 : vector<24xf32> to vector<24x1xf32>
    %124 = vector.broadcast %123 : vector<24x1xf32> to vector<24x24xf32>
    %125 = arith.subf %121, %124 : vector<24x24xf32>
    %126 = math.exp %125 : vector<24x24xf32>
    %cst_41 = arith.constant dense<0.000000e+00> : vector<24xf32>
    %127 = vector.multi_reduction <add>, %126, %cst_41 [1] : vector<24x24xf32> to vector<24xf32>
    %128 = vector.shape_cast %127 : vector<24xf32> to vector<24x1xf32>
    %129 = tpu.reciprocal %128 {approx = true} : vector<24x1xf32> -> vector<24x1xf32>
    %130 = vector.broadcast %129 : vector<24x1xf32> to vector<24x24xf32>
    %131 = arith.mulf %126, %130 : vector<24x24xf32>
    %cst_42 = arith.constant dense<0.000000e+00> : vector<24x16xf32>
    %132 = tpu.matmul %131, %119, %cst_42 {dimension_numbers = #tpu.dot_dimension_numbers<[1], [0], [0], [1], [0, 0, 1, 1], [], []>} : vector<24x24xf32>, vector<24x16xf32>, vector<24x16xf32> -> vector<24x16xf32>
    %133 = vector.extract_strided_slice %58 {offsets = [48, 0], sizes = [16, 64], strides = [1, 1]} : vector<64x64xf32> to vector<16x64xf32>
    %cst_43 = arith.constant dense<0.000000e+00> : vector<24x64xf32>
    %134 = tpu.matmul %132, %133, %cst_43 {dimension_numbers = #tpu.dot_dimension_numbers<[1], [0], [0], [1], [0, 0, 1, 1], [], []>} : vector<24x16xf32>, vector<16x64xf32>, vector<24x64xf32> -> vector<24x64xf32>
    %135 = arith.addf %116, %134 : vector<24x64xf32>
    %136 = arith.addf %3, %135 : vector<24x64xf32>
    %137 = arith.index_cast %arg1 : i32 to index
    %c0_44 = arith.constant 0 : index
    %c0_45 = arith.constant 0 : index
    %138 = vector.load %arg10[%137, %c0_44, %c0_45] : memref<2x1x64xf32, #tpu.memory_space<vmem>>, vector<1x1x64xf32>
    %139 = vector.shape_cast %138 : vector<1x1x64xf32> to vector<1x64xf32>
    %140 = vector.broadcast %139 : vector<1x64xf32> to vector<24x64xf32>
    %141 = arith.addf %136, %140 : vector<24x64xf32>
    %142 = arith.index_cast %arg1 : i32 to index
    %c0_46 = arith.constant 0 : index
    %c0_47 = arith.constant 0 : index
    %143 = vector.load %arg11[%142, %c0_46, %c0_47] : memref<2x1x64xf32, #tpu.memory_space<vmem>>, vector<1x1x64xf32>
    %144 = vector.shape_cast %143 : vector<1x1x64xf32> to vector<1x64xf32>
    %145 = arith.index_cast %arg1 : i32 to index
    %c0_48 = arith.constant 0 : index
    %c0_49 = arith.constant 0 : index
    %146 = vector.load %arg12[%145, %c0_48, %c0_49] : memref<2x1x64xf32, #tpu.memory_space<vmem>>, vector<1x1x64xf32>
    %147 = vector.shape_cast %146 : vector<1x1x64xf32> to vector<1x64xf32>
    %cst_50 = arith.constant dense<0.000000e+00> : vector<24xf32>
    %148 = vector.multi_reduction <add>, %141, %cst_50 [1] : vector<24x64xf32> to vector<24xf32>
    %149 = vector.shape_cast %148 : vector<24xf32> to vector<24x1xf32>
    %cst_51 = arith.constant 6.400000e+01 : f32
    %150 = vector.broadcast %cst_51 : f32 to vector<24x1xf32>
    %151 = arith.divf %149, %150 : vector<24x1xf32>
    %152 = vector.broadcast %151 : vector<24x1xf32> to vector<24x64xf32>
    %153 = arith.subf %141, %152 : vector<24x64xf32>
    %154 = arith.mulf %153, %153 : vector<24x64xf32>
    %cst_52 = arith.constant dense<0.000000e+00> : vector<24xf32>
    %155 = vector.multi_reduction <add>, %154, %cst_52 [1] : vector<24x64xf32> to vector<24xf32>
    %156 = vector.shape_cast %155 : vector<24xf32> to vector<24x1xf32>
    %cst_53 = arith.constant 6.400000e+01 : f32
    %157 = vector.broadcast %cst_53 : f32 to vector<24x1xf32>
    %158 = arith.divf %156, %157 : vector<24x1xf32>
    %159 = vector.broadcast %151 : vector<24x1xf32> to vector<24x64xf32>
    %160 = arith.subf %141, %159 : vector<24x64xf32>
    %cst_54 = arith.constant 9.99999997E-7 : f32
    %161 = vector.broadcast %cst_54 : f32 to vector<24x1xf32>
    %162 = arith.addf %158, %161 : vector<24x1xf32>
    %163 = math.rsqrt %162 : vector<24x1xf32>
    %164 = vector.broadcast %163 : vector<24x1xf32> to vector<24x64xf32>
    %165 = arith.mulf %160, %164 : vector<24x64xf32>
    %166 = vector.broadcast %144 : vector<1x64xf32> to vector<24x64xf32>
    %167 = arith.mulf %165, %166 : vector<24x64xf32>
    %168 = vector.broadcast %147 : vector<1x64xf32> to vector<24x64xf32>
    %169 = arith.addf %167, %168 : vector<24x64xf32>
    %170 = arith.index_cast %arg1 : i32 to index
    %c0_55 = arith.constant 0 : index
    %c0_56 = arith.constant 0 : index
    %171 = vector.load %arg13[%170, %c0_55, %c0_56] : memref<2x64x256xf32, #tpu.memory_space<vmem>>, vector<1x64x256xf32>
    %172 = vector.shape_cast %171 : vector<1x64x256xf32> to vector<64x256xf32>
    %cst_57 = arith.constant dense<0.000000e+00> : vector<24x256xf32>
    %173 = tpu.matmul %169, %172, %cst_57 {dimension_numbers = #tpu.dot_dimension_numbers<[1], [0], [0], [1], [0, 0, 1, 1], [], []>} : vector<24x64xf32>, vector<64x256xf32>, vector<24x256xf32> -> vector<24x256xf32>
    %174 = arith.index_cast %arg1 : i32 to index
    %c0_58 = arith.constant 0 : index
    %c0_59 = arith.constant 0 : index
    %175 = vector.load %arg14[%174, %c0_58, %c0_59] : memref<2x1x256xf32, #tpu.memory_space<vmem>>, vector<1x1x256xf32>
    %176 = vector.shape_cast %175 : vector<1x1x256xf32> to vector<1x256xf32>
    %177 = vector.broadcast %176 : vector<1x256xf32> to vector<24x256xf32>
    %178 = arith.addf %173, %177 : vector<24x256xf32>
    %cst_60 = arith.constant 5.000000e-01 : f32
    %179 = vector.broadcast %cst_60 : f32 to vector<24x256xf32>
    %180 = arith.mulf %179, %178 : vector<24x256xf32>
    %cst_61 = arith.constant 0.707106769 : f32
    %181 = vector.broadcast %cst_61 : f32 to vector<24x256xf32>
    %182 = arith.mulf %178, %181 : vector<24x256xf32>
    %cst_62 = arith.constant 0.000000e+00 : f32
    %183 = vector.broadcast %cst_62 : f32 to vector<24x256xf32>
    %184 = arith.cmpf oge, %182, %183 : vector<24x256xf32>
    %cst_63 = arith.constant 1.000000e+00 : f32
    %cst_64 = arith.constant -1.000000e+00 : f32
    %185 = vector.broadcast %cst_63 : f32 to vector<24x256xf32>
    %186 = vector.broadcast %cst_64 : f32 to vector<24x256xf32>
    %187 = arith.select %184, %185, %186 : vector<24x256xi1>, vector<24x256xf32>
    %188 = math.absf %182 : vector<24x256xf32>
    %cst_65 = arith.constant 0.327591091 : f32
    %189 = vector.broadcast %cst_65 : f32 to vector<24x256xf32>
    %190 = arith.mulf %189, %188 : vector<24x256xf32>
    %cst_66 = arith.constant 1.000000e+00 : f32
    %191 = vector.broadcast %cst_66 : f32 to vector<24x256xf32>
    %192 = arith.addf %191, %190 : vector<24x256xf32>
    %cst_67 = arith.constant 1.000000e+00 : f32
    %193 = vector.broadcast %cst_67 : f32 to vector<24x256xf32>
    %194 = arith.divf %193, %192 : vector<24x256xf32>
    %cst_68 = arith.constant 1.06140542 : f32
    %195 = vector.broadcast %cst_68 : f32 to vector<24x256xf32>
    %196 = arith.mulf %195, %194 : vector<24x256xf32>
    %cst_69 = arith.constant -1.45315206 : f32
    %197 = vector.broadcast %cst_69 : f32 to vector<24x256xf32>
    %198 = arith.addf %196, %197 : vector<24x256xf32>
    %199 = arith.mulf %198, %194 : vector<24x256xf32>
    %cst_70 = arith.constant 1.42141378 : f32
    %200 = vector.broadcast %cst_70 : f32 to vector<24x256xf32>
    %201 = arith.addf %199, %200 : vector<24x256xf32>
    %202 = arith.mulf %201, %194 : vector<24x256xf32>
    %cst_71 = arith.constant -0.284496725 : f32
    %203 = vector.broadcast %cst_71 : f32 to vector<24x256xf32>
    %204 = arith.addf %202, %203 : vector<24x256xf32>
    %205 = arith.mulf %204, %194 : vector<24x256xf32>
    %cst_72 = arith.constant 0.254829586 : f32
    %206 = vector.broadcast %cst_72 : f32 to vector<24x256xf32>
    %207 = arith.addf %205, %206 : vector<24x256xf32>
    %208 = arith.mulf %207, %194 : vector<24x256xf32>
    %cst_73 = arith.constant 0.000000e+00 : f32
    %209 = vector.broadcast %cst_73 : f32 to vector<24x256xf32>
    %210 = arith.subf %209, %188 : vector<24x256xf32>
    %211 = arith.mulf %210, %188 : vector<24x256xf32>
    %212 = math.exp %211 : vector<24x256xf32>
    %213 = arith.mulf %208, %212 : vector<24x256xf32>
    %cst_74 = arith.constant 1.000000e+00 : f32
    %214 = vector.broadcast %cst_74 : f32 to vector<24x256xf32>
    %215 = arith.subf %214, %213 : vector<24x256xf32>
    %216 = arith.mulf %187, %215 : vector<24x256xf32>
    %cst_75 = arith.constant 1.000000e+00 : f32
    %217 = vector.broadcast %cst_75 : f32 to vector<24x256xf32>
    %218 = arith.addf %217, %216 : vector<24x256xf32>
    %219 = arith.mulf %180, %218 : vector<24x256xf32>
    %220 = arith.index_cast %arg1 : i32 to index
    %c0_76 = arith.constant 0 : index
    %c0_77 = arith.constant 0 : index
    %221 = vector.load %arg15[%220, %c0_76, %c0_77] : memref<2x256x64xf32, #tpu.memory_space<vmem>>, vector<1x256x64xf32>
    %222 = vector.shape_cast %221 : vector<1x256x64xf32> to vector<256x64xf32>
    %cst_78 = arith.constant dense<0.000000e+00> : vector<24x64xf32>
    %223 = tpu.matmul %219, %222, %cst_78 {dimension_numbers = #tpu.dot_dimension_numbers<[1], [0], [0], [1], [0, 0, 1, 1], [], []>} : vector<24x256xf32>, vector<256x64xf32>, vector<24x64xf32> -> vector<24x64xf32>
    %224 = arith.index_cast %arg1 : i32 to index
    %c0_79 = arith.constant 0 : index
    %c0_80 = arith.constant 0 : index
    %225 = vector.load %arg16[%224, %c0_79, %c0_80] : memref<2x1x64xf32, #tpu.memory_space<vmem>>, vector<1x1x64xf32>
    %226 = vector.shape_cast %225 : vector<1x1x64xf32> to vector<1x64xf32>
    %227 = vector.broadcast %226 : vector<1x64xf32> to vector<24x64xf32>
    %228 = arith.addf %223, %227 : vector<24x64xf32>
    %229 = arith.addf %141, %228 : vector<24x64xf32>
    %c0_81 = arith.constant 0 : index
    %c0_82 = arith.constant 0 : index
    %230 = vector.load %arg22[%c0_81, %c0_82] : memref<24x64xf32, #tpu.memory_space<vmem>>, vector<24x64xf32>
    tpu.vector_store %arg22[%c0_81, %c0_82], %229 {strides = array<i32>} : memref<24x64xf32, #tpu.memory_space<vmem>>, vector<24x64xf32>,
    %c1_i32 = arith.constant 1 : i32
    %231 = arith.cmpi eq, %arg1, %c1_i32 : i32
    %232 = arith.extui %231 : i1 to i32
    %c0_i32_83 = arith.constant 0 : i32
    %233 = arith.cmpi ne, %232, %c0_i32_83 : i32
    scf.if %233 {
      %c0_84 = arith.constant 0 : index
      %c0_85 = arith.constant 0 : index
      %234 = vector.load %arg17[%c0_84, %c0_85] : memref<1x64xf32, #tpu.memory_space<vmem>>, vector<1x64xf32>
      %c0_86 = arith.constant 0 : index
      %c0_87 = arith.constant 0 : index
      %235 = vector.load %arg18[%c0_86, %c0_87] : memref<1x64xf32, #tpu.memory_space<vmem>>, vector<1x64xf32>
      %cst_88 = arith.constant dense<0.000000e+00> : vector<24xf32>
      %236 = vector.multi_reduction <add>, %229, %cst_88 [1] : vector<24x64xf32> to vector<24xf32>
      %237 = vector.shape_cast %236 : vector<24xf32> to vector<24x1xf32>
      %cst_89 = arith.constant 6.400000e+01 : f32
      %238 = vector.broadcast %cst_89 : f32 to vector<24x1xf32>
      %239 = arith.divf %237, %238 : vector<24x1xf32>
      %240 = vector.broadcast %239 : vector<24x1xf32> to vector<24x64xf32>
      %241 = arith.subf %229, %240 : vector<24x64xf32>
      %242 = arith.mulf %241, %241 : vector<24x64xf32>
      %cst_90 = arith.constant dense<0.000000e+00> : vector<24xf32>
      %243 = vector.multi_reduction <add>, %242, %cst_90 [1] : vector<24x64xf32> to vector<24xf32>
      %244 = vector.shape_cast %243 : vector<24xf32> to vector<24x1xf32>
      %cst_91 = arith.constant 6.400000e+01 : f32
      %245 = vector.broadcast %cst_91 : f32 to vector<24x1xf32>
      %246 = arith.divf %244, %245 : vector<24x1xf32>
      %247 = vector.broadcast %239 : vector<24x1xf32> to vector<24x64xf32>
      %248 = arith.subf %229, %247 : vector<24x64xf32>
      %cst_92 = arith.constant 9.99999997E-7 : f32
      %249 = vector.broadcast %cst_92 : f32 to vector<24x1xf32>
      %250 = arith.addf %246, %249 : vector<24x1xf32>
      %251 = math.rsqrt %250 : vector<24x1xf32>
      %252 = vector.broadcast %251 : vector<24x1xf32> to vector<24x64xf32>
      %253 = arith.mulf %248, %252 : vector<24x64xf32>
      %254 = vector.broadcast %234 : vector<1x64xf32> to vector<24x64xf32>
      %255 = arith.mulf %253, %254 : vector<24x64xf32>
      %256 = vector.broadcast %235 : vector<1x64xf32> to vector<24x64xf32>
      %257 = arith.addf %255, %256 : vector<24x64xf32>
      %c0_93 = arith.constant 0 : index
      %c0_94 = arith.constant 0 : index
      %258 = vector.load %arg19[%c0_93, %c0_94] : memref<64x32xf32, #tpu.memory_space<vmem>>, vector<64x32xf32>
      %cst_95 = arith.constant dense<0.000000e+00> : vector<24x32xf32>
      %259 = tpu.matmul %257, %258, %cst_95 {dimension_numbers = #tpu.dot_dimension_numbers<[1], [0], [0], [1], [0, 0, 1, 1], [], []>} : vector<24x64xf32>, vector<64x32xf32>, vector<24x32xf32> -> vector<24x32xf32>
      %c0_96 = arith.constant 0 : index
      %c0_97 = arith.constant 0 : index
      %260 = vector.load %arg20[%c0_96, %c0_97] : memref<1x32xf32, #tpu.memory_space<vmem>>, vector<1x32xf32>
      %261 = vector.broadcast %260 : vector<1x32xf32> to vector<24x32xf32>
      %262 = arith.addf %259, %261 : vector<24x32xf32>
      %c0_98 = arith.constant 0 : index
      %c0_99 = arith.constant 0 : index
      %c0_100 = arith.constant 0 : index
      %263 = vector.load %arg21[%c0_98, %c0_99, %c0_100] : memref<1x24x32xf32, #tpu.memory_space<vmem>>, vector<1x24x32xf32>
      %264 = vector.shape_cast %263 : vector<1x24x32xf32> to vector<24x32xf32>
      %265 = vector.shape_cast %262 : vector<24x32xf32> to vector<1x24x32xf32>
      tpu.vector_store %arg21[%c0_98, %c0_99, %c0_100], %265 {strides = array<i32>} : memref<1x24x32xf32, #tpu.memory_space<vmem>>, vector<1x24x32xf32>,
    } else {
    }
    return
  }
  func.func @transform_0(%arg0: i32, %arg1: i32) -> (i32, i32, i32) {
    %c0_i32 = arith.constant 0 : i32
    %c0_i32_0 = arith.constant 0 : i32
    %c0_i32_1 = arith.constant 0 : i32
    return %arg0, %c0_i32, %c0_i32_0 : i32, i32, i32
  }
  func.func @transform_1(%arg0: i32, %arg1: i32) -> (i32, i32, i32) {
    %c0_i32 = arith.constant 0 : i32
    %c0_i32_0 = arith.constant 0 : i32
    %c0_i32_1 = arith.constant 0 : i32
    return %arg0, %c0_i32, %c0_i32_0 : i32, i32, i32
  }
  func.func @transform_2(%arg0: i32, %arg1: i32) -> (i32, i32, i32) {
    %c0_i32 = arith.constant 0 : i32
    %c0_i32_0 = arith.constant 0 : i32
    %c0_i32_1 = arith.constant 0 : i32
    return %arg0, %c0_i32, %c0_i32_0 : i32, i32, i32
  }
  func.func @transform_3(%arg0: i32, %arg1: i32) -> (i32, i32, i32) {
    %c0_i32 = arith.constant 0 : i32
    %c0_i32_0 = arith.constant 0 : i32
    %c0_i32_1 = arith.constant 0 : i32
    %c0_i32_2 = arith.constant 0 : i32
    return %c0_i32, %c0_i32_0, %c0_i32_1 : i32, i32, i32
  }
  func.func @transform_4(%arg0: i32, %arg1: i32) -> (i32, i32, i32) {
    %c0_i32 = arith.constant 0 : i32
    %c0_i32_0 = arith.constant 0 : i32
    %c0_i32_1 = arith.constant 0 : i32
    %c0_i32_2 = arith.constant 0 : i32
    return %c0_i32, %c0_i32_0, %c0_i32_1 : i32, i32, i32
  }
  func.func @transform_5(%arg0: i32, %arg1: i32) -> (i32, i32, i32) {
    %c0_i32 = arith.constant 0 : i32
    %c0_i32_0 = arith.constant 0 : i32
    %c0_i32_1 = arith.constant 0 : i32
    %c0_i32_2 = arith.constant 0 : i32
    return %c0_i32, %c0_i32_0, %c0_i32_1 : i32, i32, i32
  }
  func.func @transform_6(%arg0: i32, %arg1: i32) -> (i32, i32, i32) {
    %c0_i32 = arith.constant 0 : i32
    %c0_i32_0 = arith.constant 0 : i32
    %c0_i32_1 = arith.constant 0 : i32
    %c0_i32_2 = arith.constant 0 : i32
    return %c0_i32, %c0_i32_0, %c0_i32_1 : i32, i32, i32
  }
  func.func @transform_7(%arg0: i32, %arg1: i32) -> (i32, i32, i32) {
    %c0_i32 = arith.constant 0 : i32
    %c0_i32_0 = arith.constant 0 : i32
    %c0_i32_1 = arith.constant 0 : i32
    %c0_i32_2 = arith.constant 0 : i32
    return %c0_i32, %c0_i32_0, %c0_i32_1 : i32, i32, i32
  }
  func.func @transform_8(%arg0: i32, %arg1: i32) -> (i32, i32, i32) {
    %c0_i32 = arith.constant 0 : i32
    %c0_i32_0 = arith.constant 0 : i32
    %c0_i32_1 = arith.constant 0 : i32
    %c0_i32_2 = arith.constant 0 : i32
    return %c0_i32, %c0_i32_0, %c0_i32_1 : i32, i32, i32
  }
  func.func @transform_9(%arg0: i32, %arg1: i32) -> (i32, i32, i32) {
    %c0_i32 = arith.constant 0 : i32
    %c0_i32_0 = arith.constant 0 : i32
    %c0_i32_1 = arith.constant 0 : i32
    %c0_i32_2 = arith.constant 0 : i32
    return %c0_i32, %c0_i32_0, %c0_i32_1 : i32, i32, i32
  }
  func.func @transform_10(%arg0: i32, %arg1: i32) -> (i32, i32, i32) {
    %c0_i32 = arith.constant 0 : i32
    %c0_i32_0 = arith.constant 0 : i32
    %c0_i32_1 = arith.constant 0 : i32
    %c0_i32_2 = arith.constant 0 : i32
    return %c0_i32, %c0_i32_0, %c0_i32_1 : i32, i32, i32
  }
  func.func @transform_11(%arg0: i32, %arg1: i32) -> (i32, i32, i32) {
    %c0_i32 = arith.constant 0 : i32
    %c0_i32_0 = arith.constant 0 : i32
    %c0_i32_1 = arith.constant 0 : i32
    %c0_i32_2 = arith.constant 0 : i32
    return %c0_i32, %c0_i32_0, %c0_i32_1 : i32, i32, i32
  }
  func.func @transform_12(%arg0: i32, %arg1: i32) -> (i32, i32, i32) {
    %c0_i32 = arith.constant 0 : i32
    %c0_i32_0 = arith.constant 0 : i32
    %c0_i32_1 = arith.constant 0 : i32
    %c0_i32_2 = arith.constant 0 : i32
    return %c0_i32, %c0_i32_0, %c0_i32_1 : i32, i32, i32
  }
  func.func @transform_13(%arg0: i32, %arg1: i32) -> (i32, i32, i32) {
    %c0_i32 = arith.constant 0 : i32
    %c0_i32_0 = arith.constant 0 : i32
    %c0_i32_1 = arith.constant 0 : i32
    %c0_i32_2 = arith.constant 0 : i32
    return %c0_i32, %c0_i32_0, %c0_i32_1 : i32, i32, i32
  }
  func.func @transform_14(%arg0: i32, %arg1: i32) -> (i32, i32, i32) {
    %c0_i32 = arith.constant 0 : i32
    %c0_i32_0 = arith.constant 0 : i32
    %c0_i32_1 = arith.constant 0 : i32
    %c0_i32_2 = arith.constant 0 : i32
    return %c0_i32, %c0_i32_0, %c0_i32_1 : i32, i32, i32
  }
  func.func @transform_15(%arg0: i32, %arg1: i32) -> (i32, i32) {
    %c0_i32 = arith.constant 0 : i32
    %c0_i32_0 = arith.constant 0 : i32
    %c0_i32_1 = arith.constant 0 : i32
    return %c0_i32, %c0_i32_0 : i32, i32
  }
  func.func @transform_16(%arg0: i32, %arg1: i32) -> (i32, i32) {
    %c0_i32 = arith.constant 0 : i32
    %c0_i32_0 = arith.constant 0 : i32
    %c0_i32_1 = arith.constant 0 : i32
    return %c0_i32, %c0_i32_0 : i32, i32
  }
  func.func @transform_17(%arg0: i32, %arg1: i32) -> (i32, i32) {
    %c0_i32 = arith.constant 0 : i32
    %c0_i32_0 = arith.constant 0 : i32
    %c0_i32_1 = arith.constant 0 : i32
    return %c0_i32, %c0_i32_0 : i32, i32
  }
  func.func @transform_18(%arg0: i32, %arg1: i32) -> (i32, i32) {
    %c0_i32 = arith.constant 0 : i32
    %c0_i32_0 = arith.constant 0 : i32
    %c0_i32_1 = arith.constant 0 : i32
    return %c0_i32, %c0_i32_0 : i32, i32
  }
  func.func @transform_19(%arg0: i32, %arg1: i32) -> (i32, i32, i32) {
    %c0_i32 = arith.constant 0 : i32
    %c0_i32_0 = arith.constant 0 : i32
    %c0_i32_1 = arith.constant 0 : i32
    return %arg0, %c0_i32, %c0_i32_0 : i32, i32, i32
  }
}

</mosaic_0001>

<llo_original>
// kernel: vjepa2_predictor_forward.2
$region0: #{vjepa2_predictor_forward.2}
  #allocation0 [shape = 'u32[]', space=smem, size = 0x4, offset = 0x4, fixed_abs, tag = 'smem constant byte address 0x4 - core index']
  #allocation1 [shape = 'u32[144,128]{1,0:T(1,128)}', space=vmem, size = 0x12000, scoped, tag = 'internal scratch']
  %s0 = inlined_call_operand.vmem [shape: f32[32,32], index: 0, kind: input, shape index: {}]
  %s1 = inlined_call_operand.vmem [shape: f32[32,64], index: 1, kind: input, shape index: {}]
  %s2 = inlined_call_operand.vmem [shape: f32[1,64], index: 2, kind: input, shape index: {}]
  %s3 = inlined_call_operand.vmem [shape: f32[32,64], index: 3, kind: output, shape index: {}]
  %s4 = sld [smem:[#allocation0]]
  $region22: #{vjepa2_predictor_forward.2} parent=0
    _
  %s6 = ssub.s32 1, %s4
  %s7 = scalar_select 0, %s6, %s4
  // Predicated region
  $region2: #{vjepa2_predictor_forward.2} parent=0 // pred_check
    _
  $region3: #{vjepa2_predictor_forward.2} parent=0 // pred_check_branch
    %9 = sbr.rel (0) target = $region5
  $region4: #{vjepa2_predictor_forward.2} parent=0 // pred_region
    _
  $region5: #{vjepa2_predictor_forward.2} parent=0 // pred_fallthru
    _
  // Predicated region
  $region6: #{vjepa2_predictor_forward.2} parent=0 // pred_check
    _
  $region7: #{vjepa2_predictor_forward.2} parent=0 // pred_check_branch
    %11 = sbr.rel (0) target = $region9
  $region8: #{vjepa2_predictor_forward.2} parent=0 // pred_region
    _
  $region9: #{vjepa2_predictor_forward.2} parent=0 // pred_fallthru
    _
  // Predicated region
  $region10: #{vjepa2_predictor_forward.2} parent=0 // pred_check
    _
  $region11: #{vjepa2_predictor_forward.2} parent=0 // pred_check_branch
    %13 = sbr.rel (0) target = $region13
  $region12: #{vjepa2_predictor_forward.2} parent=0 // pred_region
    _
  $region13: #{vjepa2_predictor_forward.2} parent=0 // pred_fallthru
    _
  %v14 = vld [vmem:[%s0] sm:$0xff]
  %v15 = vld [vmem:[%s0 + $0x8] sm:$0xff]
  %v16 = vld [vmem:[%s0 + $0x10] sm:$0xff]
  %v17 = vld [vmem:[%s0 + $0x18] sm:$0xff]
  %v18 = vld [vmem:[%s1] sm:$0xff]
  %v19 = vld [vmem:[%s1 + $0x8] sm:$0xff]
  %v20 = vld [vmem:[%s1 + $0x10] sm:$0xff]
  %v21 = vld [vmem:[%s1 + $0x18] sm:$0xff]
  %v22 = vld [vmem:[%s2] sm:$0x1]
  %v24 = vlaneseq
  %v25 = vshrl.u32 %v24, 7
  %v26 = vsub.s32 0, %v25
  %v27 = vrot.slane %v22, %v26
  %vm29 = vcmask 261120
  %v31 = vsel %vm29, %v14, 0
  %v34 = vsel %vm29, %v15, 0
  %v37 = vsel %vm29, %v16, 0
  %v40 = vsel %vm29, %v17, 0
  %42 = vmatprep.subr.mxu0 0.0
  %43 = vmatpush1.msra.mxu0 0.0
  %44 = vmatprep.subr.mxu0 0.0
  %45 = vmatpush1.msra.mxu0 0.0
  %46 = vmatprep.subr.mxu0 0.0
  %47 = vmatpush1.msra.mxu0 0.0
  %48 = vmatprep.subr.mxu0 0.0
  %49 = vmatpush1.msra.mxu0 0.0
  %50 = vmatprep.subr.mxu0 0.0
  %51 = vmatpush1.msra.mxu0 0.0
  %52 = vmatprep.subr.mxu0 0.0
  %53 = vmatpush1.msra.mxu0 0.0
  %54 = vmatprep.subr.mxu0 0.0
  %55 = vmatpush1.msra.mxu0 0.0
  %56 = vmatprep.subr.mxu0 0.0
  %57 = vmatpush1.msra.mxu0 0.0
  %58 = vmatprep.subr.mxu0 0.0
  %59 = vmatpush1.msra.mxu0 0.0
  %60 = vmatprep.subr.mxu0 0.0
  %61 = vmatpush1.msra.mxu0 0.0
  %62 = vmatprep.subr.mxu0 0.0
  %63 = vmatpush1.msra.mxu0 0.0
  %64 = vmatprep.subr.mxu0 0.0
  %65 = vmatpush1.msra.mxu0 0.0
  %66 = vmatprep.subr.mxu0 0.0
  %67 = vmatpush1.msra.mxu0 %v21
  %68 = vmatprep.subr.mxu0 0.0
  %69 = vmatpush1.msra.mxu0 %v20
  %70 = vmatprep.subr.mxu0 0.0
  %71 = vmatpush1.msra.mxu0 %v19
  %72 = vmatprep.subr.mxu0 0.0
  %73 = vmatpush1.msra.mxu0 %v18
  %74 = vmatprep.subr.mxu0 0.0
  %75 = vmatpush2.msra.mxu0 0.0
  %76 = vmatprep.subr.mxu0 0.0
  %77 = vmatpush2.msra.mxu0 0.0
  %78 = vmatprep.subr.mxu0 0.0
  %79 = vmatpush2.msra.mxu0 0.0
  %80 = vmatprep.subr.mxu0 0.0
  %81 = vmatpush2.msra.mxu0 0.0
  %82 = vmatprep.subr.mxu0 0.0
  %83 = vmatpush2.msra.mxu0 0.0
  %84 = vmatprep.subr.mxu0 0.0
  %85 = vmatpush2.msra.mxu0 0.0
  %86 = vmatprep.subr.mxu0 0.0
  %87 = vmatpush2.msra.mxu0 0.0
  %88 = vmatprep.subr.mxu0 0.0
  %89 = vmatpush2.msra.mxu0 0.0
  %90 = vmatprep.subr.mxu0 0.0
  %91 = vmatpush2.msra.mxu0 0.0
  %92 = vmatprep.subr.mxu0 0.0
  %93 = vmatpush2.msra.mxu0 0.0
  %94 = vmatprep.subr.mxu0 0.0
  %95 = vmatpush2.msra.mxu0 0.0
  %96 = vmatprep.subr.mxu0 0.0
  %97 = vmatpush2.msra.mxu0 0.0
  %98 = vmatprep.subr.mxu0 0.0
  %99 = vmatpush2.msra.mxu0 0.0
  %100 = vmatprep.subr.mxu0 0.0
  %101 = vmatpush2.msra.mxu0 0.0
  %102 = vmatprep.subr.mxu0 0.0
  %103 = vmatpush2.msra.mxu0 0.0
  %104 = vmatprep.subr.mxu0 0.0
  %105 = vmatpush2.msra.mxu0 0.0
  %106 = vmatprep.mubr.f32.mxu0 0.0
  %107 = vmatmul.mubr.f32.gmra.mxu0 %v31
  %v108 = vpop.f32.mrf.mxu0
  %v109 = vadd.f32 %v27, %v108
  %v110 = vpop.f32.mrf.mxu0
  %111 = vmatprep.mubr.f32.mxu0 0.0
  %112 = vmatmul.mubr.f32.gmra.mxu0 %v34
  %v113 = vpop.f32.mrf.mxu0
  %v114 = vadd.f32 %v27, %v113
  %v115 = vpop.f32.mrf.mxu0
  %116 = vmatprep.mubr.f32.mxu0 0.0
  %117 = vmatmul.mubr.f32.gmra.mxu0 %v37
  %v118 = vpop.f32.mrf.mxu0
  %v119 = vadd.f32 %v27, %v118
  %v120 = vpop.f32.mrf.mxu0
  %121 = vmatprep.mubr.f32.mxu0 0.0
  %122 = vmatmul.mubr.f32.gmra.mxu0 %v40
  %v123 = vpop.f32.mrf.mxu0
  %v124 = vadd.f32 %v27, %v123
  %v125 = vpop.f32.mrf.mxu0
  %126 = vdwg.mxu0
  %vm127 = vcmask 523264
  %128 = vst.msk [vmem:[%s3] sm:$0xff] %vm127, %v109
  %129 = vst.msk [vmem:[%s3 + $0x8] sm:$0xff] %vm127, %v114
  %130 = vst.msk [vmem:[%s3 + $0x10] sm:$0xff] %vm127, %v119
  %131 = vst.msk [vmem:[%s3 + $0x18] sm:$0xff] %vm127, %v124
  // Predicated region
  $region14: #{vjepa2_predictor_forward.2} parent=0 // pred_check
    _
  $region15: #{vjepa2_predictor_forward.2} parent=0 // pred_check_branch
    %133 = sbr.rel (0) target = $region17
  $region16: #{vjepa2_predictor_forward.2} parent=0 // pred_region
    _
  $region17: #{vjepa2_predictor_forward.2} parent=0 // pred_fallthru
    _
  // Predicated region
  $region18: #{vjepa2_predictor_forward.2} parent=0 // pred_check
    _
  $region19: #{vjepa2_predictor_forward.2} parent=0 // pred_check_branch
    %135 = sbr.rel (0) target = $region21
  $region20: #{vjepa2_predictor_forward.2} parent=0 // pred_region
    _
  $region21: #{vjepa2_predictor_forward.2} parent=0 // pred_fallthru
    _

// kernel: vjepa2_predictor_forward.3
$region0: #{vjepa2_predictor_forward.3}
  #allocation0 [shape = 'u32[]', space=smem, size = 0x4, offset = 0x4, fixed_abs, tag = 'smem constant byte address 0x4 - core index']
  #allocation1 [shape = 'u32[144,128]{1,0:T(1,128)}', space=vmem, size = 0x12000, scoped, tag = 'internal scratch']
  #allocation2 [shape = 'f32[24,64]{1,0:T(8,128)}', space=vmem, size = 0x3000, scoped, tag = 'scratch operand']
  %s0 = inlined_call_operand.vmem [shape: f32[2,24,64], index: 0, kind: input, shape index: {}]
  %s1 = inlined_call_operand.vmem [shape: f32[2,24,64], index: 1, kind: input, shape index: {}]
  %s2 = inlined_call_operand.vmem [shape: f32[2,24,64], index: 2, kind: input, shape index: {}]
  %s3 = inlined_call_operand.vmem [shape: f32[2,1,64], index: 3, kind: input, shape index: {}]
  %s4 = inlined_call_operand.vmem [shape: f32[2,1,64], index: 4, kind: input, shape index: {}]
  %s5 = inlined_call_operand.vmem [shape: f32[2,64,320], index: 5, kind: input, shape index: {}]
  %s6 = inlined_call_operand.vmem [shape: f32[2,1,320], index: 6, kind: input, shape index: {}]
  %s7 = inlined_call_operand.vmem [shape: f32[2,64,64], index: 7, kind: input, shape index: {}]
  %s8 = inlined_call_operand.vmem [shape: f32[2,1,64], index: 8, kind: input, shape index: {}]
  %s9 = inlined_call_operand.vmem [shape: f32[2,1,64], index: 9, kind: input, shape index: {}]
  %s10 = inlined_call_operand.vmem [shape: f32[2,1,64], index: 10, kind: input, shape index: {}]
  %s11 = inlined_call_operand.vmem [shape: f32[2,64,256], index: 11, kind: input, shape index: {}]
  %s12 = inlined_call_operand.vmem [shape: f32[2,1,256], index: 12, kind: input, shape index: {}]
  %s13 = inlined_call_operand.vmem [shape: f32[2,256,64], index: 13, kind: input, shape index: {}]
  %s14 = inlined_call_operand.vmem [shape: f32[2,1,64], index: 14, kind: input, shape index: {}]
  %s15 = inlined_call_operand.vmem [shape: f32[1,64], index: 15, kind: input, shape index: {}]
  %s16 = inlined_call_operand.vmem [shape: f32[1,64], index: 16, kind: input, shape index: {}]
  %s17 = inlined_call_operand.vmem [shape: f32[64,32], index: 17, kind: input, shape index: {}]
  %s18 = inlined_call_operand.vmem [shape: f32[1,32], index: 18, kind: input, shape index: {}]
  %s19 = inlined_call_operand.vmem [shape: f32[2,24,32], index: 19, kind: output, shape index: {}]
  %s20 = sld [smem:[#allocation0]]
  $region117: #{vjepa2_predictor_forward.3} parent=0
    _
  %s22 = ssub.s32 1, %s20
  %s23 = scalar_select 0, %s22, %s20
  loop: start=0, step=1, limit=6
  $region2: #{vjepa2_predictor_forward.3} parent=0 // loop_pre_header
    _
  $region3: #{vjepa2_predictor_forward.3} parent=0 // loop_header
    %s25 = sphi 0, %s29
    %p26 = scmp.ge.s32.totalorder %s25, 6
    %s32 = sphi 0, %s44
    %s33 = sphi 0, %s40
    %s34 = sphi 0, %s32
    %s35 = sphi 0, %s33
    %s36 = sphi 0, %s34
    %s37 = sphi 0, %s35
    %s47 = sphi 0, %s49
    %s50 = sphi 0, %s47
    %s51 = sphi 0, %s50
    %s67 = sphi 0, %s51
    %s73 = sphi 0, %s75
    %s76 = sphi 0, %s73
    %s77 = sphi 0, %s76
    %s93 = sphi 0, %s77
    %s99 = sphi 0, %s101
    %s102 = sphi 0, %s99
    %s103 = sphi 0, %s102
    %s119 = sphi 0, %s103
    %s123 = sphi 0, %s123
    %s125 = sphi 0, %s123
    %s126 = sphi 0, %s125
    %s140 = sphi 0, %s126
    %s144 = sphi 0, %s144
    %s146 = sphi 0, %s144
    %s147 = sphi 0, %s146
    %s161 = sphi 0, %s147
    %s165 = sphi 0, %s165
    %s167 = sphi 0, %s165
    %s168 = sphi 0, %s167
    %s182 = sphi 0, %s168
    %s186 = sphi 0, %s186
    %s188 = sphi 0, %s186
    %s189 = sphi 0, %s188
    %s203 = sphi 0, %s189
    %s207 = sphi 0, %s207
    %s209 = sphi 0, %s207
    %s210 = sphi 0, %s209
    %s224 = sphi 0, %s210
    %s228 = sphi 0, %s228
    %s230 = sphi 0, %s228
    %s231 = sphi 0, %s230
    %s245 = sphi 0, %s231
    %s249 = sphi 0, %s249
    %s251 = sphi 0, %s249
    %s252 = sphi 0, %s251
    %s266 = sphi 0, %s252
    %s270 = sphi 0, %s270
    %s272 = sphi 0, %s270
    %s273 = sphi 0, %s272
    %s287 = sphi 0, %s273
    %s291 = sphi 0, %s291
    %s293 = sphi 0, %s291
    %s294 = sphi 0, %s293
    %s308 = sphi 0, %s294
    %s312 = sphi 0, %s312
    %s314 = sphi 0, %s312
    %s315 = sphi 0, %s314
    %s329 = sphi 0, %s315
    %s333 = sphi 0, %s333
    %s335 = sphi 0, %s333
    %s336 = sphi 0, %s335
    %s350 = sphi 0, %s336
    %s354 = sphi 0, %s354
    %s356 = sphi 0, %s354
    %s357 = sphi 0, %s356
    %s371 = sphi 0, %s357
    %s375 = sphi 0, %s375
    %s377 = sphi 0, %s375
    %s378 = sphi 0, %s377
    %s392 = sphi 0, %s378
    %s396 = sphi 0, %s396
    %s398 = sphi 0, %s396
    %s399 = sphi 0, %s398
    %s413 = sphi 0, %s399
    %s417 = sphi 0, %s417
    %s419 = sphi 0, %s417
    %s420 = sphi 0, %s419
    %s434 = sphi 0, %s420
    %s438 = sphi 0, %s438
    %s440 = sphi 0, %s438
    %s441 = sphi 0, %s440
    %s455 = sphi 0, %s441
    %s461 = sphi 0, %s463
    %s464 = sphi 0, %s461
    %s465 = sphi 0, %s464
    %s481 = sphi 0, %s465
  $region4: #{vjepa2_predictor_forward.3} parent=0 // loop_header_branch
    %28 = sbr.rel (%p26) target = $region8
  $region5: #{vjepa2_predictor_forward.3} parent=0 // loop_body
    %s30 = ssub.s32 %s25, 1
    %s31 = ssub.s32 %s25, 2
    %s38 = sadd.s32 1, %s33
    %p39 = scmp.ge.s32.totalorder %s38, 2
    %s40 = scalar_select %p39, 0, %s38
    %s41 = sadd.s32 1, %s32
    %s42 = scalar_select %p39, %s41, %s32
    %p43 = scmp.ge.s32.totalorder %s42, 2
    %s44 = scalar_select %p43, 0, %s42
    %s45 = ssub.s32 %s32, %s44
    %p46 = scmp.eq.s32.totalorder %s45, 0
    %s48 = sadd.s32 %s47, 1
    %s49 = scalar_select %p46, %s47, %s48
    %p52 = pneg %p46
    %p53 = scmp.eq.s32.totalorder %s25, 3
    %p54 = por %p52, %p53
    %p55 = scmp.ne.s32.totalorder %s47, %s50
    %p56 = scmp.eq.s32.totalorder %s25, 0
    %p57 = por %p55, %p56
    %p58 = scmp.ne.s32.totalorder %s47, %s50
    %p59 = scmp.eq.s32.totalorder %s30, 3
    %p60 = por %p58, %p59
    %p61 = scmp.ne.s32.totalorder %s50, %s51
    %p62 = scmp.eq.s32.totalorder %s30, 0
    %p63 = por %p61, %p62
    %p64 = scmp.ne.s32.totalorder %s50, %s51
    %p65 = scmp.eq.s32.totalorder %s31, 3
    %p66 = por %p64, %p65
    %p68 = scmp.ne.s32.totalorder %s51, %s67
    %p69 = scmp.eq.s32.totalorder %s31, 0
    %p70 = por %p68, %p69
    %s71 = ssub.s32 %s32, %s44
    %p72 = scmp.eq.s32.totalorder %s71, 0
    %s74 = sadd.s32 %s73, 1
    %s75 = scalar_select %p72, %s73, %s74
    %p78 = pneg %p72
    %p79 = scmp.eq.s32.totalorder %s25, 3
    %p80 = por %p78, %p79
    %p81 = scmp.ne.s32.totalorder %s73, %s76
    %p82 = scmp.eq.s32.totalorder %s25, 0
    %p83 = por %p81, %p82
    %p84 = scmp.ne.s32.totalorder %s73, %s76
    %p85 = scmp.eq.s32.totalorder %s30, 3
    %p86 = por %p84, %p85
    %p87 = scmp.ne.s32.totalorder %s76, %s77
    %p88 = scmp.eq.s32.totalorder %s30, 0
    %p89 = por %p87, %p88
    %p90 = scmp.ne.s32.totalorder %s76, %s77
    %p91 = scmp.eq.s32.totalorder %s31, 3
    %p92 = por %p90, %p91
    %p94 = scmp.ne.s32.totalorder %s77, %s93
    %p95 = scmp.eq.s32.totalorder %s31, 0
    %p96 = por %p94, %p95
    %s97 = ssub.s32 %s32, %s44
    %p98 = scmp.eq.s32.totalorder %s97, 0
    %s100 = sadd.s32 %s99, 1
    %s101 = scalar_select %p98, %s99, %s100
    %p104 = pneg %p98
    %p105 = scmp.eq.s32.totalorder %s25, 3
    %p106 = por %p104, %p105
    %p107 = scmp.ne.s32.totalorder %s99, %s102
    %p108 = scmp.eq.s32.totalorder %s25, 0
    %p109 = por %p107, %p108
    %p110 = scmp.ne.s32.totalorder %s99, %s102
    %p111 = scmp.eq.s32.totalorder %s30, 3
    %p112 = por %p110, %p111
    %p113 = scmp.ne.s32.totalorder %s102, %s103
    %p114 = scmp.eq.s32.totalorder %s30, 0
    %p115 = por %p113, %p114
    %p116 = scmp.ne.s32.totalorder %s102, %s103
    %p117 = scmp.eq.s32.totalorder %s31, 3
    %p118 = por %p116, %p117
    %p120 = scmp.ne.s32.totalorder %s103, %s119
    %p121 = scmp.eq.s32.totalorder %s31, 0
    %p122 = por %p120, %p121
    %s124 = sadd.s32 %s123, 1
    %p127 = scmp.eq.s32.totalorder %s25, 3
    %p128 = scmp.ne.s32.totalorder %s123, %s125
    %p129 = scmp.eq.s32.totalorder %s25, 0
    %p130 = por %p128, %p129
    %p131 = scmp.ne.s32.totalorder %s123, %s125
    %p132 = scmp.eq.s32.totalorder %s30, 3
    %p133 = por %p131, %p132
    %p134 = scmp.ne.s32.totalorder %s125, %s126
    %p135 = scmp.eq.s32.totalorder %s30, 0
    %p136 = por %p134, %p135
    %p137 = scmp.ne.s32.totalorder %s125, %s126
    %p138 = scmp.eq.s32.totalorder %s31, 3
    %p139 = por %p137, %p138
    %p141 = scmp.ne.s32.totalorder %s126, %s140
    %p142 = scmp.eq.s32.totalorder %s31, 0
    %p143 = por %p141, %p142
    %s145 = sadd.s32 %s144, 1
    %p148 = scmp.eq.s32.totalorder %s25, 3
    %p149 = scmp.ne.s32.totalorder %s144, %s146
    %p150 = scmp.eq.s32.totalorder %s25, 0
    %p151 = por %p149, %p150
    %p152 = scmp.ne.s32.totalorder %s144, %s146
    %p153 = scmp.eq.s32.totalorder %s30, 3
    %p154 = por %p152, %p153
    %p155 = scmp.ne.s32.totalorder %s146, %s147
    %p156 = scmp.eq.s32.totalorder %s30, 0
    %p157 = por %p155, %p156
    %p158 = scmp.ne.s32.totalorder %s146, %s147
    %p159 = scmp.eq.s32.totalorder %s31, 3
    %p160 = por %p158, %p159
    %p162 = scmp.ne.s32.totalorder %s147, %s161
    %p163 = scmp.eq.s32.totalorder %s31, 0
    %p164 = por %p162, %p163
    %s166 = sadd.s32 %s165, 1
    %p169 = scmp.eq.s32.totalorder %s25, 3
    %p170 = scmp.ne.s32.totalorder %s165, %s167
    %p171 = scmp.eq.s32.totalorder %s25, 0
    %p172 = por %p170, %p171
    %p173 = scmp.ne.s32.totalorder %s165, %s167
    %p174 = scmp.eq.s32.totalorder %s30, 3
    %p175 = por %p173, %p174
    %p176 = scmp.ne.s32.totalorder %s167, %s168
    %p177 = scmp.eq.s32.totalorder %s30, 0
    %p178 = por %p176, %p177
    %p179 = scmp.ne.s32.totalorder %s167, %s168
    %p180 = scmp.eq.s32.totalorder %s31, 3
    %p181 = por %p179, %p180
    %p183 = scmp.ne.s32.totalorder %s168, %s182
    %p184 = scmp.eq.s32.totalorder %s31, 0
    %p185 = por %p183, %p184
    %s187 = sadd.s32 %s186, 1
    %p190 = scmp.eq.s32.totalorder %s25, 3
    %p191 = scmp.ne.s32.totalorder %s186, %s188
    %p192 = scmp.eq.s32.totalorder %s25, 0
    %p193 = por %p191, %p192
    %p194 = scmp.ne.s32.totalorder %s186, %s188
    %p195 = scmp.eq.s32.totalorder %s30, 3
    %p196 = por %p194, %p195
    %p197 = scmp.ne.s32.totalorder %s188, %s189
    %p198 = scmp.eq.s32.totalorder %s30, 0
    %p199 = por %p197, %p198
    %p200 = scmp.ne.s32.totalorder %s188, %s189
    %p201 = scmp.eq.s32.totalorder %s31, 3
    %p202 = por %p200, %p201
    %p204 = scmp.ne.s32.totalorder %s189, %s203
    %p205 = scmp.eq.s32.totalorder %s31, 0
    %p206 = por %p204, %p205
    %s208 = sadd.s32 %s207, 1
    %p211 = scmp.eq.s32.totalorder %s25, 3
    %p212 = scmp.ne.s32.totalorder %s207, %s209
    %p213 = scmp.eq.s32.totalorder %s25, 0
    %p214 = por %p212, %p213
    %p215 = scmp.ne.s32.totalorder %s207, %s209
    %p216 = scmp.eq.s32.totalorder %s30, 3
    %p217 = por %p215, %p216
    %p218 = scmp.ne.s32.totalorder %s209, %s210
    %p219 = scmp.eq.s32.totalorder %s30, 0
    %p220 = por %p218, %p219
    %p221 = scmp.ne.s32.totalorder %s209, %s210
    %p222 = scmp.eq.s32.totalorder %s31, 3
    %p223 = por %p221, %p222
    %p225 = scmp.ne.s32.totalorder %s210, %s224
    %p226 = scmp.eq.s32.totalorder %s31, 0
    %p227 = por %p225, %p226
    %s229 = sadd.s32 %s228, 1
    %p232 = scmp.eq.s32.totalorder %s25, 3
    %p233 = scmp.ne.s32.totalorder %s228, %s230
    %p234 = scmp.eq.s32.totalorder %s25, 0
    %p235 = por %p233, %p234
    %p236 = scmp.ne.s32.totalorder %s228, %s230
    %p237 = scmp.eq.s32.totalorder %s30, 3
    %p238 = por %p236, %p237
    %p239 = scmp.ne.s32.totalorder %s230, %s231
    %p240 = scmp.eq.s32.totalorder %s30, 0
    %p241 = por %p239, %p240
    %p242 = scmp.ne.s32.totalorder %s230, %s231
    %p243 = scmp.eq.s32.totalorder %s31, 3
    %p244 = por %p242, %p243
    %p246 = scmp.ne.s32.totalorder %s231, %s245
    %p247 = scmp.eq.s32.totalorder %s31, 0
    %p248 = por %p246, %p247
    %s250 = sadd.s32 %s249, 1
    %p253 = scmp.eq.s32.totalorder %s25, 3
    %p254 = scmp.ne.s32.totalorder %s249, %s251
    %p255 = scmp.eq.s32.totalorder %s25, 0
    %p256 = por %p254, %p255
    %p257 = scmp.ne.s32.totalorder %s249, %s251
    %p258 = scmp.eq.s32.totalorder %s30, 3
    %p259 = por %p257, %p258
    %p260 = scmp.ne.s32.totalorder %s251, %s252
    %p261 = scmp.eq.s32.totalorder %s30, 0
    %p262 = por %p260, %p261
    %p263 = scmp.ne.s32.totalorder %s251, %s252
    %p264 = scmp.eq.s32.totalorder %s31, 3
    %p265 = por %p263, %p264
    %p267 = scmp.ne.s32.totalorder %s252, %s266
    %p268 = scmp.eq.s32.totalorder %s31, 0
    %p269 = por %p267, %p268
    %s271 = sadd.s32 %s270, 1
    %p274 = scmp.eq.s32.totalorder %s25, 3
    %p275 = scmp.ne.s32.totalorder %s270, %s272
    %p276 = scmp.eq.s32.totalorder %s25, 0
    %p277 = por %p275, %p276
    %p278 = scmp.ne.s32.totalorder %s270, %s272
    %p279 = scmp.eq.s32.totalorder %s30, 3
    %p280 = por %p278, %p279
    %p281 = scmp.ne.s32.totalorder %s272, %s273
    %p282 = scmp.eq.s32.totalorder %s30, 0
    %p283 = por %p281, %p282
    %p284 = scmp.ne.s32.totalorder %s272, %s273
    %p285 = scmp.eq.s32.totalorder %s31, 3
    %p286 = por %p284, %p285
    %p288 = scmp.ne.s32.totalorder %s273, %s287
    %p289 = scmp.eq.s32.totalorder %s31, 0
    %p290 = por %p288, %p289
    %s292 = sadd.s32 %s291, 1
    %p295 = scmp.eq.s32.totalorder %s25, 3
    %p296 = scmp.ne.s32.totalorder %s291, %s293
    %p297 = scmp.eq.s32.totalorder %s25, 0
    %p298 = por %p296, %p297
    %p299 = scmp.ne.s32.totalorder %s291, %s293
    %p300 = scmp.eq.s32.totalorder %s30, 3
    %p301 = por %p299, %p300
    %p302 = scmp.ne.s32.totalorder %s293, %s294
    %p303 = scmp.eq.s32.totalorder %s30, 0
    %p304 = por %p302, %p303
    %p305 = scmp.ne.s32.totalorder %s293, %s294
    %p306 = scmp.eq.s32.totalorder %s31, 3
    %p307 = por %p305, %p306
    %p309 = scmp.ne.s32.totalorder %s294, %s308
    %p310 = scmp.eq.s32.totalorder %s31, 0
    %p311 = por %p309, %p310
    %s313 = sadd.s32 %s312, 1
    %p316 = scmp.eq.s32.totalorder %s25, 3
    %p317 = scmp.ne.s32.totalorder %s312, %s314
    %p318 = scmp.eq.s32.totalorder %s25, 0
    %p319 = por %p317, %p318
    %p320 = scmp.ne.s32.totalorder %s312, %s314
    %p321 = scmp.eq.s32.totalorder %s30, 3
    %p322 = por %p320, %p321
    %p323 = scmp.ne.s32.totalorder %s314, %s315
    %p324 = scmp.eq.s32.totalorder %s30, 0
    %p325 = por %p323, %p324
    %p326 = scmp.ne.s32.totalorder %s314, %s315
    %p327 = scmp.eq.s32.totalorder %s31, 3
    %p328 = por %p326, %p327
    %p330 = scmp.ne.s32.totalorder %s315, %s329
    %p331 = scmp.eq.s32.totalorder %s31, 0
    %p332 = por %p330, %p331
    %s334 = sadd.s32 %s333, 1
    %p337 = scmp.eq.s32.totalorder %s25, 3
    %p338 = scmp.ne.s32.totalorder %s333, %s335
    %p339 = scmp.eq.s32.totalorder %s25, 0
    %p340 = por %p338, %p339
    %p341 = scmp.ne.s32.totalorder %s333, %s335
    %p342 = scmp.eq.s32.totalorder %s30, 3
    %p343 = por %p341, %p342
    %p344 = scmp.ne.s32.totalorder %s335, %s336
    %p345 = scmp.eq.s32.totalorder %s30, 0
    %p346 = por %p344, %p345
    %p347 = scmp.ne.s32.totalorder %s335, %s336
    %p348 = scmp.eq.s32.totalorder %s31, 3
    %p349 = por %p347, %p348
    %p351 = scmp.ne.s32.totalorder %s336, %s350
    %p352 = scmp.eq.s32.totalorder %s31, 0
    %p353 = por %p351, %p352
    %s355 = sadd.s32 %s354, 1
    %p358 = scmp.eq.s32.totalorder %s25, 3
    %p359 = scmp.ne.s32.totalorder %s354, %s356
    %p360 = scmp.eq.s32.totalorder %s25, 0
    %p361 = por %p359, %p360
    %p362 = scmp.ne.s32.totalorder %s354, %s356
    %p363 = scmp.eq.s32.totalorder %s30, 3
    %p364 = por %p362, %p363
    %p365 = scmp.ne.s32.totalorder %s356, %s357
    %p366 = scmp.eq.s32.totalorder %s30, 0
    %p367 = por %p365, %p366
    %p368 = scmp.ne.s32.totalorder %s356, %s357
    %p369 = scmp.eq.s32.totalorder %s31, 3
    %p370 = por %p368, %p369
    %p372 = scmp.ne.s32.totalorder %s357, %s371
    %p373 = scmp.eq.s32.totalorder %s31, 0
    %p374 = por %p372, %p373
    %s376 = sadd.s32 %s375, 1
    %p379 = scmp.eq.s32.totalorder %s25, 3
    %p380 = scmp.ne.s32.totalorder %s375, %s377
    %p381 = scmp.eq.s32.totalorder %s25, 0
    %p382 = por %p380, %p381
    %p383 = scmp.ne.s32.totalorder %s375, %s377
    %p384 = scmp.eq.s32.totalorder %s30, 3
    %p385 = por %p383, %p384
    %p386 = scmp.ne.s32.totalorder %s377, %s378
    %p387 = scmp.eq.s32.totalorder %s30, 0
    %p388 = por %p386, %p387
    %p389 = scmp.ne.s32.totalorder %s377, %s378
    %p390 = scmp.eq.s32.totalorder %s31, 3
    %p391 = por %p389, %p390
    %p393 = scmp.ne.s32.totalorder %s378, %s392
    %p394 = scmp.eq.s32.totalorder %s31, 0
    %p395 = por %p393, %p394
    %s397 = sadd.s32 %s396, 1
    %p400 = scmp.eq.s32.totalorder %s25, 3
    %p401 = scmp.ne.s32.totalorder %s396, %s398
    %p402 = scmp.eq.s32.totalorder %s25, 0
    %p403 = por %p401, %p402
    %p404 = scmp.ne.s32.totalorder %s396, %s398
    %p405 = scmp.eq.s32.totalorder %s30, 3
    %p406 = por %p404, %p405
    %p407 = scmp.ne.s32.totalorder %s398, %s399
    %p408 = scmp.eq.s32.totalorder %s30, 0
    %p409 = por %p407, %p408
    %p410 = scmp.ne.s32.totalorder %s398, %s399
    %p411 = scmp.eq.s32.totalorder %s31, 3
    %p412 = por %p410, %p411
    %p414 = scmp.ne.s32.totalorder %s399, %s413
    %p415 = scmp.eq.s32.totalorder %s31, 0
    %p416 = por %p414, %p415
    %s418 = sadd.s32 %s417, 1
    %p421 = scmp.eq.s32.totalorder %s25, 3
    %p422 = scmp.ne.s32.totalorder %s417, %s419
    %p423 = scmp.eq.s32.totalorder %s25, 0
    %p424 = por %p422, %p423
    %p425 = scmp.ne.s32.totalorder %s417, %s419
    %p426 = scmp.eq.s32.totalorder %s30, 3
    %p427 = por %p425, %p426
    %p428 = scmp.ne.s32.totalorder %s419, %s420
    %p429 = scmp.eq.s32.totalorder %s30, 0
    %p430 = por %p428, %p429
    %p431 = scmp.ne.s32.totalorder %s419, %s420
    %p432 = scmp.eq.s32.totalorder %s31, 3
    %p433 = por %p431, %p432
    %p435 = scmp.ne.s32.totalorder %s420, %s434
    %p436 = scmp.eq.s32.totalorder %s31, 0
    %p437 = por %p435, %p436
    %s439 = sadd.s32 %s438, 1
    %p442 = scmp.eq.s32.totalorder %s25, 3
    %p443 = scmp.ne.s32.totalorder %s438, %s440
    %p444 = scmp.eq.s32.totalorder %s25, 0
    %p445 = por %p443, %p444
    %p446 = scmp.ne.s32.totalorder %s438, %s440
    %p447 = scmp.eq.s32.totalorder %s30, 3
    %p448 = por %p446, %p447
    %p449 = scmp.ne.s32.totalorder %s440, %s441
    %p450 = scmp.eq.s32.totalorder %s30, 0
    %p451 = por %p449, %p450
    %p452 = scmp.ne.s32.totalorder %s440, %s441
    %p453 = scmp.eq.s32.totalorder %s31, 3
    %p454 = por %p452, %p453
    %p456 = scmp.ne.s32.totalorder %s441, %s455
    %p457 = scmp.eq.s32.totalorder %s31, 0
    %p458 = por %p456, %p457
    %s459 = ssub.s32 %s32, %s44
    %p460 = scmp.eq.s32.totalorder %s459, 0
    %s462 = sadd.s32 %s461, 1
    %s463 = scalar_select %p460, %s461, %s462
    %p466 = pneg %p460
    %p467 = scmp.eq.s32.totalorder %s25, 3
    %p468 = por %p466, %p467
    %p469 = scmp.ne.s32.totalorder %s461, %s464
    %p470 = scmp.eq.s32.totalorder %s25, 0
    %p471 = por %p469, %p470
    %p472 = scmp.ne.s32.totalorder %s461, %s464
    %p473 = scmp.eq.s32.totalorder %s30, 3
    %p474 = por %p472, %p473
    %p475 = scmp.ne.s32.totalorder %s464, %s465
    %p476 = scmp.eq.s32.totalorder %s30, 0
    %p477 = por %p475, %p476
    %p478 = scmp.ne.s32.totalorder %s464, %s465
    %p479 = scmp.eq.s32.totalorder %s31, 3
    %p480 = por %p478, %p479
    %p482 = scmp.ne.s32.totalorder %s465, %s481
    %p483 = scmp.eq.s32.totalorder %s31, 0
    %p484 = por %p482, %p483
    %p485 = scmp.le.s32.totalorder 1, %s25
    %p486 = scmp.lt.s32.totalorder %s25, 5
    %p487 = pnand %p485, %p486
    %p488 = pneg %p487
    // Predicated region
    $region9: #{vjepa2_predictor_forward.3} parent=5 // pred_check
      _
    $region10: #{vjepa2_predictor_forward.3} parent=5 // pred_check_branch
      %490 = sbr.rel (%p487) target = $region12
    $region11: #{vjepa2_predictor_forward.3} parent=5 // pred_region
      %s491 = ssub.s32 %s25, 1
      // Predicated region
      $region13: #{vjepa2_predictor_forward.3} parent=11 // pred_check
        %p492 = pneg %p136
      $region14: #{vjepa2_predictor_forward.3} parent=11 // pred_check_branch
        %494 = sbr.rel (%p492) target = $region16
      $region15: #{vjepa2_predictor_forward.3} parent=11 // pred_region
        _
      $region16: #{vjepa2_predictor_forward.3} parent=11 // pred_fallthru
        _
      // Predicated region
      $region17: #{vjepa2_predictor_forward.3} parent=11 // pred_check
        %p495 = pneg %p157
      $region18: #{vjepa2_predictor_forward.3} parent=11 // pred_check_branch
        %497 = sbr.rel (%p495) target = $region20
      $region19: #{vjepa2_predictor_forward.3} parent=11 // pred_region
        _
      $region20: #{vjepa2_predictor_forward.3} parent=11 // pred_fallthru
        _
      // Predicated region
      $region21: #{vjepa2_predictor_forward.3} parent=11 // pred_check
        %p498 = pneg %p178
      $region22: #{vjepa2_predictor_forward.3} parent=11 // pred_check_branch
        %500 = sbr.rel (%p498) target = $region24
      $region23: #{vjepa2_predictor_forward.3} parent=11 // pred_region
        _
      $region24: #{vjepa2_predictor_forward.3} parent=11 // pred_fallthru
        _
      // Predicated region
      $region25: #{vjepa2_predictor_forward.3} parent=11 // pred_check
        %p501 = pneg %p199
      $region26: #{vjepa2_predictor_forward.3} parent=11 // pred_check_branch
        %503 = sbr.rel (%p501) target = $region28
      $region27: #{vjepa2_predictor_forward.3} parent=11 // pred_region
        _
      $region28: #{vjepa2_predictor_forward.3} parent=11 // pred_fallthru
        _
      // Predicated region
      $region29: #{vjepa2_predictor_forward.3} parent=11 // pred_check
        %p504 = pneg %p220
      $region30: #{vjepa2_predictor_forward.3} parent=11 // pred_check_branch
        %506 = sbr.rel (%p504) target = $region32
      $region31: #{vjepa2_predictor_forward.3} parent=11 // pred_region
        _
      $region32: #{vjepa2_predictor_forward.3} parent=11 // pred_fallthru
        _
      // Predicated region
      $region33: #{vjepa2_predictor_forward.3} parent=11 // pred_check
        %p507 = pneg %p241
      $region34: #{vjepa2_predictor_forward.3} parent=11 // pred_check_branch
        %509 = sbr.rel (%p507) target = $region36
      $region35: #{vjepa2_predictor_forward.3} parent=11 // pred_region
        _
      $region36: #{vjepa2_predictor_forward.3} parent=11 // pred_fallthru
        _
      // Predicated region
      $region37: #{vjepa2_predictor_forward.3} parent=11 // pred_check
        %p510 = pneg %p262
      $region38: #{vjepa2_predictor_forward.3} parent=11 // pred_check_branch
        %512 = sbr.rel (%p510) target = $region40
      $region39: #{vjepa2_predictor_forward.3} parent=11 // pred_region
        _
      $region40: #{vjepa2_predictor_forward.3} parent=11 // pred_fallthru
        _
      // Predicated region
      $region41: #{vjepa2_predictor_forward.3} parent=11 // pred_check
        %p513 = pneg %p283
      $region42: #{vjepa2_predictor_forward.3} parent=11 // pred_check_branch
        %515 = sbr.rel (%p513) target = $region44
      $region43: #{vjepa2_predictor_forward.3} parent=11 // pred_region
        _
      $region44: #{vjepa2_predictor_forward.3} parent=11 // pred_fallthru
        _
      // Predicated region
      $region45: #{vjepa2_predictor_forward.3} parent=11 // pred_check
        %p516 = pneg %p304
      $region46: #{vjepa2_predictor_forward.3} parent=11 // pred_check_branch
        %518 = sbr.rel (%p516) target = $region48
      $region47: #{vjepa2_predictor_forward.3} parent=11 // pred_region
        _
      $region48: #{vjepa2_predictor_forward.3} parent=11 // pred_fallthru
        _
      // Predicated region
      $region49: #{vjepa2_predictor_forward.3} parent=11 // pred_check
        %p519 = pneg %p325
      $region50: #{vjepa2_predictor_forward.3} parent=11 // pred_check_branch
        %521 = sbr.rel (%p519) target = $region52
      $region51: #{vjepa2_predictor_forward.3} parent=11 // pred_region
        _
      $region52: #{vjepa2_predictor_forward.3} parent=11 // pred_fallthru
        _
      // Predicated region
      $region53: #{vjepa2_predictor_forward.3} parent=11 // pred_check
        %p522 = pneg %p346
      $region54: #{vjepa2_predictor_forward.3} parent=11 // pred_check_branch
        %524 = sbr.rel (%p522) target = $region56
      $region55: #{vjepa2_predictor_forward.3} parent=11 // pred_region
        _
      $region56: #{vjepa2_predictor_forward.3} parent=11 // pred_fallthru
        _
      // Predicated region
      $region57: #{vjepa2_predictor_forward.3} parent=11 // pred_check
        %p525 = pneg %p367
      $region58: #{vjepa2_predictor_forward.3} parent=11 // pred_check_branch
        %527 = sbr.rel (%p525) target = $region60
      $region59: #{vjepa2_predictor_forward.3} parent=11 // pred_region
        _
      $region60: #{vjepa2_predictor_forward.3} parent=11 // pred_fallthru
        _
      // Predicated region
      $region61: #{vjepa2_predictor_forward.3} parent=11 // pred_check
        %p528 = pneg %p388
      $region62: #{vjepa2_predictor_forward.3} parent=11 // pred_check_branch
        %530 = sbr.rel (%p528) target = $region64
      $region63: #{vjepa2_predictor_forward.3} parent=11 // pred_region
        _
      $region64: #{vjepa2_predictor_forward.3} parent=11 // pred_fallthru
        _
      // Predicated region
      $region65: #{vjepa2_predictor_forward.3} parent=11 // pred_check
        %p531 = pneg %p409
      $region66: #{vjepa2_predictor_forward.3} parent=11 // pred_check_branch
        %533 = sbr.rel (%p531) target = $region68
      $region67: #{vjepa2_predictor_forward.3} parent=11 // pred_region
        _
      $region68: #{vjepa2_predictor_forward.3} parent=11 // pred_fallthru
        _
      // Predicated region
      $region69: #{vjepa2_predictor_forward.3} parent=11 // pred_check
        %p534 = pneg %p430
      $region70: #{vjepa2_predictor_forward.3} parent=11 // pred_check_branch
        %536 = sbr.rel (%p534) target = $region72
      $region71: #{vjepa2_predictor_forward.3} parent=11 // pred_region
        _
      $region72: #{vjepa2_predictor_forward.3} parent=11 // pred_fallthru
        _
      // Predicated region
      $region73: #{vjepa2_predictor_forward.3} parent=11 // pred_check
        %p537 = pneg %p451
      $region74: #{vjepa2_predictor_forward.3} parent=11 // pred_check_branch
        %539 = sbr.rel (%p537) target = $region76
      $region75: #{vjepa2_predictor_forward.3} parent=11 // pred_region
        _
      $region76: #{vjepa2_predictor_forward.3} parent=11 // pred_fallthru
        _
    $region12: #{vjepa2_predictor_forward.3} parent=5 // pred_fallthru
      _
    %p540 = scmp.lt.s32.totalorder %s25, 4
    // Predicated region
    $region77: #{vjepa2_predictor_forward.3} parent=5 // pred_check
      %p541 = pneg %p540
    $region78: #{vjepa2_predictor_forward.3} parent=5 // pred_check_branch
      %543 = sbr.rel (%p541) target = $region80
    $region79: #{vjepa2_predictor_forward.3} parent=5 // pred_region
      // Predicated region
      $region81: #{vjepa2_predictor_forward.3} parent=79 // pred_check
        %p544 = pneg %p57
      $region82: #{vjepa2_predictor_forward.3} parent=79 // pred_check_branch
        %546 = sbr.rel (%p544) target = $region84
      $region83: #{vjepa2_predictor_forward.3} parent=79 // pred_region
        %p547 = scmp.lt.s32.totalorder %s32, 1
        %s548 = scalar_select %p547, %s32, 1
        %s549 = smul.addr %s548, 3
        %s550 = smul.addr %s549, 8
        %s551 = scalar_lea.vmem %s0, %s550
      $region84: #{vjepa2_predictor_forward.3} parent=79 // pred_fallthru
        _
      // Predicated region
      $region85: #{vjepa2_predictor_forward.3} parent=79 // pred_check
        %p552 = pneg %p83
      $region86: #{vjepa2_predictor_forward.3} parent=79 // pred_check_branch
        %554 = sbr.rel (%p552) target = $region88
      $region87: #{vjepa2_predictor_forward.3} parent=79 // pred_region
        %p555 = scmp.lt.s32.totalorder %s32, 1
        %s556 = scalar_select %p555, %s32, 1
        %s557 = smul.addr %s556, 3
        %s558 = smul.addr %s557, 8
        %s559 = scalar_lea.vmem %s1, %s558
      $region88: #{vjepa2_predictor_forward.3} parent=79 // pred_fallthru
        _
      // Predicated region
      $region89: #{vjepa2_predictor_forward.3} parent=79 // pred_check
        %p560 = pneg %p109
      $region90: #{vjepa2_predictor_forward.3} parent=79 // pred_check_branch
        %562 = sbr.rel (%p560) target = $region92
      $region91: #{vjepa2_predictor_forward.3} parent=79 // pred_region
        %p563 = scmp.lt.s32.totalorder %s32, 1
        %s564 = scalar_select %p563, %s32, 1
        %s565 = smul.addr %s564, 3
        %s566 = smul.addr %s565, 8
        %s567 = scalar_lea.vmem %s2, %s566
      $region92: #{vjepa2_predictor_forward.3} parent=79 // pred_fallthru
        _
    $region80: #{vjepa2_predictor_forward.3} parent=5 // pred_fallthru
      _
    %p568 = scmp.le.s32.totalorder 1, %s25
    %p569 = scmp.lt.s32.totalorder %s25, 5
    %p570 = pnand %p568, %p569
    %p571 = pneg %p570
    // Predicated region
    $region93: #{vjepa2_predictor_forward.3} parent=5 // pred_check
      _
    $region94: #{vjepa2_predictor_forward.3} parent=5 // pred_check_branch
      %573 = sbr.rel (%p570) target = $region96
    $region95: #{vjepa2_predictor_forward.3} parent=5 // pred_region
      %s574 = ssub.s32 %s25, 1
      %p575 = scmp.lt.s32.totalorder %s34, 1
      %s576 = scalar_select %p575, %s34, 1
      %s577 = smul.addr %s576, 3
      %s578 = smul.addr %s577, 8
      %s579 = scalar_lea.vmem %s0, %s578
      %p580 = pneg %p63
      %p581 = pneg %p60
      %p582 = scmp.lt.s32.totalorder %s34, 1
      %s583 = scalar_select %p582, %s34, 1
      %s584 = smul.addr %s583, 3
      %s585 = smul.addr %s584, 8
      %s586 = scalar_lea.vmem %s1, %s585
      %p587 = pneg %p89
      %p588 = pneg %p86
      %p589 = scmp.lt.s32.totalorder %s34, 1
      %s590 = scalar_select %p589, %s34, 1
      %s591 = smul.addr %s590, 3
      %s592 = smul.addr %s591, 8
      %s593 = scalar_lea.vmem %s2, %s592
      %p594 = pneg %p115
      %p595 = pneg %p112
      %p596 = pneg %p136
      %p597 = pneg %p133
      %p598 = pneg %p157
      %p599 = pneg %p154
      %p600 = pneg %p178
      %p601 = pneg %p175
      %p602 = pneg %p199
      %p603 = pneg %p196
      %p604 = pneg %p220
      %p605 = pneg %p217
      %p606 = pneg %p241
      %p607 = pneg %p238
      %p608 = pneg %p262
      %p609 = pneg %p259
      %p610 = pneg %p283
      %p611 = pneg %p280
      %p612 = pneg %p304
      %p613 = pneg %p301
      %p614 = pneg %p325
      %p615 = pneg %p322
      %p616 = pneg %p346
      %p617 = pneg %p343
      %p618 = pneg %p367
      %p619 = pneg %p364
      %p620 = pneg %p388
      %p621 = pneg %p385
      %p622 = pneg %p409
      %p623 = pneg %p406
      %p624 = pneg %p430
      %p625 = pneg %p427
      %p626 = pneg %p451
      %p627 = pneg %p448
      %p628 = pneg %p477
      %p629 = pneg %p474
      %p630 = scmp.lt.s32.totalorder %s34, 1
      %s631 = scalar_select %p630, %s34, 1
      %s632 = smul.addr %s631, 3
      %s633 = smul.addr %s632, 8
      %s634 = scalar_lea.vmem %s19, %s633
      %p635 = scmp.lt.s32.totalorder %s34, 1
      %s636 = scalar_select %p635, %s34, 1
      %s637 = smul.addr %s636, 3
      %s638 = smul.addr %s637, 8
      %s639 = scalar_lea.vmem %s0, %s638
      %p640 = scmp.lt.s32.totalorder %s34, 1
      %s641 = scalar_select %p640, %s34, 1
      %s642 = smul.addr %s641, 3
      %s643 = smul.addr %s642, 8
      %s644 = scalar_lea.vmem %s1, %s643
      %p645 = scmp.lt.s32.totalorder %s34, 1
      %s646 = scalar_select %p645, %s34, 1
      %s647 = smul.addr %s646, 3
      %s648 = smul.addr %s647, 8
      %s649 = scalar_lea.vmem %s2, %s648
      %p650 = scmp.lt.s32.totalorder %s34, 1
      %s651 = scalar_select %p650, %s34, 1
      %s652 = smul.addr %s651, 3
      %s653 = smul.addr %s652, 8
      %s654 = scalar_lea.vmem %s19, %s653
      %p655 = scmp.eq.s32.totalorder %s35, 0
      // Predicated region
      $region97: #{vjepa2_predictor_forward.3} parent=95 // pred_check
        %p656 = pneg %p655
      $region98: #{vjepa2_predictor_forward.3} parent=95 // pred_check_branch
        %658 = sbr.rel (%p656) target = $region100
      $region99: #{vjepa2_predictor_forward.3} parent=95 // pred_region
        %v659 = vld [vmem:[%s639] sm:$0xff]
        %v660 = vld [vmem:[%s639 + $0x8] sm:$0xff]
        %v661 = vld [vmem:[%s639 + $0x10] sm:$0xff]
        %vm662 = vcmask 523264
        %663 = vst.msk [vmem:[#allocation2] sm:$0xff] %vm662, %v659
        %664 = vst.msk [vmem:[#allocation2 + $0x8] sm:$0xff] %vm662, %v660
        %665 = vst.msk [vmem:[#allocation2 + $0x10] sm:$0xff] %vm662, %v661
      $region100: #{vjepa2_predictor_forward.3} parent=95 // pred_fallthru
        _
      %v666 = vld [vmem:[#allocation2] sm:$0xff]
      %v667 = vld [vmem:[#allocation2 + $0x8] sm:$0xff]
      %v668 = vld [vmem:[#allocation2 + $0x10] sm:$0xff]
      %v669 = vld [vmem:[%s644] sm:$0xff]
      %v670 = vld [vmem:[%s644 + $0x8] sm:$0xff]
      %v671 = vld [vmem:[%s644 + $0x10] sm:$0xff]
      %v672 = vld [vmem:[%s649] sm:$0xff]
      %v673 = vld [vmem:[%s649 + $0x8] sm:$0xff]
      %v674 = vld [vmem:[%s649 + $0x10] sm:$0xff]
      %s675 = scalar_lea.vmem %s3, %s35
      %v676 = vld [vmem:[%s675] sm:$0x1]
      %s677 = scalar_lea.vmem %s4, %s35
      %v678 = vld [vmem:[%s677] sm:$0x1]
      %vm679 = vcmask 523264
      %v680 = vsel %vm679, %v666, 0.0
      %681 = vadd.xlane.f32.xlu0 %v680
      %v682 = vpop.xlane.xlu0 %681
      %v683 = vsel %vm679, %v667, 0.0
      %684 = vadd.xlane.f32.xlu0 %v683
      %v685 = vpop.xlane.xlu0 %684
      %v686 = vsel %vm679, %v668, 0.0
      %687 = vadd.xlane.f32.xlu0 %v686
      %v688 = vpop.xlane.xlu0 %687
      %v689 = vrcp.pop 64.0
      %v690 = vmul.f32 %v682, %v689
      %v691 = vmul.f32 %v685, %v689
      %v692 = vmul.f32 %v688, %v689
      %v693 = vsub.f32 %v666, %v690
      %v694 = vsub.f32 %v667, %v691
      %v695 = vsub.f32 %v668, %v692
      %v696 = vmul.f32 %v693, %v693
      %v697 = vmul.f32 %v694, %v694
      %v698 = vmul.f32 %v695, %v695
      %v699 = vsel %vm679, %v696, 0.0
      %700 = vadd.xlane.f32.xlu0 %v699
      %v701 = vpop.xlane.xlu0 %700
      %v702 = vsel %vm679, %v697, 0.0
      %703 = vadd.xlane.f32.xlu0 %v702
      %v704 = vpop.xlane.xlu0 %703
      %v705 = vsel %vm679, %v698, 0.0
      %706 = vadd.xlane.f32.xlu0 %v705
      %v707 = vpop.xlane.xlu0 %706
      %v708 = vmul.f32 %v701, %v689
      %v709 = vmul.f32 %v704, %v689
      %v710 = vmul.f32 %v707, %v689
      %v711 = vadd.f32 %v708, 1e-06
      %v712 = vadd.f32 %v709, 1e-06
      %v713 = vadd.f32 %v710, 1e-06
      %v714 = vrsqrt.pop %v711
      %v715 = vrsqrt.pop %v712
      %v716 = vrsqrt.pop %v713
      %v717 = vmul.f32 %v693, %v714
      %v718 = vmul.f32 %v694, %v715
      %v719 = vmul.f32 %v695, %v716
      %v721 = vlaneseq
      %v722 = vshrl.u32 %v721, 7
      %v723 = vsub.s32 0, %v722
      %v724 = vrot.slane %v676, %v723
      %v726 = vmul.f32 %v717, %v724
      %v727 = vmul.f32 %v718, %v724
      %v728 = vmul.f32 %v719, %v724
      %v730 = vlaneseq
      %v731 = vshrl.u32 %v730, 7
      %v732 = vsub.s32 0, %v731
      %v733 = vrot.slane %v678, %v732
      %v735 = vadd.f32 %v726, %v733
      %v736 = vadd.f32 %v727, %v733
      %v737 = vadd.f32 %v728, %v733
      %s738 = smul.u32 %s35, 24
      %s739 = smul.addr %s738, 8
      %s740 = scalar_lea.vmem %s5, %s739
      %v741 = vld [vmem:[%s740] sm:$0xff]
      %v742 = vld [vmem:[%s740 + $0x8] sm:$0xff]
      %v743 = vld [vmem:[%s740 + $0x10] sm:$0xff]
      %v744 = vld [vmem:[%s740 + $0x18] sm:$0xff]
      %v745 = vld [vmem:[%s740 + $0x20] sm:$0xff]
      %v746 = vld [vmem:[%s740 + $0x28] sm:$0xff]
      %v747 = vld [vmem:[%s740 + $0x30] sm:$0xff]
      %v748 = vld [vmem:[%s740 + $0x38] sm:$0xff]
      %v749 = vld [vmem:[%s740 + $0x40] sm:$0xff]
      %v750 = vld [vmem:[%s740 + $0x48] sm:$0xff]
      %v751 = vld [vmem:[%s740 + $0x50] sm:$0xff]
      %v752 = vld [vmem:[%s740 + $0x58] sm:$0xff]
      %v753 = vld [vmem:[%s740 + $0x60] sm:$0xff]
      %v754 = vld [vmem:[%s740 + $0x68] sm:$0xff]
      %v755 = vld [vmem:[%s740 + $0x70] sm:$0xff]
      %v756 = vld [vmem:[%s740 + $0x78] sm:$0xff]
      %v757 = vld [vmem:[%s740 + $0x80] sm:$0xff]
      %v758 = vld [vmem:[%s740 + $0x88] sm:$0xff]
      %v759 = vld [vmem:[%s740 + $0x90] sm:$0xff]
      %v760 = vld [vmem:[%s740 + $0x98] sm:$0xff]
      %v761 = vld [vmem:[%s740 + $0xa0] sm:$0xff]
      %v762 = vld [vmem:[%s740 + $0xa8] sm:$0xff]
      %v763 = vld [vmem:[%s740 + $0xb0] sm:$0xff]
      %v764 = vld [vmem:[%s740 + $0xb8] sm:$0xff]
      %s765 = smul.u32 %s35, 3
      %s766 = scalar_lea.vmem %s6, %s765
      %v767 = vld [vmem:[%s766] sm:$0x7]
      %v769 = vlaneseq
      %v770 = vshrl.u32 %v769, 7
      %v771 = vsub.s32 0, %v770
      %v772 = vrot.slane %v767, %v771
      %v773 = vlaneseq
      %v774 = vshrl.u32 %v773, 7
      %v775 = vsub.s32 1, %v774
      %v776 = vrot.slane %v767, %v775
      %v777 = vlaneseq
      %v778 = vshrl.u32 %v777, 7
      %v779 = vsub.s32 2, %v778
      %v780 = vrot.slane %v767, %v779
      %v785 = vsel %vm679, %v735, 0
      %v788 = vsel %vm679, %v736, 0
      %v791 = vsel %vm679, %v737, 0
      %793 = vmatprep.subr.mxu0 0.0
      %794 = vmatpush1.msra.mxu0 0.0
      %795 = vmatprep.subr.mxu0 0.0
      %796 = vmatpush1.msra.mxu0 0.0
      %797 = vmatprep.subr.mxu0 0.0
      %798 = vmatpush1.msra.mxu0 0.0
      %799 = vmatprep.subr.mxu0 0.0
      %800 = vmatpush1.msra.mxu0 0.0
      %801 = vmatprep.subr.mxu0 0.0
      %802 = vmatpush1.msra.mxu0 0.0
      %803 = vmatprep.subr.mxu0 0.0
      %804 = vmatpush1.msra.mxu0 0.0
      %805 = vmatprep.subr.mxu0 0.0
      %806 = vmatpush1.msra.mxu0 0.0
      %807 = vmatprep.subr.mxu0 0.0
      %808 = vmatpush1.msra.mxu0 0.0
      %809 = vmatprep.subr.mxu0 %v763
      %810 = vmatpush1.msra.mxu0 %v762
      %811 = vmatprep.subr.mxu0 %v760
      %812 = vmatpush1.msra.mxu0 %v759
      %813 = vmatprep.subr.mxu0 %v757
      %814 = vmatpush1.msra.mxu0 %v756
      %815 = vmatprep.subr.mxu0 %v754
      %816 = vmatpush1.msra.mxu0 %v753
      %817 = vmatprep.subr.mxu0 %v751
      %818 = vmatpush1.msra.mxu0 %v750
      %819 = vmatprep.subr.mxu0 %v748
      %820 = vmatpush1.msra.mxu0 %v747
      %821 = vmatprep.subr.mxu0 %v745
      %822 = vmatpush1.msra.mxu0 %v744
      %823 = vmatprep.subr.mxu0 %v742
      %824 = vmatpush1.msra.mxu0 %v741
      %825 = vmatprep.subr.mxu0 0.0
      %826 = vmatpush2.msra.mxu0 0.0
      %827 = vmatprep.subr.mxu0 0.0
      %828 = vmatpush2.msra.mxu0 0.0
      %829 = vmatprep.subr.mxu0 0.0
      %830 = vmatpush2.msra.mxu0 0.0
      %831 = vmatprep.subr.mxu0 0.0
      %832 = vmatpush2.msra.mxu0 0.0
      %833 = vmatprep.subr.mxu0 0.0
      %834 = vmatpush2.msra.mxu0 0.0
      %835 = vmatprep.subr.mxu0 0.0
      %836 = vmatpush2.msra.mxu0 0.0
      %837 = vmatprep.subr.mxu0 0.0
      %838 = vmatpush2.msra.mxu0 0.0
      %839 = vmatprep.subr.mxu0 0.0
      %840 = vmatpush2.msra.mxu0 0.0
      %841 = vmatprep.subr.mxu0 0.0
      %842 = vmatpush2.msra.mxu0 0.0
      %843 = vmatprep.subr.mxu0 0.0
      %844 = vmatpush2.msra.mxu0 0.0
      %845 = vmatprep.subr.mxu0 0.0
      %846 = vmatpush2.msra.mxu0 0.0
      %847 = vmatprep.subr.mxu0 0.0
      %848 = vmatpush2.msra.mxu0 0.0
      %849 = vmatprep.subr.mxu0 0.0
      %850 = vmatpush2.msra.mxu0 0.0
      %851 = vmatprep.subr.mxu0 0.0
      %852 = vmatpush2.msra.mxu0 0.0
      %853 = vmatprep.subr.mxu0 0.0
      %854 = vmatpush2.msra.mxu0 0.0
      %855 = vmatprep.subr.mxu0 0.0
      %856 = vmatpush2.msra.mxu0 0.0
      %857 = vmatprep.mubr.f32.mxu0 0.0
      %858 = vmatmul.mubr.f32.gmra.mxu0 %v785
      %v859 = vpop.f32.mrf.mxu0
      %v860 = vadd.f32 %v772, %v859
      %v861 = vpop.f32.mrf.mxu0
      %v862 = vadd.f32 %v776, %v861
      %863 = vmatprep.mubr.f32.mxu0 0.0
      %864 = vmatmul.mubr.f32.gmra.mxu0 %v788
      %v865 = vpop.f32.mrf.mxu0
      %v866 = vadd.f32 %v772, %v865
      %v867 = vpop.f32.mrf.mxu0
      %v868 = vadd.f32 %v776, %v867
      %869 = vmatprep.mubr.f32.mxu0 0.0
      %870 = vmatmul.mubr.f32.gmra.mxu0 %v791
      %v871 = vpop.f32.mrf.mxu0
      %v872 = vadd.f32 %v772, %v871
      %v873 = vpop.f32.mrf.mxu0
      %v874 = vadd.f32 %v776, %v873
      %875 = vdwg.mxu0
      %876 = vmatprep.subr.mxu0 0.0
      %877 = vmatpush1.msra.mxu0 0.0
      %878 = vmatprep.subr.mxu0 0.0
      %879 = vmatpush1.msra.mxu0 0.0
      %880 = vmatprep.subr.mxu0 0.0
      %881 = vmatpush1.msra.mxu0 0.0
      %882 = vmatprep.subr.mxu0 0.0
      %883 = vmatpush1.msra.mxu0 0.0
      %884 = vmatprep.subr.mxu0 0.0
      %885 = vmatpush1.msra.mxu0 0.0
      %886 = vmatprep.subr.mxu0 0.0
      %887 = vmatpush1.msra.mxu0 0.0
      %888 = vmatprep.subr.mxu0 0.0
      %889 = vmatpush1.msra.mxu0 0.0
      %890 = vmatprep.subr.mxu0 0.0
      %891 = vmatpush1.msra.mxu0 0.0
      %892 = vmatprep.subr.mxu0 0.0
      %893 = vmatpush1.msra.mxu0 %v764
      %894 = vmatprep.subr.mxu0 0.0
      %895 = vmatpush1.msra.mxu0 %v761
      %896 = vmatprep.subr.mxu0 0.0
      %897 = vmatpush1.msra.mxu0 %v758
      %898 = vmatprep.subr.mxu0 0.0
      %899 = vmatpush1.msra.mxu0 %v755
      %900 = vmatprep.subr.mxu0 0.0
      %901 = vmatpush1.msra.mxu0 %v752
      %902 = vmatprep.subr.mxu0 0.0
      %903 = vmatpush1.msra.mxu0 %v749
      %904 = vmatprep.subr.mxu0 0.0
      %905 = vmatpush1.msra.mxu0 %v746
      %906 = vmatprep.subr.mxu0 0.0
      %907 = vmatpush1.msra.mxu0 %v743
      %908 = vmatprep.subr.mxu0 0.0
      %909 = vmatpush2.msra.mxu0 0.0
      %910 = vmatprep.subr.mxu0 0.0
      %911 = vmatpush2.msra.mxu0 0.0
      %912 = vmatprep.subr.mxu0 0.0
      %913 = vmatpush2.msra.mxu0 0.0
      %914 = vmatprep.subr.mxu0 0.0
      %915 = vmatpush2.msra.mxu0 0.0
      %916 = vmatprep.subr.mxu0 0.0
      %917 = vmatpush2.msra.mxu0 0.0
      %918 = vmatprep.subr.mxu0 0.0
      %919 = vmatpush2.msra.mxu0 0.0
      %920 = vmatprep.subr.mxu0 0.0
      %921 = vmatpush2.msra.mxu0 0.0
      %922 = vmatprep.subr.mxu0 0.0
      %923 = vmatpush2.msra.mxu0 0.0
      %924 = vmatprep.subr.mxu0 0.0
      %925 = vmatpush2.msra.mxu0 0.0
      %926 = vmatprep.subr.mxu0 0.0
      %927 = vmatpush2.msra.mxu0 0.0
      %928 = vmatprep.subr.mxu0 0.0
      %929 = vmatpush2.msra.mxu0 0.0
      %930 = vmatprep.subr.mxu0 0.0
      %931 = vmatpush2.msra.mxu0 0.0
      %932 = vmatprep.subr.mxu0 0.0
      %933 = vmatpush2.msra.mxu0 0.0
      %934 = vmatprep.subr.mxu0 0.0
      %935 = vmatpush2.msra.mxu0 0.0
      %936 = vmatprep.subr.mxu0 0.0
      %937 = vmatpush2.msra.mxu0 0.0
      %938 = vmatprep.subr.mxu0 0.0
      %939 = vmatpush2.msra.mxu0 0.0
      %940 = vmatprep.mubr.f32.mxu0 0.0
      %941 = vmatmul.mubr.f32.gmra.mxu0 %v785
      %v942 = vpop.f32.mrf.mxu0
      %v943 = vadd.f32 %v780, %v942
      %v944 = vpop.f32.mrf.mxu0
      %945 = vmatprep.mubr.f32.mxu0 0.0
      %946 = vmatmul.mubr.f32.gmra.mxu0 %v788
      %v947 = vpop.f32.mrf.mxu0
      %v948 = vadd.f32 %v780, %v947
      %v949 = vpop.f32.mrf.mxu0
      %950 = vmatprep.mubr.f32.mxu0 0.0
      %951 = vmatmul.mubr.f32.gmra.mxu0 %v791
      %v952 = vpop.f32.mrf.mxu0
      %v953 = vadd.f32 %v780, %v952
      %v954 = vpop.f32.mrf.mxu0
      %955 = vdwg.mxu0
      %v956 = vmul.f32 %v860, %v669
      %v957 = vmul.f32 %v866, %v670
      %v958 = vmul.f32 %v872, %v671
      %962 = vrot.lane.b32.xlu0 %v672, 64
      %v963 = vpop.permute.xlu0 %962
      %964 = vrot.lane.b32.xlu0 %v673, 64
      %v965 = vpop.permute.xlu0 %964
      %966 = vrot.lane.b32.xlu0 %v674, 64
      %v967 = vpop.permute.xlu0 %966
      %v971 = vmul.f32 %v862, %v963
      %v972 = vmul.f32 %v868, %v965
      %v973 = vmul.f32 %v874, %v967
      %977 = vrot.lane.b32.xlu0 %v971, 64
      %v978 = vpop.permute.xlu0 %977
      %979 = vrot.lane.b32.xlu0 %v972, 64
      %v980 = vpop.permute.xlu0 %979
      %981 = vrot.lane.b32.xlu0 %v973, 64
      %v982 = vpop.permute.xlu0 %981
      %v986 = vadd.f32 %v956, %v978
      %v987 = vadd.f32 %v957, %v980
      %v988 = vadd.f32 %v958, %v982
      %992 = vrot.lane.b32.xlu0 %v669, 64
      %v993 = vpop.permute.xlu0 %992
      %994 = vrot.lane.b32.xlu0 %v670, 64
      %v995 = vpop.permute.xlu0 %994
      %996 = vrot.lane.b32.xlu0 %v671, 64
      %v997 = vpop.permute.xlu0 %996
      %v1001 = vmul.f32 %v860, %v993
      %v1002 = vmul.f32 %v866, %v995
      %v1003 = vmul.f32 %v872, %v997
      %v1004 = vmul.f32 %v943, %v672
      %v1005 = vmul.f32 %v948, %v673
      %v1006 = vmul.f32 %v953, %v674
      %1010 = vrot.lane.b32.xlu0 %v1004, 64
      %v1011 = vpop.permute.xlu0 %1010
      %1012 = vrot.lane.b32.xlu0 %v1005, 64
      %v1013 = vpop.permute.xlu0 %1012
      %1014 = vrot.lane.b32.xlu0 %v1006, 64
      %v1015 = vpop.permute.xlu0 %1014
      %v1019 = vadd.f32 %v1001, %v1011
      %v1020 = vadd.f32 %v1002, %v1013
      %v1021 = vadd.f32 %v1003, %v1015
      %s1022 = smul.u32 %s35, 64
      %s1023 = scalar_lea.vmem %s7, %s1022
      %v1024 = vld [vmem:[%s1023] sm:$0xff]
      %v1025 = vld [vmem:[%s1023 + $0x8] sm:$0xff]
      %v1026 = vld [vmem:[%s1023 + $0x10] sm:$0xff]
      %v1027 = vld [vmem:[%s1023 + $0x18] sm:$0xff]
      %v1028 = vld [vmem:[%s1023 + $0x20] sm:$0xff]
      %v1029 = vld [vmem:[%s1023 + $0x28] sm:$0xff]
      %v1030 = vld [vmem:[%s1023 + $0x30] sm:$0xff]
      %v1031 = vld [vmem:[%s1023 + $0x38] sm:$0xff]
      %1035 = vrot.lane.b32.xlu0 %v1019, 64
      %v1036 = vpop.permute.xlu0 %1035
      %1037 = vrot.lane.b32.xlu0 %v1020, 64
      %v1038 = vpop.permute.xlu0 %1037
      %1039 = vrot.lane.b32.xlu0 %v1021, 64
      %v1040 = vpop.permute.xlu0 %1039
      %vm1041 = vcmask 130048
      %v1043 = vsel %vm1041, %v986, 0
      %v1046 = vsel %vm1041, %v987, 0
      %v1049 = vsel %vm1041, %v988, 0
      %v1051 = vsel %vm1041, %v1036, 0
      %v1053 = vsel %vm1041, %v1038, 0
      %v1055 = vsel %vm1041, %v1040, 0
      %1057 = vmatprep.subr.mxu0 0.0
      %1058 = vmatpush1.xpose.msra.mxu0 0.0
      %1059 = vmatprep.subr.mxu0 0.0
      %1060 = vmatpush1.xpose.msra.mxu0 0.0
      %1061 = vmatprep.subr.mxu0 0.0
      %1062 = vmatpush1.xpose.msra.mxu0 0.0
      %1063 = vmatprep.subr.mxu0 0.0
      %1064 = vmatpush1.xpose.msra.mxu0 0.0
      %1065 = vmatprep.subr.mxu0 0.0
      %1066 = vmatpush1.xpose.msra.mxu0 0.0
      %1067 = vmatprep.subr.mxu0 0.0
      %1068 = vmatpush1.xpose.msra.mxu0 0.0
      %1069 = vmatprep.subr.mxu0 0.0
      %1070 = vmatpush1.xpose.msra.mxu0 0.0
      %1071 = vmatprep.subr.mxu0 0.0
      %1072 = vmatpush1.xpose.msra.mxu0 0.0
      %1073 = vmatprep.subr.mxu0 0.0
      %1074 = vmatpush1.xpose.msra.mxu0 0.0
      %1075 = vmatprep.subr.mxu0 0.0
      %1076 = vmatpush1.xpose.msra.mxu0 0.0
      %1077 = vmatprep.subr.mxu0 0.0
      %1078 = vmatpush1.xpose.msra.mxu0 0.0
      %1079 = vmatprep.subr.mxu0 0.0
      %1080 = vmatpush1.xpose.msra.mxu0 0.0
      %1081 = vmatprep.subr.mxu0 0.0
      %1082 = vmatpush1.xpose.msra.mxu0 0.0
      %1083 = vmatprep.subr.mxu0 0.0
      %1084 = vmatpush1.xpose.msra.mxu0 %v1055
      %1085 = vmatprep.subr.mxu0 0.0
      %1086 = vmatpush1.xpose.msra.mxu0 %v1053
      %1087 = vmatprep.subr.mxu0 0.0
      %1088 = vmatpush1.xpose.msra.mxu0 %v1051
      %1089 = vmatprep.subr.mxu0 0.0
      %1090 = vmatpush2.xpose.msra.mxu0 0.0
      %1091 = vmatprep.subr.mxu0 0.0
      %1092 = vmatpush2.xpose.msra.mxu0 0.0
      %1093 = vmatprep.subr.mxu0 0.0
      %1094 = vmatpush2.xpose.msra.mxu0 0.0
      %1095 = vmatprep.subr.mxu0 0.0
      %1096 = vmatpush2.xpose.msra.mxu0 0.0
      %1097 = vmatprep.subr.mxu0 0.0
      %1098 = vmatpush2.xpose.msra.mxu0 0.0
      %1099 = vmatprep.subr.mxu0 0.0
      %1100 = vmatpush2.xpose.msra.mxu0 0.0
      %1101 = vmatprep.subr.mxu0 0.0
      %1102 = vmatpush2.xpose.msra.mxu0 0.0
      %1103 = vmatprep.subr.mxu0 0.0
      %1104 = vmatpush2.xpose.msra.mxu0 0.0
      %1105 = vmatprep.subr.mxu0 0.0
      %1106 = vmatpush2.xpose.msra.mxu0 0.0
      %1107 = vmatprep.subr.mxu0 0.0
      %1108 = vmatpush2.xpose.msra.mxu0 0.0
      %1109 = vmatprep.subr.mxu0 0.0
      %1110 = vmatpush2.xpose.msra.mxu0 0.0
      %1111 = vmatprep.subr.mxu0 0.0
      %1112 = vmatpush2.xpose.msra.mxu0 0.0
      %1113 = vmatprep.subr.mxu0 0.0
      %1114 = vmatpush2.xpose.msra.mxu0 0.0
      %1115 = vmatprep.subr.mxu0 0.0
      %1116 = vmatpush2.xpose.msra.mxu0 0.0
      %1117 = vmatprep.subr.mxu0 0.0
      %1118 = vmatpush2.xpose.msra.mxu0 0.0
      %1119 = vmatprep.subr.mxu0 0.0
      %1120 = vmatpush2.xpose.msra.mxu0 0.0
      %1121 = vmatprep.mubr.f32.mxu0 0.0
      %1122 = vmatmul.mubr.f32.gmra.mxu0 %v1043
      %v1123 = vpop.f32.mrf.mxu0
      %v1124 = vadd.f32 0.0, %v1123
      %v1125 = vpop.f32.mrf.mxu0
      %1126 = vmatprep.mubr.f32.mxu0 0.0
      %1127 = vmatmul.mubr.f32.gmra.mxu0 %v1046
      %v1128 = vpop.f32.mrf.mxu0
      %v1129 = vadd.f32 0.0, %v1128
      %v1130 = vpop.f32.mrf.mxu0
      %1131 = vmatprep.mubr.f32.mxu0 0.0
      %1132 = vmatmul.mubr.f32.gmra.mxu0 %v1049
      %v1133 = vpop.f32.mrf.mxu0
      %v1134 = vadd.f32 0.0, %v1133
      %v1135 = vpop.f32.mrf.mxu0
      %1136 = vdwg.mxu0
      %vm1137 = vcmask 195584
      %v1138 = vsel %vm1137, %v1124, -inf
      %1139 = vmax.xlane.f32.xlu0 %v1138
      %v1140 = vpop.xlane.xlu0 %1139
      %v1141 = vsel %vm1137, %v1129, -inf
      %1142 = vmax.xlane.f32.xlu0 %v1141
      %v1143 = vpop.xlane.xlu0 %1142
      %v1144 = vsel %vm1137, %v1134, -inf
      %1145 = vmax.xlane.f32.xlu0 %v1144
      %v1146 = vpop.xlane.xlu0 %1145
      %v1147 = vsub.f32 %v1124, %v1140
      %v1148 = vsub.f32 %v1129, %v1143
      %v1149 = vsub.f32 %v1134, %v1146
      %v1150 = vmul.f32 %v1147, 1.442695
      %v1151 = vpow.pop %v1150
      %v1152 = vmul.f32 %v1148, 1.442695
      %v1153 = vpow.pop %v1152
      %v1154 = vmul.f32 %v1149, 1.442695
      %v1155 = vpow.pop %v1154
      %v1156 = vsel %vm1137, %v1151, 0.0
      %1157 = vadd.xlane.f32.xlu0 %v1156
      %v1158 = vpop.xlane.xlu0 %1157
      %v1159 = vsel %vm1137, %v1153, 0.0
      %1160 = vadd.xlane.f32.xlu0 %v1159
      %v1161 = vpop.xlane.xlu0 %1160
      %v1162 = vsel %vm1137, %v1155, 0.0
      %1163 = vadd.xlane.f32.xlu0 %v1162
      %v1164 = vpop.xlane.xlu0 %1163
      %v1165 = vrcp.pop %v1158
      %v1166 = vrcp.pop %v1161
      %v1167 = vrcp.pop %v1164
      %v1168 = vmul.f32 %v1151, %v1165
      %v1169 = vmul.f32 %v1153, %v1166
      %v1170 = vmul.f32 %v1155, %v1167
      %v1172 = vsel %vm1137, %v1168, 0
      %v1175 = vsel %vm1137, %v1169, 0
      %v1178 = vsel %vm1137, %v1170, 0
      %1180 = vmatprep.subr.mxu0 0.0
      %1181 = vmatpush1.msra.mxu0 0.0
      %1182 = vmatprep.subr.mxu0 0.0
      %1183 = vmatpush1.msra.mxu0 0.0
      %1184 = vmatprep.subr.mxu0 0.0
      %1185 = vmatpush1.msra.mxu0 0.0
      %1186 = vmatprep.subr.mxu0 0.0
      %1187 = vmatpush1.msra.mxu0 0.0
      %1188 = vmatprep.subr.mxu0 0.0
      %1189 = vmatpush1.msra.mxu0 0.0
      %1190 = vmatprep.subr.mxu0 0.0
      %1191 = vmatpush1.msra.mxu0 0.0
      %1192 = vmatprep.subr.mxu0 0.0
      %1193 = vmatpush1.msra.mxu0 0.0
      %1194 = vmatprep.subr.mxu0 0.0
      %1195 = vmatpush1.msra.mxu0 0.0
      %1196 = vmatprep.subr.mxu0 0.0
      %1197 = vmatpush1.msra.mxu0 0.0
      %1198 = vmatprep.subr.mxu0 0.0
      %1199 = vmatpush1.msra.mxu0 0.0
      %1200 = vmatprep.subr.mxu0 0.0
      %1201 = vmatpush1.msra.mxu0 0.0
      %1202 = vmatprep.subr.mxu0 0.0
      %1203 = vmatpush1.msra.mxu0 0.0
      %1204 = vmatprep.subr.mxu0 0.0
      %1205 = vmatpush1.msra.mxu0 0.0
      %1206 = vmatprep.subr.mxu0 0.0
      %1207 = vmatpush1.msra.mxu0 %v874
      %1208 = vmatprep.subr.mxu0 0.0
      %1209 = vmatpush1.msra.mxu0 %v868
      %1210 = vmatprep.subr.mxu0 0.0
      %1211 = vmatpush1.msra.mxu0 %v862
      %1212 = vmatprep.subr.mxu0 0.0
      %1213 = vmatpush2.msra.mxu0 0.0
      %1214 = vmatprep.subr.mxu0 0.0
      %1215 = vmatpush2.msra.mxu0 0.0
      %1216 = vmatprep.subr.mxu0 0.0
      %1217 = vmatpush2.msra.mxu0 0.0
      %1218 = vmatprep.subr.mxu0 0.0
      %1219 = vmatpush2.msra.mxu0 0.0
      %1220 = vmatprep.subr.mxu0 0.0
      %1221 = vmatpush2.msra.mxu0 0.0
      %1222 = vmatprep.subr.mxu0 0.0
      %1223 = vmatpush2.msra.mxu0 0.0
      %1224 = vmatprep.subr.mxu0 0.0
      %1225 = vmatpush2.msra.mxu0 0.0
      %1226 = vmatprep.subr.mxu0 0.0
      %1227 = vmatpush2.msra.mxu0 0.0
      %1228 = vmatprep.subr.mxu0 0.0
      %1229 = vmatpush2.msra.mxu0 0.0
      %1230 = vmatprep.subr.mxu0 0.0
      %1231 = vmatpush2.msra.mxu0 0.0
      %1232 = vmatprep.subr.mxu0 0.0
      %1233 = vmatpush2.msra.mxu0 0.0
      %1234 = vmatprep.subr.mxu0 0.0
      %1235 = vmatpush2.msra.mxu0 0.0
      %1236 = vmatprep.subr.mxu0 0.0
      %1237 = vmatpush2.msra.mxu0 0.0
      %1238 = vmatprep.subr.mxu0 0.0
      %1239 = vmatpush2.msra.mxu0 0.0
      %1240 = vmatprep.subr.mxu0 0.0
      %1241 = vmatpush2.msra.mxu0 0.0
      %1242 = vmatprep.subr.mxu0 0.0
      %1243 = vmatpush2.msra.mxu0 0.0
      %1244 = vmatprep.mubr.f32.mxu0 0.0
      %1245 = vmatmul.mubr.f32.gmra.mxu0 %v1172
      %v1246 = vpop.f32.mrf.mxu0
      %v1247 = vadd.f32 0.0, %v1246
      %v1248 = vpop.f32.mrf.mxu0
      %1249 = vmatprep.mubr.f32.mxu0 0.0
      %1250 = vmatmul.mubr.f32.gmra.mxu0 %v1175
      %v1251 = vpop.f32.mrf.mxu0
      %v1252 = vadd.f32 0.0, %v1251
      %v1253 = vpop.f32.mrf.mxu0
      %1254 = vmatprep.mubr.f32.mxu0 0.0
      %1255 = vmatmul.mubr.f32.gmra.mxu0 %v1178
      %v1256 = vpop.f32.mrf.mxu0
      %v1257 = vadd.f32 0.0, %v1256
      %v1258 = vpop.f32.mrf.mxu0
      %1259 = vdwg.mxu0
      %1260 = vrot.lane.b32.xlu0 %v986, 112
      %v1261 = vpop.permute.xlu0 %1260
      %1262 = vrot.lane.b32.xlu0 %v987, 112
      %v1263 = vpop.permute.xlu0 %1262
      %1264 = vrot.lane.b32.xlu0 %v988, 112
      %v1265 = vpop.permute.xlu0 %1264
      %1266 = vrot.lane.b32.xlu0 %v1019, 48
      %v1267 = vpop.permute.xlu0 %1266
      %1268 = vrot.lane.b32.xlu0 %v1020, 48
      %v1269 = vpop.permute.xlu0 %1268
      %1270 = vrot.lane.b32.xlu0 %v1021, 48
      %v1271 = vpop.permute.xlu0 %1270
      %v1272 = vsel %vm1041, %v1261, 0
      %v1274 = vsel %vm1041, %v1263, 0
      %v1276 = vsel %vm1041, %v1265, 0
      %v1278 = vsel %vm1041, %v1267, 0
      %v1280 = vsel %vm1041, %v1269, 0
      %v1282 = vsel %vm1041, %v1271, 0
      %1284 = vmatprep.subr.mxu0 0.0
      %1285 = vmatpush1.xpose.msra.mxu0 0.0
      %1286 = vmatprep.subr.mxu0 0.0
      %1287 = vmatpush1.xpose.msra.mxu0 0.0
      %1288 = vmatprep.subr.mxu0 0.0
      %1289 = vmatpush1.xpose.msra.mxu0 0.0
      %1290 = vmatprep.subr.mxu0 0.0
      %1291 = vmatpush1.xpose.msra.mxu0 0.0
      %1292 = vmatprep.subr.mxu0 0.0
      %1293 = vmatpush1.xpose.msra.mxu0 0.0
      %1294 = vmatprep.subr.mxu0 0.0
      %1295 = vmatpush1.xpose.msra.mxu0 0.0
      %1296 = vmatprep.subr.mxu0 0.0
      %1297 = vmatpush1.xpose.msra.mxu0 0.0
      %1298 = vmatprep.subr.mxu0 0.0
      %1299 = vmatpush1.xpose.msra.mxu0 0.0
      %1300 = vmatprep.subr.mxu0 0.0
      %1301 = vmatpush1.xpose.msra.mxu0 0.0
      %1302 = vmatprep.subr.mxu0 0.0
      %1303 = vmatpush1.xpose.msra.mxu0 0.0
      %1304 = vmatprep.subr.mxu0 0.0
      %1305 = vmatpush1.xpose.msra.mxu0 0.0
      %1306 = vmatprep.subr.mxu0 0.0
      %1307 = vmatpush1.xpose.msra.mxu0 0.0
      %1308 = vmatprep.subr.mxu0 0.0
      %1309 = vmatpush1.xpose.msra.mxu0 0.0
      %1310 = vmatprep.subr.mxu0 0.0
      %1311 = vmatpush1.xpose.msra.mxu0 %v1282
      %1312 = vmatprep.subr.mxu0 0.0
      %1313 = vmatpush1.xpose.msra.mxu0 %v1280
      %1314 = vmatprep.subr.mxu0 0.0
      %1315 = vmatpush1.xpose.msra.mxu0 %v1278
      %1316 = vmatprep.subr.mxu0 0.0
      %1317 = vmatpush2.xpose.msra.mxu0 0.0
      %1318 = vmatprep.subr.mxu0 0.0
      %1319 = vmatpush2.xpose.msra.mxu0 0.0
      %1320 = vmatprep.subr.mxu0 0.0
      %1321 = vmatpush2.xpose.msra.mxu0 0.0
      %1322 = vmatprep.subr.mxu0 0.0
      %1323 = vmatpush2.xpose.msra.mxu0 0.0
      %1324 = vmatprep.subr.mxu0 0.0
      %1325 = vmatpush2.xpose.msra.mxu0 0.0
      %1326 = vmatprep.subr.mxu0 0.0
      %1327 = vmatpush2.xpose.msra.mxu0 0.0
      %1328 = vmatprep.subr.mxu0 0.0
      %1329 = vmatpush2.xpose.msra.mxu0 0.0
      %1330 = vmatprep.subr.mxu0 0.0
      %1331 = vmatpush2.xpose.msra.mxu0 0.0
      %1332 = vmatprep.subr.mxu0 0.0
      %1333 = vmatpush2.xpose.msra.mxu0 0.0
      %1334 = vmatprep.subr.mxu0 0.0
      %1335 = vmatpush2.xpose.msra.mxu0 0.0
      %1336 = vmatprep.subr.mxu0 0.0
      %1337 = vmatpush2.xpose.msra.mxu0 0.0
      %1338 = vmatprep.subr.mxu0 0.0
      %1339 = vmatpush2.xpose.msra.mxu0 0.0
      %1340 = vmatprep.subr.mxu0 0.0
      %1341 = vmatpush2.xpose.msra.mxu0 0.0
      %1342 = vmatprep.subr.mxu0 0.0
      %1343 = vmatpush2.xpose.msra.mxu0 0.0
      %1344 = vmatprep.subr.mxu0 0.0
      %1345 = vmatpush2.xpose.msra.mxu0 0.0
      %1346 = vmatprep.subr.mxu0 0.0
      %1347 = vmatpush2.xpose.msra.mxu0 0.0
      %1348 = vmatprep.mubr.f32.mxu0 0.0
      %1349 = vmatmul.mubr.f32.gmra.mxu0 %v1272
      %v1350 = vpop.f32.mrf.mxu0
      %v1351 = vadd.f32 0.0, %v1350
      %v1352 = vpop.f32.mrf.mxu0
      %1353 = vmatprep.mubr.f32.mxu0 0.0
      %1354 = vmatmul.mubr.f32.gmra.mxu0 %v1274
      %v1355 = vpop.f32.mrf.mxu0
      %v1356 = vadd.f32 0.0, %v1355
      %v1357 = vpop.f32.mrf.mxu0
      %1358 = vmatprep.mubr.f32.mxu0 0.0
      %1359 = vmatmul.mubr.f32.gmra.mxu0 %v1276
      %v1360 = vpop.f32.mrf.mxu0
      %v1361 = vadd.f32 0.0, %v1360
      %v1362 = vpop.f32.mrf.mxu0
      %1363 = vdwg.mxu0
      %v1364 = vsel %vm1137, %v1351, -inf
      %1365 = vmax.xlane.f32.xlu0 %v1364
      %v1366 = vpop.xlane.xlu0 %1365
      %v1367 = vsel %vm1137, %v1356, -inf
      %1368 = vmax.xlane.f32.xlu0 %v1367
      %v1369 = vpop.xlane.xlu0 %1368
      %v1370 = vsel %vm1137, %v1361, -inf
      %1371 = vmax.xlane.f32.xlu0 %v1370
      %v1372 = vpop.xlane.xlu0 %1371
      %v1373 = vsub.f32 %v1351, %v1366
      %v1374 = vsub.f32 %v1356, %v1369
      %v1375 = vsub.f32 %v1361, %v1372
      %v1376 = vmul.f32 %v1373, 1.442695
      %v1377 = vpow.pop %v1376
      %v1378 = vmul.f32 %v1374, 1.442695
      %v1379 = vpow.pop %v1378
      %v1380 = vmul.f32 %v1375, 1.442695
      %v1381 = vpow.pop %v1380
      %v1382 = vsel %vm1137, %v1377, 0.0
      %1383 = vadd.xlane.f32.xlu0 %v1382
      %v1384 = vpop.xlane.xlu0 %1383
      %v1385 = vsel %vm1137, %v1379, 0.0
      %1386 = vadd.xlane.f32.xlu0 %v1385
      %v1387 = vpop.xlane.xlu0 %1386
      %v1388 = vsel %vm1137, %v1381, 0.0
      %1389 = vadd.xlane.f32.xlu0 %v1388
      %v1390 = vpop.xlane.xlu0 %1389
      %v1391 = vrcp.pop %v1384
      %v1392 = vrcp.pop %v1387
      %v1393 = vrcp.pop %v1390
      %v1394 = vmul.f32 %v1377, %v1391
      %v1395 = vmul.f32 %v1379, %v1392
      %v1396 = vmul.f32 %v1381, %v1393
      %1400 = vrot.lane.b32.xlu0 %v862, 112
      %v1401 = vpop.permute.xlu0 %1400
      %1402 = vrot.lane.b32.xlu0 %v868, 112
      %v1403 = vpop.permute.xlu0 %1402
      %1404 = vrot.lane.b32.xlu0 %v874, 112
      %v1405 = vpop.permute.xlu0 %1404
      %v1410 = vsel %vm1137, %v1394, 0
      %v1413 = vsel %vm1137, %v1395, 0
      %v1416 = vsel %vm1137, %v1396, 0
      %1418 = vmatprep.subr.mxu0 0.0
      %1419 = vmatpush1.msra.mxu0 0.0
      %1420 = vmatprep.subr.mxu0 0.0
      %1421 = vmatpush1.msra.mxu0 0.0
      %1422 = vmatprep.subr.mxu0 0.0
      %1423 = vmatpush1.msra.mxu0 0.0
      %1424 = vmatprep.subr.mxu0 0.0
      %1425 = vmatpush1.msra.mxu0 0.0
      %1426 = vmatprep.subr.mxu0 0.0
      %1427 = vmatpush1.msra.mxu0 0.0
      %1428 = vmatprep.subr.mxu0 0.0
      %1429 = vmatpush1.msra.mxu0 0.0
      %1430 = vmatprep.subr.mxu0 0.0
      %1431 = vmatpush1.msra.mxu0 0.0
      %1432 = vmatprep.subr.mxu0 0.0
      %1433 = vmatpush1.msra.mxu0 0.0
      %1434 = vmatprep.subr.mxu0 0.0
      %1435 = vmatpush1.msra.mxu0 0.0
      %1436 = vmatprep.subr.mxu0 0.0
      %1437 = vmatpush1.msra.mxu0 0.0
      %1438 = vmatprep.subr.mxu0 0.0
      %1439 = vmatpush1.msra.mxu0 0.0
      %1440 = vmatprep.subr.mxu0 0.0
      %1441 = vmatpush1.msra.mxu0 0.0
      %1442 = vmatprep.subr.mxu0 0.0
      %1443 = vmatpush1.msra.mxu0 0.0
      %1444 = vmatprep.subr.mxu0 0.0
      %1445 = vmatpush1.msra.mxu0 %v1405
      %1446 = vmatprep.subr.mxu0 0.0
      %1447 = vmatpush1.msra.mxu0 %v1403
      %1448 = vmatprep.subr.mxu0 0.0
      %1449 = vmatpush1.msra.mxu0 %v1401
      %1450 = vmatprep.subr.mxu0 0.0
      %1451 = vmatpush2.msra.mxu0 0.0
      %1452 = vmatprep.subr.mxu0 0.0
      %1453 = vmatpush2.msra.mxu0 0.0
      %1454 = vmatprep.subr.mxu0 0.0
      %1455 = vmatpush2.msra.mxu0 0.0
      %1456 = vmatprep.subr.mxu0 0.0
      %1457 = vmatpush2.msra.mxu0 0.0
      %1458 = vmatprep.subr.mxu0 0.0
      %1459 = vmatpush2.msra.mxu0 0.0
      %1460 = vmatprep.subr.mxu0 0.0
      %1461 = vmatpush2.msra.mxu0 0.0
      %1462 = vmatprep.subr.mxu0 0.0
      %1463 = vmatpush2.msra.mxu0 0.0
      %1464 = vmatprep.subr.mxu0 0.0
      %1465 = vmatpush2.msra.mxu0 0.0
      %1466 = vmatprep.subr.mxu0 0.0
      %1467 = vmatpush2.msra.mxu0 0.0
      %1468 = vmatprep.subr.mxu0 0.0
      %1469 = vmatpush2.msra.mxu0 0.0
      %1470 = vmatprep.subr.mxu0 0.0
      %1471 = vmatpush2.msra.mxu0 0.0
      %1472 = vmatprep.subr.mxu0 0.0
      %1473 = vmatpush2.msra.mxu0 0.0
      %1474 = vmatprep.subr.mxu0 0.0
      %1475 = vmatpush2.msra.mxu0 0.0
      %1476 = vmatprep.subr.mxu0 0.0
      %1477 = vmatpush2.msra.mxu0 0.0
      %1478 = vmatprep.subr.mxu0 0.0
      %1479 = vmatpush2.msra.mxu0 0.0
      %1480 = vmatprep.subr.mxu0 0.0
      %1481 = vmatpush2.msra.mxu0 0.0
      %1482 = vmatprep.mubr.f32.mxu0 0.0
      %1483 = vmatmul.mubr.f32.gmra.mxu0 %v1410
      %v1484 = vpop.f32.mrf.mxu0
      %v1485 = vadd.f32 0.0, %v1484
      %v1486 = vpop.f32.mrf.mxu0
      %1487 = vmatprep.mubr.f32.mxu0 0.0
      %1488 = vmatmul.mubr.f32.gmra.mxu0 %v1413
      %v1489 = vpop.f32.mrf.mxu0
      %v1490 = vadd.f32 0.0, %v1489
      %v1491 = vpop.f32.mrf.mxu0
      %1492 = vmatprep.mubr.f32.mxu0 0.0
      %1493 = vmatmul.mubr.f32.gmra.mxu0 %v1416
      %v1494 = vpop.f32.mrf.mxu0
      %v1495 = vadd.f32 0.0, %v1494
      %v1496 = vpop.f32.mrf.mxu0
      %1497 = vdwg.mxu0
      %v1499 = vsel %vm1041, %v1485, 0
      %v1502 = vsel %vm1041, %v1490, 0
      %v1505 = vsel %vm1041, %v1495, 0
      %1507 = vmatprep.subr.mxu0 0.0
      %1508 = vmatpush1.msra.mxu0 0.0
      %1509 = vmatprep.subr.mxu0 0.0
      %1510 = vmatpush1.msra.mxu0 0.0
      %1511 = vmatprep.subr.mxu0 0.0
      %1512 = vmatpush1.msra.mxu0 0.0
      %1513 = vmatprep.subr.mxu0 0.0
      %1514 = vmatpush1.msra.mxu0 0.0
      %1515 = vmatprep.subr.mxu0 0.0
      %1516 = vmatpush1.msra.mxu0 0.0
      %1517 = vmatprep.subr.mxu0 0.0
      %1518 = vmatpush1.msra.mxu0 0.0
      %1519 = vmatprep.subr.mxu0 0.0
      %1520 = vmatpush1.msra.mxu0 0.0
      %1521 = vmatprep.subr.mxu0 0.0
      %1522 = vmatpush1.msra.mxu0 0.0
      %1523 = vmatprep.subr.mxu0 0.0
      %1524 = vmatpush1.msra.mxu0 0.0
      %1525 = vmatprep.subr.mxu0 0.0
      %1526 = vmatpush1.msra.mxu0 0.0
      %1527 = vmatprep.subr.mxu0 0.0
      %1528 = vmatpush1.msra.mxu0 0.0
      %1529 = vmatprep.subr.mxu0 0.0
      %1530 = vmatpush1.msra.mxu0 0.0
      %1531 = vmatprep.subr.mxu0 0.0
      %1532 = vmatpush1.msra.mxu0 0.0
      %1533 = vmatprep.subr.mxu0 0.0
      %1534 = vmatpush1.msra.mxu0 0.0
      %1535 = vmatprep.subr.mxu0 0.0
      %1536 = vmatpush1.msra.mxu0 %v1027
      %1537 = vmatprep.subr.mxu0 0.0
      %1538 = vmatpush1.msra.mxu0 %v1026
      %1539 = vmatprep.subr.mxu0 0.0
      %1540 = vmatpush2.msra.mxu0 0.0
      %1541 = vmatprep.subr.mxu0 0.0
      %1542 = vmatpush2.msra.mxu0 0.0
      %1543 = vmatprep.subr.mxu0 0.0
      %1544 = vmatpush2.msra.mxu0 0.0
      %1545 = vmatprep.subr.mxu0 0.0
      %1546 = vmatpush2.msra.mxu0 0.0
      %1547 = vmatprep.subr.mxu0 0.0
      %1548 = vmatpush2.msra.mxu0 0.0
      %1549 = vmatprep.subr.mxu0 0.0
      %1550 = vmatpush2.msra.mxu0 0.0
      %1551 = vmatprep.subr.mxu0 0.0
      %1552 = vmatpush2.msra.mxu0 0.0
      %1553 = vmatprep.subr.mxu0 0.0
      %1554 = vmatpush2.msra.mxu0 0.0
      %1555 = vmatprep.subr.mxu0 0.0
      %1556 = vmatpush2.msra.mxu0 0.0
      %1557 = vmatprep.subr.mxu0 0.0
      %1558 = vmatpush2.msra.mxu0 0.0
      %1559 = vmatprep.subr.mxu0 0.0
      %1560 = vmatpush2.msra.mxu0 0.0
      %1561 = vmatprep.subr.mxu0 0.0
      %1562 = vmatpush2.msra.mxu0 0.0
      %1563 = vmatprep.subr.mxu0 0.0
      %1564 = vmatpush2.msra.mxu0 0.0
      %1565 = vmatprep.subr.mxu0 0.0
      %1566 = vmatpush2.msra.mxu0 0.0
      %1567 = vmatprep.subr.mxu0 0.0
      %1568 = vmatpush2.msra.mxu0 0.0
      %1569 = vmatprep.subr.mxu0 0.0
      %1570 = vmatpush2.msra.mxu0 0.0
      %1571 = vmatprep.mubr.f32.mxu0 0.0
      %1572 = vmatmul.mubr.f32.gmra.mxu0 %v1499
      %v1573 = vpop.f32.mrf.mxu0
      %v1574 = vadd.f32 0.0, %v1573
      %v1575 = vpop.f32.mrf.mxu0
      %1576 = vmatprep.mubr.f32.mxu0 0.0
      %1577 = vmatmul.mubr.f32.gmra.mxu0 %v1502
      %v1578 = vpop.f32.mrf.mxu0
      %v1579 = vadd.f32 0.0, %v1578
      %v1580 = vpop.f32.mrf.mxu0
      %1581 = vmatprep.mubr.f32.mxu0 0.0
      %1582 = vmatmul.mubr.f32.gmra.mxu0 %v1505
      %v1583 = vpop.f32.mrf.mxu0
      %v1584 = vadd.f32 0.0, %v1583
      %v1585 = vpop.f32.mrf.mxu0
      %1586 = vdwg.mxu0
      %v1588 = vsel %vm1041, %v1247, 0
      %v1591 = vsel %vm1041, %v1252, 0
      %v1594 = vsel %vm1041, %v1257, 0
      %1596 = vmatprep.subr.mxu0 0.0
      %1597 = vmatpush1.msra.mxu0 0.0
      %1598 = vmatprep.subr.mxu0 0.0
      %1599 = vmatpush1.msra.mxu0 0.0
      %1600 = vmatprep.subr.mxu0 0.0
      %1601 = vmatpush1.msra.mxu0 0.0
      %1602 = vmatprep.subr.mxu0 0.0
      %1603 = vmatpush1.msra.mxu0 0.0
      %1604 = vmatprep.subr.mxu0 0.0
      %1605 = vmatpush1.msra.mxu0 0.0
      %1606 = vmatprep.subr.mxu0 0.0
      %1607 = vmatpush1.msra.mxu0 0.0
      %1608 = vmatprep.subr.mxu0 0.0
      %1609 = vmatpush1.msra.mxu0 0.0
      %1610 = vmatprep.subr.mxu0 0.0
      %1611 = vmatpush1.msra.mxu0 0.0
      %1612 = vmatprep.subr.mxu0 0.0
      %1613 = vmatpush1.msra.mxu0 0.0
      %1614 = vmatprep.subr.mxu0 0.0
      %1615 = vmatpush1.msra.mxu0 0.0
      %1616 = vmatprep.subr.mxu0 0.0
      %1617 = vmatpush1.msra.mxu0 0.0
      %1618 = vmatprep.subr.mxu0 0.0
      %1619 = vmatpush1.msra.mxu0 0.0
      %1620 = vmatprep.subr.mxu0 0.0
      %1621 = vmatpush1.msra.mxu0 0.0
      %1622 = vmatprep.subr.mxu0 0.0
      %1623 = vmatpush1.msra.mxu0 0.0
      %1624 = vmatprep.subr.mxu0 0.0
      %1625 = vmatpush1.msra.mxu0 %v1025
      %1626 = vmatprep.subr.mxu0 0.0
      %1627 = vmatpush1.msra.mxu0 %v1024
      %1628 = vmatprep.subr.mxu0 0.0
      %1629 = vmatpush2.msra.mxu0 0.0
      %1630 = vmatprep.subr.mxu0 0.0
      %1631 = vmatpush2.msra.mxu0 0.0
      %1632 = vmatprep.subr.mxu0 0.0
      %1633 = vmatpush2.msra.mxu0 0.0
      %1634 = vmatprep.subr.mxu0 0.0
      %1635 = vmatpush2.msra.mxu0 0.0
      %1636 = vmatprep.subr.mxu0 0.0
      %1637 = vmatpush2.msra.mxu0 0.0
      %1638 = vmatprep.subr.mxu0 0.0
      %1639 = vmatpush2.msra.mxu0 0.0
      %1640 = vmatprep.subr.mxu0 0.0
      %1641 = vmatpush2.msra.mxu0 0.0
      %1642 = vmatprep.subr.mxu0 0.0
      %1643 = vmatpush2.msra.mxu0 0.0
      %1644 = vmatprep.subr.mxu0 0.0
      %1645 = vmatpush2.msra.mxu0 0.0
      %1646 = vmatprep.subr.mxu0 0.0
      %1647 = vmatpush2.msra.mxu0 0.0
      %1648 = vmatprep.subr.mxu0 0.0
      %1649 = vmatpush2.msra.mxu0 0.0
      %1650 = vmatprep.subr.mxu0 0.0
      %1651 = vmatpush2.msra.mxu0 0.0
      %1652 = vmatprep.subr.mxu0 0.0
      %1653 = vmatpush2.msra.mxu0 0.0
      %1654 = vmatprep.subr.mxu0 0.0
      %1655 = vmatpush2.msra.mxu0 0.0
      %1656 = vmatprep.subr.mxu0 0.0
      %1657 = vmatpush2.msra.mxu0 0.0
      %1658 = vmatprep.subr.mxu0 0.0
      %1659 = vmatpush2.msra.mxu0 0.0
      %1660 = vmatprep.mubr.f32.mxu0 0.0
      %1661 = vmatmul.mubr.f32.gmra.mxu0 %v1588
      %v1662 = vpop.f32.mrf.mxu0
      %v1663 = vadd.f32 %v1574, %v1662
      %v1664 = vpop.f32.mrf.mxu0
      %1665 = vmatprep.mubr.f32.mxu0 0.0
      %1666 = vmatmul.mubr.f32.gmra.mxu0 %v1591
      %v1667 = vpop.f32.mrf.mxu0
      %v1668 = vadd.f32 %v1579, %v1667
      %v1669 = vpop.f32.mrf.mxu0
      %1670 = vmatprep.mubr.f32.mxu0 0.0
      %1671 = vmatmul.mubr.f32.gmra.mxu0 %v1594
      %v1672 = vpop.f32.mrf.mxu0
      %v1673 = vadd.f32 %v1584, %v1672
      %v1674 = vpop.f32.mrf.mxu0
      %1675 = vdwg.mxu0
      %1676 = vrot.lane.b32.xlu0 %v986, 96
      %v1677 = vpop.permute.xlu0 %1676
      %1678 = vrot.lane.b32.xlu0 %v987, 96
      %v1679 = vpop.permute.xlu0 %1678
      %1680 = vrot.lane.b32.xlu0 %v988, 96
      %v1681 = vpop.permute.xlu0 %1680
      %1682 = vrot.lane.b32.xlu0 %v1019, 32
      %v1683 = vpop.permute.xlu0 %1682
      %1684 = vrot.lane.b32.xlu0 %v1020, 32
      %v1685 = vpop.permute.xlu0 %1684
      %1686 = vrot.lane.b32.xlu0 %v1021, 32
      %v1687 = vpop.permute.xlu0 %1686
      %v1688 = vsel %vm1041, %v1677, 0
      %v1690 = vsel %vm1041, %v1679, 0
      %v1692 = vsel %vm1041, %v1681, 0
      %v1694 = vsel %vm1041, %v1683, 0
      %v1696 = vsel %vm1041, %v1685, 0
      %v1698 = vsel %vm1041, %v1687, 0
      %1700 = vmatprep.subr.mxu0 0.0
      %1701 = vmatpush1.xpose.msra.mxu0 0.0
      %1702 = vmatprep.subr.mxu0 0.0
      %1703 = vmatpush1.xpose.msra.mxu0 0.0
      %1704 = vmatprep.subr.mxu0 0.0
      %1705 = vmatpush1.xpose.msra.mxu0 0.0
      %1706 = vmatprep.subr.mxu0 0.0
      %1707 = vmatpush1.xpose.msra.mxu0 0.0
      %1708 = vmatprep.subr.mxu0 0.0
      %1709 = vmatpush1.xpose.msra.mxu0 0.0
      %1710 = vmatprep.subr.mxu0 0.0
      %1711 = vmatpush1.xpose.msra.mxu0 0.0
      %1712 = vmatprep.subr.mxu0 0.0
      %1713 = vmatpush1.xpose.msra.mxu0 0.0
      %1714 = vmatprep.subr.mxu0 0.0
      %1715 = vmatpush1.xpose.msra.mxu0 0.0
      %1716 = vmatprep.subr.mxu0 0.0
      %1717 = vmatpush1.xpose.msra.mxu0 0.0
      %1718 = vmatprep.subr.mxu0 0.0
      %1719 = vmatpush1.xpose.msra.mxu0 0.0
      %1720 = vmatprep.subr.mxu0 0.0
      %1721 = vmatpush1.xpose.msra.mxu0 0.0
      %1722 = vmatprep.subr.mxu0 0.0
      %1723 = vmatpush1.xpose.msra.mxu0 0.0
      %1724 = vmatprep.subr.mxu0 0.0
      %1725 = vmatpush1.xpose.msra.mxu0 0.0
      %1726 = vmatprep.subr.mxu0 0.0
      %1727 = vmatpush1.xpose.msra.mxu0 %v1698
      %1728 = vmatprep.subr.mxu0 0.0
      %1729 = vmatpush1.xpose.msra.mxu0 %v1696
      %1730 = vmatprep.subr.mxu0 0.0
      %1731 = vmatpush1.xpose.msra.mxu0 %v1694
      %1732 = vmatprep.subr.mxu0 0.0
      %1733 = vmatpush2.xpose.msra.mxu0 0.0
      %1734 = vmatprep.subr.mxu0 0.0
      %1735 = vmatpush2.xpose.msra.mxu0 0.0
      %1736 = vmatprep.subr.mxu0 0.0
      %1737 = vmatpush2.xpose.msra.mxu0 0.0
      %1738 = vmatprep.subr.mxu0 0.0
      %1739 = vmatpush2.xpose.msra.mxu0 0.0
      %1740 = vmatprep.subr.mxu0 0.0
      %1741 = vmatpush2.xpose.msra.mxu0 0.0
      %1742 = vmatprep.subr.mxu0 0.0
      %1743 = vmatpush2.xpose.msra.mxu0 0.0
      %1744 = vmatprep.subr.mxu0 0.0
      %1745 = vmatpush2.xpose.msra.mxu0 0.0
      %1746 = vmatprep.subr.mxu0 0.0
      %1747 = vmatpush2.xpose.msra.mxu0 0.0
      %1748 = vmatprep.subr.mxu0 0.0
      %1749 = vmatpush2.xpose.msra.mxu0 0.0
      %1750 = vmatprep.subr.mxu0 0.0
      %1751 = vmatpush2.xpose.msra.mxu0 0.0
      %1752 = vmatprep.subr.mxu0 0.0
      %1753 = vmatpush2.xpose.msra.mxu0 0.0
      %1754 = vmatprep.subr.mxu0 0.0
      %1755 = vmatpush2.xpose.msra.mxu0 0.0
      %1756 = vmatprep.subr.mxu0 0.0
      %1757 = vmatpush2.xpose.msra.mxu0 0.0
      %1758 = vmatprep.subr.mxu0 0.0
      %1759 = vmatpush2.xpose.msra.mxu0 0.0
      %1760 = vmatprep.subr.mxu0 0.0
      %1761 = vmatpush2.xpose.msra.mxu0 0.0
      %1762 = vmatprep.subr.mxu0 0.0
      %1763 = vmatpush2.xpose.msra.mxu0 0.0
      %1764 = vmatprep.mubr.f32.mxu0 0.0
      %1765 = vmatmul.mubr.f32.gmra.mxu0 %v1688
      %v1766 = vpop.f32.mrf.mxu0
      %v1767 = vadd.f32 0.0, %v1766
      %v1768 = vpop.f32.mrf.mxu0
      %1769 = vmatprep.mubr.f32.mxu0 0.0
      %1770 = vmatmul.mubr.f32.gmra.mxu0 %v1690
      %v1771 = vpop.f32.mrf.mxu0
      %v1772 = vadd.f32 0.0, %v1771
      %v1773 = vpop.f32.mrf.mxu0
      %1774 = vmatprep.mubr.f32.mxu0 0.0
      %1775 = vmatmul.mubr.f32.gmra.mxu0 %v1692
      %v1776 = vpop.f32.mrf.mxu0
      %v1777 = vadd.f32 0.0, %v1776
      %v1778 = vpop.f32.mrf.mxu0
      %1779 = vdwg.mxu0
      %v1780 = vsel %vm1137, %v1767, -inf
      %1781 = vmax.xlane.f32.xlu0 %v1780
      %v1782 = vpop.xlane.xlu0 %1781
      %v1783 = vsel %vm1137, %v1772, -inf
      %1784 = vmax.xlane.f32.xlu0 %v1783
      %v1785 = vpop.xlane.xlu0 %1784
      %v1786 = vsel %vm1137, %v1777, -inf
      %1787 = vmax.xlane.f32.xlu0 %v1786
      %v1788 = vpop.xlane.xlu0 %1787
      %v1789 = vsub.f32 %v1767, %v1782
      %v1790 = vsub.f32 %v1772, %v1785
      %v1791 = vsub.f32 %v1777, %v1788
      %v1792 = vmul.f32 %v1789, 1.442695
      %v1793 = vpow.pop %v1792
      %v1794 = vmul.f32 %v1790, 1.442695
      %v1795 = vpow.pop %v1794
      %v1796 = vmul.f32 %v1791, 1.442695
      %v1797 = vpow.pop %v1796
      %v1798 = vsel %vm1137, %v1793, 0.0
      %1799 = vadd.xlane.f32.xlu0 %v1798
      %v1800 = vpop.xlane.xlu0 %1799
      %v1801 = vsel %vm1137, %v1795, 0.0
      %1802 = vadd.xlane.f32.xlu0 %v1801
      %v1803 = vpop.xlane.xlu0 %1802
      %v1804 = vsel %vm1137, %v1797, 0.0
      %1805 = vadd.xlane.f32.xlu0 %v1804
      %v1806 = vpop.xlane.xlu0 %1805
      %v1807 = vrcp.pop %v1800
      %v1808 = vrcp.pop %v1803
      %v1809 = vrcp.pop %v1806
      %v1810 = vmul.f32 %v1793, %v1807
      %v1811 = vmul.f32 %v1795, %v1808
      %v1812 = vmul.f32 %v1797, %v1809
      %1813 = vrot.lane.b32.xlu0 %v862, 96
      %v1814 = vpop.permute.xlu0 %1813
      %1815 = vrot.lane.b32.xlu0 %v868, 96
      %v1816 = vpop.permute.xlu0 %1815
      %1817 = vrot.lane.b32.xlu0 %v874, 96
      %v1818 = vpop.permute.xlu0 %1817
      %v1823 = vsel %vm1137, %v1810, 0
      %v1826 = vsel %vm1137, %v1811, 0
      %v1829 = vsel %vm1137, %v1812, 0
      %1831 = vmatprep.subr.mxu0 0.0
      %1832 = vmatpush1.msra.mxu0 0.0
      %1833 = vmatprep.subr.mxu0 0.0
      %1834 = vmatpush1.msra.mxu0 0.0
      %1835 = vmatprep.subr.mxu0 0.0
      %1836 = vmatpush1.msra.mxu0 0.0
      %1837 = vmatprep.subr.mxu0 0.0
      %1838 = vmatpush1.msra.mxu0 0.0
      %1839 = vmatprep.subr.mxu0 0.0
      %1840 = vmatpush1.msra.mxu0 0.0
      %1841 = vmatprep.subr.mxu0 0.0
      %1842 = vmatpush1.msra.mxu0 0.0
      %1843 = vmatprep.subr.mxu0 0.0
      %1844 = vmatpush1.msra.mxu0 0.0
      %1845 = vmatprep.subr.mxu0 0.0
      %1846 = vmatpush1.msra.mxu0 0.0
      %1847 = vmatprep.subr.mxu0 0.0
      %1848 = vmatpush1.msra.mxu0 0.0
      %1849 = vmatprep.subr.mxu0 0.0
      %1850 = vmatpush1.msra.mxu0 0.0
      %1851 = vmatprep.subr.mxu0 0.0
      %1852 = vmatpush1.msra.mxu0 0.0
      %1853 = vmatprep.subr.mxu0 0.0
      %1854 = vmatpush1.msra.mxu0 0.0
      %1855 = vmatprep.subr.mxu0 0.0
      %1856 = vmatpush1.msra.mxu0 0.0
      %1857 = vmatprep.subr.mxu0 0.0
      %1858 = vmatpush1.msra.mxu0 %v1818
      %1859 = vmatprep.subr.mxu0 0.0
      %1860 = vmatpush1.msra.mxu0 %v1816
      %1861 = vmatprep.subr.mxu0 0.0
      %1862 = vmatpush1.msra.mxu0 %v1814
      %1863 = vmatprep.subr.mxu0 0.0
      %1864 = vmatpush2.msra.mxu0 0.0
      %1865 = vmatprep.subr.mxu0 0.0
      %1866 = vmatpush2.msra.mxu0 0.0
      %1867 = vmatprep.subr.mxu0 0.0
      %1868 = vmatpush2.msra.mxu0 0.0
      %1869 = vmatprep.subr.mxu0 0.0
      %1870 = vmatpush2.msra.mxu0 0.0
      %1871 = vmatprep.subr.mxu0 0.0
      %1872 = vmatpush2.msra.mxu0 0.0
      %1873 = vmatprep.subr.mxu0 0.0
      %1874 = vmatpush2.msra.mxu0 0.0
      %1875 = vmatprep.subr.mxu0 0.0
      %1876 = vmatpush2.msra.mxu0 0.0
      %1877 = vmatprep.subr.mxu0 0.0
      %1878 = vmatpush2.msra.mxu0 0.0
      %1879 = vmatprep.subr.mxu0 0.0
      %1880 = vmatpush2.msra.mxu0 0.0
      %1881 = vmatprep.subr.mxu0 0.0
      %1882 = vmatpush2.msra.mxu0 0.0
      %1883 = vmatprep.subr.mxu0 0.0
      %1884 = vmatpush2.msra.mxu0 0.0
      %1885 = vmatprep.subr.mxu0 0.0
      %1886 = vmatpush2.msra.mxu0 0.0
      %1887 = vmatprep.subr.mxu0 0.0
      %1888 = vmatpush2.msra.mxu0 0.0
      %1889 = vmatprep.subr.mxu0 0.0
      %1890 = vmatpush2.msra.mxu0 0.0
      %1891 = vmatprep.subr.mxu0 0.0
      %1892 = vmatpush2.msra.mxu0 0.0
      %1893 = vmatprep.subr.mxu0 0.0
      %1894 = vmatpush2.msra.mxu0 0.0
      %1895 = vmatprep.mubr.f32.mxu0 0.0
      %1896 = vmatmul.mubr.f32.gmra.mxu0 %v1823
      %v1897 = vpop.f32.mrf.mxu0
      %v1898 = vadd.f32 0.0, %v1897
      %v1899 = vpop.f32.mrf.mxu0
      %1900 = vmatprep.mubr.f32.mxu0 0.0
      %1901 = vmatmul.mubr.f32.gmra.mxu0 %v1826
      %v1902 = vpop.f32.mrf.mxu0
      %v1903 = vadd.f32 0.0, %v1902
      %v1904 = vpop.f32.mrf.mxu0
      %1905 = vmatprep.mubr.f32.mxu0 0.0
      %1906 = vmatmul.mubr.f32.gmra.mxu0 %v1829
      %v1907 = vpop.f32.mrf.mxu0
      %v1908 = vadd.f32 0.0, %v1907
      %v1909 = vpop.f32.mrf.mxu0
      %1910 = vdwg.mxu0
      %v1912 = vsel %vm1041, %v1898, 0
      %v1915 = vsel %vm1041, %v1903, 0
      %v1918 = vsel %vm1041, %v1908, 0
      %1920 = vmatprep.subr.mxu0 0.0
      %1921 = vmatpush1.msra.mxu0 0.0
      %1922 = vmatprep.subr.mxu0 0.0
      %1923 = vmatpush1.msra.mxu0 0.0
      %1924 = vmatprep.subr.mxu0 0.0
      %1925 = vmatpush1.msra.mxu0 0.0
      %1926 = vmatprep.subr.mxu0 0.0
      %1927 = vmatpush1.msra.mxu0 0.0
      %1928 = vmatprep.subr.mxu0 0.0
      %1929 = vmatpush1.msra.mxu0 0.0
      %1930 = vmatprep.subr.mxu0 0.0
      %1931 = vmatpush1.msra.mxu0 0.0
      %1932 = vmatprep.subr.mxu0 0.0
      %1933 = vmatpush1.msra.mxu0 0.0
      %1934 = vmatprep.subr.mxu0 0.0
      %1935 = vmatpush1.msra.mxu0 0.0
      %1936 = vmatprep.subr.mxu0 0.0
      %1937 = vmatpush1.msra.mxu0 0.0
      %1938 = vmatprep.subr.mxu0 0.0
      %1939 = vmatpush1.msra.mxu0 0.0
      %1940 = vmatprep.subr.mxu0 0.0
      %1941 = vmatpush1.msra.mxu0 0.0
      %1942 = vmatprep.subr.mxu0 0.0
      %1943 = vmatpush1.msra.mxu0 0.0
      %1944 = vmatprep.subr.mxu0 0.0
      %1945 = vmatpush1.msra.mxu0 0.0
      %1946 = vmatprep.subr.mxu0 0.0
      %1947 = vmatpush1.msra.mxu0 0.0
      %1948 = vmatprep.subr.mxu0 0.0
      %1949 = vmatpush1.msra.mxu0 %v1029
      %1950 = vmatprep.subr.mxu0 0.0
      %1951 = vmatpush1.msra.mxu0 %v1028
      %1952 = vmatprep.subr.mxu0 0.0
      %1953 = vmatpush2.msra.mxu0 0.0
      %1954 = vmatprep.subr.mxu0 0.0
      %1955 = vmatpush2.msra.mxu0 0.0
      %1956 = vmatprep.subr.mxu0 0.0
      %1957 = vmatpush2.msra.mxu0 0.0
      %1958 = vmatprep.subr.mxu0 0.0
      %1959 = vmatpush2.msra.mxu0 0.0
      %1960 = vmatprep.subr.mxu0 0.0
      %1961 = vmatpush2.msra.mxu0 0.0
      %1962 = vmatprep.subr.mxu0 0.0
      %1963 = vmatpush2.msra.mxu0 0.0
      %1964 = vmatprep.subr.mxu0 0.0
      %1965 = vmatpush2.msra.mxu0 0.0
      %1966 = vmatprep.subr.mxu0 0.0
      %1967 = vmatpush2.msra.mxu0 0.0
      %1968 = vmatprep.subr.mxu0 0.0
      %1969 = vmatpush2.msra.mxu0 0.0
      %1970 = vmatprep.subr.mxu0 0.0
      %1971 = vmatpush2.msra.mxu0 0.0
      %1972 = vmatprep.subr.mxu0 0.0
      %1973 = vmatpush2.msra.mxu0 0.0
      %1974 = vmatprep.subr.mxu0 0.0
      %1975 = vmatpush2.msra.mxu0 0.0
      %1976 = vmatprep.subr.mxu0 0.0
      %1977 = vmatpush2.msra.mxu0 0.0
      %1978 = vmatprep.subr.mxu0 0.0
      %1979 = vmatpush2.msra.mxu0 0.0
      %1980 = vmatprep.subr.mxu0 0.0
      %1981 = vmatpush2.msra.mxu0 0.0
      %1982 = vmatprep.subr.mxu0 0.0
      %1983 = vmatpush2.msra.mxu0 0.0
      %1984 = vmatprep.mubr.f32.mxu0 0.0
      %1985 = vmatmul.mubr.f32.gmra.mxu0 %v1912
      %v1986 = vpop.f32.mrf.mxu0
      %v1987 = vadd.f32 0.0, %v1986
      %v1988 = vpop.f32.mrf.mxu0
      %1989 = vmatprep.mubr.f32.mxu0 0.0
      %1990 = vmatmul.mubr.f32.gmra.mxu0 %v1915
      %v1991 = vpop.f32.mrf.mxu0
      %v1992 = vadd.f32 0.0, %v1991
      %v1993 = vpop.f32.mrf.mxu0
      %1994 = vmatprep.mubr.f32.mxu0 0.0
      %1995 = vmatmul.mubr.f32.gmra.mxu0 %v1918
      %v1996 = vpop.f32.mrf.mxu0
      %v1997 = vadd.f32 0.0, %v1996
      %v1998 = vpop.f32.mrf.mxu0
      %1999 = vdwg.mxu0
      %v2000 = vadd.f32 %v1663, %v1987
      %v2001 = vadd.f32 %v1668, %v1992
      %v2002 = vadd.f32 %v1673, %v1997
      %2003 = vrot.lane.b32.xlu0 %v986, 80
      %v2004 = vpop.permute.xlu0 %2003
      %2005 = vrot.lane.b32.xlu0 %v987, 80
      %v2006 = vpop.permute.xlu0 %2005
      %2007 = vrot.lane.b32.xlu0 %v988, 80
      %v2008 = vpop.permute.xlu0 %2007
      %2009 = vrot.lane.b32.xlu0 %v1019, 16
      %v2010 = vpop.permute.xlu0 %2009
      %2011 = vrot.lane.b32.xlu0 %v1020, 16
      %v2012 = vpop.permute.xlu0 %2011
      %2013 = vrot.lane.b32.xlu0 %v1021, 16
      %v2014 = vpop.permute.xlu0 %2013
      %v2015 = vsel %vm1041, %v2004, 0
      %v2017 = vsel %vm1041, %v2006, 0
      %v2019 = vsel %vm1041, %v2008, 0
      %v2021 = vsel %vm1041, %v2010, 0
      %v2023 = vsel %vm1041, %v2012, 0
      %v2025 = vsel %vm1041, %v2014, 0
      %2027 = vmatprep.subr.mxu0 0.0
      %2028 = vmatpush1.xpose.msra.mxu0 0.0
      %2029 = vmatprep.subr.mxu0 0.0
      %2030 = vmatpush1.xpose.msra.mxu0 0.0
      %2031 = vmatprep.subr.mxu0 0.0
      %2032 = vmatpush1.xpose.msra.mxu0 0.0
      %2033 = vmatprep.subr.mxu0 0.0
      %2034 = vmatpush1.xpose.msra.mxu0 0.0
      %2035 = vmatprep.subr.mxu0 0.0
      %2036 = vmatpush1.xpose.msra.mxu0 0.0
      %2037 = vmatprep.subr.mxu0 0.0
      %2038 = vmatpush1.xpose.msra.mxu0 0.0
      %2039 = vmatprep.subr.mxu0 0.0
      %2040 = vmatpush1.xpose.msra.mxu0 0.0
      %2041 = vmatprep.subr.mxu0 0.0
      %2042 = vmatpush1.xpose.msra.mxu0 0.0
      %2043 = vmatprep.subr.mxu0 0.0
      %2044 = vmatpush1.xpose.msra.mxu0 0.0
      %2045 = vmatprep.subr.mxu0 0.0
      %2046 = vmatpush1.xpose.msra.mxu0 0.0
      %2047 = vmatprep.subr.mxu0 0.0
      %2048 = vmatpush1.xpose.msra.mxu0 0.0
      %2049 = vmatprep.subr.mxu0 0.0
      %2050 = vmatpush1.xpose.msra.mxu0 0.0
      %2051 = vmatprep.subr.mxu0 0.0
      %2052 = vmatpush1.xpose.msra.mxu0 0.0
      %2053 = vmatprep.subr.mxu0 0.0
      %2054 = vmatpush1.xpose.msra.mxu0 %v2025
      %2055 = vmatprep.subr.mxu0 0.0
      %2056 = vmatpush1.xpose.msra.mxu0 %v2023
      %2057 = vmatprep.subr.mxu0 0.0
      %2058 = vmatpush1.xpose.msra.mxu0 %v2021
      %2059 = vmatprep.subr.mxu0 0.0
      %2060 = vmatpush2.xpose.msra.mxu0 0.0
      %2061 = vmatprep.subr.mxu0 0.0
      %2062 = vmatpush2.xpose.msra.mxu0 0.0
      %2063 = vmatprep.subr.mxu0 0.0
      %2064 = vmatpush2.xpose.msra.mxu0 0.0
      %2065 = vmatprep.subr.mxu0 0.0
      %2066 = vmatpush2.xpose.msra.mxu0 0.0
      %2067 = vmatprep.subr.mxu0 0.0
      %2068 = vmatpush2.xpose.msra.mxu0 0.0
      %2069 = vmatprep.subr.mxu0 0.0
      %2070 = vmatpush2.xpose.msra.mxu0 0.0
      %2071 = vmatprep.subr.mxu0 0.0
      %2072 = vmatpush2.xpose.msra.mxu0 0.0
      %2073 = vmatprep.subr.mxu0 0.0
      %2074 = vmatpush2.xpose.msra.mxu0 0.0
      %2075 = vmatprep.subr.mxu0 0.0
      %2076 = vmatpush2.xpose.msra.mxu0 0.0
      %2077 = vmatprep.subr.mxu0 0.0
      %2078 = vmatpush2.xpose.msra.mxu0 0.0
      %2079 = vmatprep.subr.mxu0 0.0
      %2080 = vmatpush2.xpose.msra.mxu0 0.0
      %2081 = vmatprep.subr.mxu0 0.0
      %2082 = vmatpush2.xpose.msra.mxu0 0.0
      %2083 = vmatprep.subr.mxu0 0.0
      %2084 = vmatpush2.xpose.msra.mxu0 0.0
      %2085 = vmatprep.subr.mxu0 0.0
      %2086 = vmatpush2.xpose.msra.mxu0 0.0
      %2087 = vmatprep.subr.mxu0 0.0
      %2088 = vmatpush2.xpose.msra.mxu0 0.0
      %2089 = vmatprep.subr.mxu0 0.0
      %2090 = vmatpush2.xpose.msra.mxu0 0.0
      %2091 = vmatprep.mubr.f32.mxu0 0.0
      %2092 = vmatmul.mubr.f32.gmra.mxu0 %v2015
      %v2093 = vpop.f32.mrf.mxu0
      %v2094 = vadd.f32 0.0, %v2093
      %v2095 = vpop.f32.mrf.mxu0
      %2096 = vmatprep.mubr.f32.mxu0 0.0
      %2097 = vmatmul.mubr.f32.gmra.mxu0 %v2017
      %v2098 = vpop.f32.mrf.mxu0
      %v2099 = vadd.f32 0.0, %v2098
      %v2100 = vpop.f32.mrf.mxu0
      %2101 = vmatprep.mubr.f32.mxu0 0.0
      %2102 = vmatmul.mubr.f32.gmra.mxu0 %v2019
      %v2103 = vpop.f32.mrf.mxu0
      %v2104 = vadd.f32 0.0, %v2103
      %v2105 = vpop.f32.mrf.mxu0
      %2106 = vdwg.mxu0
      %v2107 = vsel %vm1137, %v2094, -inf
      %2108 = vmax.xlane.f32.xlu0 %v2107
      %v2109 = vpop.xlane.xlu0 %2108
      %v2110 = vsel %vm1137, %v2099, -inf
      %2111 = vmax.xlane.f32.xlu0 %v2110
      %v2112 = vpop.xlane.xlu0 %2111
      %v2113 = vsel %vm1137, %v2104, -inf
      %2114 = vmax.xlane.f32.xlu0 %v2113
      %v2115 = vpop.xlane.xlu0 %2114
      %v2116 = vsub.f32 %v2094, %v2109
      %v2117 = vsub.f32 %v2099, %v2112
      %v2118 = vsub.f32 %v2104, %v2115
      %v2119 = vmul.f32 %v2116, 1.442695
      %v2120 = vpow.pop %v2119
      %v2121 = vmul.f32 %v2117, 1.442695
      %v2122 = vpow.pop %v2121
      %v2123 = vmul.f32 %v2118, 1.442695
      %v2124 = vpow.pop %v2123
      %v2125 = vsel %vm1137, %v2120, 0.0
      %2126 = vadd.xlane.f32.xlu0 %v2125
      %v2127 = vpop.xlane.xlu0 %2126
      %v2128 = vsel %vm1137, %v2122, 0.0
      %2129 = vadd.xlane.f32.xlu0 %v2128
      %v2130 = vpop.xlane.xlu0 %2129
      %v2131 = vsel %vm1137, %v2124, 0.0
      %2132 = vadd.xlane.f32.xlu0 %v2131
      %v2133 = vpop.xlane.xlu0 %2132
      %v2134 = vrcp.pop %v2127
      %v2135 = vrcp.pop %v2130
      %v2136 = vrcp.pop %v2133
      %v2137 = vmul.f32 %v2120, %v2134
      %v2138 = vmul.f32 %v2122, %v2135
      %v2139 = vmul.f32 %v2124, %v2136
      %2140 = vrot.lane.b32.xlu0 %v862, 80
      %v2141 = vpop.permute.xlu0 %2140
      %2142 = vrot.lane.b32.xlu0 %v868, 80
      %v2143 = vpop.permute.xlu0 %2142
      %2144 = vrot.lane.b32.xlu0 %v874, 80
      %v2145 = vpop.permute.xlu0 %2144
      %v2150 = vsel %vm1137, %v2137, 0
      %v2153 = vsel %vm1137, %v2138, 0
      %v2156 = vsel %vm1137, %v2139, 0
      %2158 = vmatprep.subr.mxu0 0.0
      %2159 = vmatpush1.msra.mxu0 0.0
      %2160 = vmatprep.subr.mxu0 0.0
      %2161 = vmatpush1.msra.mxu0 0.0
      %2162 = vmatprep.subr.mxu0 0.0
      %2163 = vmatpush1.msra.mxu0 0.0
      %2164 = vmatprep.subr.mxu0 0.0
      %2165 = vmatpush1.msra.mxu0 0.0
      %2166 = vmatprep.subr.mxu0 0.0
      %2167 = vmatpush1.msra.mxu0 0.0
      %2168 = vmatprep.subr.mxu0 0.0
      %2169 = vmatpush1.msra.mxu0 0.0
      %2170 = vmatprep.subr.mxu0 0.0
      %2171 = vmatpush1.msra.mxu0 0.0
      %2172 = vmatprep.subr.mxu0 0.0
      %2173 = vmatpush1.msra.mxu0 0.0
      %2174 = vmatprep.subr.mxu0 0.0
      %2175 = vmatpush1.msra.mxu0 0.0
      %2176 = vmatprep.subr.mxu0 0.0
      %2177 = vmatpush1.msra.mxu0 0.0
      %2178 = vmatprep.subr.mxu0 0.0
      %2179 = vmatpush1.msra.mxu0 0.0
      %2180 = vmatprep.subr.mxu0 0.0
      %2181 = vmatpush1.msra.mxu0 0.0
      %2182 = vmatprep.subr.mxu0 0.0
      %2183 = vmatpush1.msra.mxu0 0.0
      %2184 = vmatprep.subr.mxu0 0.0
      %2185 = vmatpush1.msra.mxu0 %v2145
      %2186 = vmatprep.subr.mxu0 0.0
      %2187 = vmatpush1.msra.mxu0 %v2143
      %2188 = vmatprep.subr.mxu0 0.0
      %2189 = vmatpush1.msra.mxu0 %v2141
      %2190 = vmatprep.subr.mxu0 0.0
      %2191 = vmatpush2.msra.mxu0 0.0
      %2192 = vmatprep.subr.mxu0 0.0
      %2193 = vmatpush2.msra.mxu0 0.0
      %2194 = vmatprep.subr.mxu0 0.0
      %2195 = vmatpush2.msra.mxu0 0.0
      %2196 = vmatprep.subr.mxu0 0.0
      %2197 = vmatpush2.msra.mxu0 0.0
      %2198 = vmatprep.subr.mxu0 0.0
      %2199 = vmatpush2.msra.mxu0 0.0
      %2200 = vmatprep.subr.mxu0 0.0
      %2201 = vmatpush2.msra.mxu0 0.0
      %2202 = vmatprep.subr.mxu0 0.0
      %2203 = vmatpush2.msra.mxu0 0.0
      %2204 = vmatprep.subr.mxu0 0.0
      %2205 = vmatpush2.msra.mxu0 0.0
      %2206 = vmatprep.subr.mxu0 0.0
      %2207 = vmatpush2.msra.mxu0 0.0
      %2208 = vmatprep.subr.mxu0 0.0
      %2209 = vmatpush2.msra.mxu0 0.0
      %2210 = vmatprep.subr.mxu0 0.0
      %2211 = vmatpush2.msra.mxu0 0.0
      %2212 = vmatprep.subr.mxu0 0.0
      %2213 = vmatpush2.msra.mxu0 0.0
      %2214 = vmatprep.subr.mxu0 0.0
      %2215 = vmatpush2.msra.mxu0 0.0
      %2216 = vmatprep.subr.mxu0 0.0
      %2217 = vmatpush2.msra.mxu0 0.0
      %2218 = vmatprep.subr.mxu0 0.0
      %2219 = vmatpush2.msra.mxu0 0.0
      %2220 = vmatprep.subr.mxu0 0.0
      %2221 = vmatpush2.msra.mxu0 0.0
      %2222 = vmatprep.mubr.f32.mxu0 0.0
      %2223 = vmatmul.mubr.f32.gmra.mxu0 %v2150
      %v2224 = vpop.f32.mrf.mxu0
      %v2225 = vadd.f32 0.0, %v2224
      %v2226 = vpop.f32.mrf.mxu0
      %2227 = vmatprep.mubr.f32.mxu0 0.0
      %2228 = vmatmul.mubr.f32.gmra.mxu0 %v2153
      %v2229 = vpop.f32.mrf.mxu0
      %v2230 = vadd.f32 0.0, %v2229
      %v2231 = vpop.f32.mrf.mxu0
      %2232 = vmatprep.mubr.f32.mxu0 0.0
      %2233 = vmatmul.mubr.f32.gmra.mxu0 %v2156
      %v2234 = vpop.f32.mrf.mxu0
      %v2235 = vadd.f32 0.0, %v2234
      %v2236 = vpop.f32.mrf.mxu0
      %2237 = vdwg.mxu0
      %v2239 = vsel %vm1041, %v2225, 0
      %v2242 = vsel %vm1041, %v2230, 0
      %v2245 = vsel %vm1041, %v2235, 0
      %2247 = vmatprep.subr.mxu0 0.0
      %2248 = vmatpush1.msra.mxu0 0.0
      %2249 = vmatprep.subr.mxu0 0.0
      %2250 = vmatpush1.msra.mxu0 0.0
      %2251 = vmatprep.subr.mxu0 0.0
      %2252 = vmatpush1.msra.mxu0 0.0
      %2253 = vmatprep.subr.mxu0 0.0
      %2254 = vmatpush1.msra.mxu0 0.0
      %2255 = vmatprep.subr.mxu0 0.0
      %2256 = vmatpush1.msra.mxu0 0.0
      %2257 = vmatprep.subr.mxu0 0.0
      %2258 = vmatpush1.msra.mxu0 0.0
      %2259 = vmatprep.subr.mxu0 0.0
      %2260 = vmatpush1.msra.mxu0 0.0
      %2261 = vmatprep.subr.mxu0 0.0
      %2262 = vmatpush1.msra.mxu0 0.0
      %2263 = vmatprep.subr.mxu0 0.0
      %2264 = vmatpush1.msra.mxu0 0.0
      %2265 = vmatprep.subr.mxu0 0.0
      %2266 = vmatpush1.msra.mxu0 0.0
      %2267 = vmatprep.subr.mxu0 0.0
      %2268 = vmatpush1.msra.mxu0 0.0
      %2269 = vmatprep.subr.mxu0 0.0
      %2270 = vmatpush1.msra.mxu0 0.0
      %2271 = vmatprep.subr.mxu0 0.0
      %2272 = vmatpush1.msra.mxu0 0.0
      %2273 = vmatprep.subr.mxu0 0.0
      %2274 = vmatpush1.msra.mxu0 0.0
      %2275 = vmatprep.subr.mxu0 0.0
      %2276 = vmatpush1.msra.mxu0 %v1031
      %2277 = vmatprep.subr.mxu0 0.0
      %2278 = vmatpush1.msra.mxu0 %v1030
      %2279 = vmatprep.subr.mxu0 0.0
      %2280 = vmatpush2.msra.mxu0 0.0
      %2281 = vmatprep.subr.mxu0 0.0
      %2282 = vmatpush2.msra.mxu0 0.0
      %2283 = vmatprep.subr.mxu0 0.0
      %2284 = vmatpush2.msra.mxu0 0.0
      %2285 = vmatprep.subr.mxu0 0.0
      %2286 = vmatpush2.msra.mxu0 0.0
      %2287 = vmatprep.subr.mxu0 0.0
      %2288 = vmatpush2.msra.mxu0 0.0
      %2289 = vmatprep.subr.mxu0 0.0
      %2290 = vmatpush2.msra.mxu0 0.0
      %2291 = vmatprep.subr.mxu0 0.0
      %2292 = vmatpush2.msra.mxu0 0.0
      %2293 = vmatprep.subr.mxu0 0.0
      %2294 = vmatpush2.msra.mxu0 0.0
      %2295 = vmatprep.subr.mxu0 0.0
      %2296 = vmatpush2.msra.mxu0 0.0
      %2297 = vmatprep.subr.mxu0 0.0
      %2298 = vmatpush2.msra.mxu0 0.0
      %2299 = vmatprep.subr.mxu0 0.0
      %2300 = vmatpush2.msra.mxu0 0.0
      %2301 = vmatprep.subr.mxu0 0.0
      %2302 = vmatpush2.msra.mxu0 0.0
      %2303 = vmatprep.subr.mxu0 0.0
      %2304 = vmatpush2.msra.mxu0 0.0
      %2305 = vmatprep.subr.mxu0 0.0
      %2306 = vmatpush2.msra.mxu0 0.0
      %2307 = vmatprep.subr.mxu0 0.0
      %2308 = vmatpush2.msra.mxu0 0.0
      %2309 = vmatprep.subr.mxu0 0.0
      %2310 = vmatpush2.msra.mxu0 0.0
      %2311 = vmatprep.mubr.f32.mxu0 0.0
      %2312 = vmatmul.mubr.f32.gmra.mxu0 %v2239
      %v2313 = vpop.f32.mrf.mxu0
      %v2314 = vadd.f32 0.0, %v2313
      %v2315 = vpop.f32.mrf.mxu0
      %2316 = vmatprep.mubr.f32.mxu0 0.0
      %2317 = vmatmul.mubr.f32.gmra.mxu0 %v2242
      %v2318 = vpop.f32.mrf.mxu0
      %v2319 = vadd.f32 0.0, %v2318
      %v2320 = vpop.f32.mrf.mxu0
      %2321 = vmatprep.mubr.f32.mxu0 0.0
      %2322 = vmatmul.mubr.f32.gmra.mxu0 %v2245
      %v2323 = vpop.f32.mrf.mxu0
      %v2324 = vadd.f32 0.0, %v2323
      %v2325 = vpop.f32.mrf.mxu0
      %2326 = vdwg.mxu0
      %v2327 = vadd.f32 %v2000, %v2314
      %v2328 = vadd.f32 %v2001, %v2319
      %v2329 = vadd.f32 %v2002, %v2324
      %v2330 = vadd.f32 %v666, %v2327
      %v2331 = vadd.f32 %v667, %v2328
      %v2332 = vadd.f32 %v668, %v2329
      %s2333 = scalar_lea.vmem %s8, %s35
      %v2334 = vld [vmem:[%s2333] sm:$0x1]
      %v2336 = vlaneseq
      %v2337 = vshrl.u32 %v2336, 7
      %v2338 = vsub.s32 0, %v2337
      %v2339 = vrot.slane %v2334, %v2338
      %v2341 = vadd.f32 %v2330, %v2339
      %v2342 = vadd.f32 %v2331, %v2339
      %v2343 = vadd.f32 %v2332, %v2339
      %s2344 = scalar_lea.vmem %s9, %s35
      %v2345 = vld [vmem:[%s2344] sm:$0x1]
      %s2346 = scalar_lea.vmem %s10, %s35
      %v2347 = vld [vmem:[%s2346] sm:$0x1]
      %v2348 = vsel %vm679, %v2341, 0.0
      %2349 = vadd.xlane.f32.xlu0 %v2348
      %v2350 = vpop.xlane.xlu0 %2349
      %v2351 = vsel %vm679, %v2342, 0.0
      %2352 = vadd.xlane.f32.xlu0 %v2351
      %v2353 = vpop.xlane.xlu0 %2352
      %v2354 = vsel %vm679, %v2343, 0.0
      %2355 = vadd.xlane.f32.xlu0 %v2354
      %v2356 = vpop.xlane.xlu0 %2355
      %v2357 = vmul.f32 %v2350, %v689
      %v2358 = vmul.f32 %v2353, %v689
      %v2359 = vmul.f32 %v2356, %v689
      %v2360 = vsub.f32 %v2341, %v2357
      %v2361 = vsub.f32 %v2342, %v2358
      %v2362 = vsub.f32 %v2343, %v2359
      %v2363 = vmul.f32 %v2360, %v2360
      %v2364 = vmul.f32 %v2361, %v2361
      %v2365 = vmul.f32 %v2362, %v2362
      %v2366 = vsel %vm679, %v2363, 0.0
      %2367 = vadd.xlane.f32.xlu0 %v2366
      %v2368 = vpop.xlane.xlu0 %2367
      %v2369 = vsel %vm679, %v2364, 0.0
      %2370 = vadd.xlane.f32.xlu0 %v2369
      %v2371 = vpop.xlane.xlu0 %2370
      %v2372 = vsel %vm679, %v2365, 0.0
      %2373 = vadd.xlane.f32.xlu0 %v2372
      %v2374 = vpop.xlane.xlu0 %2373
      %v2375 = vmul.f32 %v2368, %v689
      %v2376 = vmul.f32 %v2371, %v689
      %v2377 = vmul.f32 %v2374, %v689
      %v2378 = vadd.f32 %v2375, 1e-06
      %v2379 = vadd.f32 %v2376, 1e-06
      %v2380 = vadd.f32 %v2377, 1e-06
      %v2381 = vrsqrt.pop %v2378
      %v2382 = vrsqrt.pop %v2379
      %v2383 = vrsqrt.pop %v2380
      %v2384 = vmul.f32 %v2360, %v2381
      %v2385 = vmul.f32 %v2361, %v2382
      %v2386 = vmul.f32 %v2362, %v2383
      %v2388 = vlaneseq
      %v2389 = vshrl.u32 %v2388, 7
      %v2390 = vsub.s32 0, %v2389
      %v2391 = vrot.slane %v2345, %v2390
      %v2393 = vmul.f32 %v2384, %v2391
      %v2394 = vmul.f32 %v2385, %v2391
      %v2395 = vmul.f32 %v2386, %v2391
      %v2397 = vlaneseq
      %v2398 = vshrl.u32 %v2397, 7
      %v2399 = vsub.s32 0, %v2398
      %v2400 = vrot.slane %v2347, %v2399
      %v2402 = vadd.f32 %v2393, %v2400
      %v2403 = vadd.f32 %v2394, %v2400
      %v2404 = vadd.f32 %v2395, %v2400
      %s2405 = smul.u32 %s35, 16
      %s2406 = smul.addr %s2405, 8
      %s2407 = scalar_lea.vmem %s11, %s2406
      %v2408 = vld [vmem:[%s2407] sm:$0xff]
      %v2409 = vld [vmem:[%s2407 + $0x8] sm:$0xff]
      %v2410 = vld [vmem:[%s2407 + $0x10] sm:$0xff]
      %v2411 = vld [vmem:[%s2407 + $0x18] sm:$0xff]
      %v2412 = vld [vmem:[%s2407 + $0x20] sm:$0xff]
      %v2413 = vld [vmem:[%s2407 + $0x28] sm:$0xff]
      %v2414 = vld [vmem:[%s2407 + $0x30] sm:$0xff]
      %v2415 = vld [vmem:[%s2407 + $0x38] sm:$0xff]
      %v2416 = vld [vmem:[%s2407 + $0x40] sm:$0xff]
      %v2417 = vld [vmem:[%s2407 + $0x48] sm:$0xff]
      %v2418 = vld [vmem:[%s2407 + $0x50] sm:$0xff]
      %v2419 = vld [vmem:[%s2407 + $0x58] sm:$0xff]
      %v2420 = vld [vmem:[%s2407 + $0x60] sm:$0xff]
      %v2421 = vld [vmem:[%s2407 + $0x68] sm:$0xff]
      %v2422 = vld [vmem:[%s2407 + $0x70] sm:$0xff]
      %v2423 = vld [vmem:[%s2407 + $0x78] sm:$0xff]
      %s2424 = smul.u32 %s35, 2
      %s2425 = scalar_lea.vmem %s12, %s2424
      %v2426 = vld [vmem:[%s2425] sm:$0x3]
      %v2428 = vlaneseq
      %v2429 = vshrl.u32 %v2428, 7
      %v2430 = vsub.s32 0, %v2429
      %v2431 = vrot.slane %v2426, %v2430
      %v2432 = vlaneseq
      %v2433 = vshrl.u32 %v2432, 7
      %v2434 = vsub.s32 1, %v2433
      %v2435 = vrot.slane %v2426, %v2434
      %v2439 = vsel %vm679, %v2402, 0
      %v2442 = vsel %vm679, %v2403, 0
      %v2445 = vsel %vm679, %v2404, 0
      %2447 = vmatprep.subr.mxu0 0.0
      %2448 = vmatpush1.msra.mxu0 0.0
      %2449 = vmatprep.subr.mxu0 0.0
      %2450 = vmatpush1.msra.mxu0 0.0
      %2451 = vmatprep.subr.mxu0 0.0
      %2452 = vmatpush1.msra.mxu0 0.0
      %2453 = vmatprep.subr.mxu0 0.0
      %2454 = vmatpush1.msra.mxu0 0.0
      %2455 = vmatprep.subr.mxu0 0.0
      %2456 = vmatpush1.msra.mxu0 0.0
      %2457 = vmatprep.subr.mxu0 0.0
      %2458 = vmatpush1.msra.mxu0 0.0
      %2459 = vmatprep.subr.mxu0 0.0
      %2460 = vmatpush1.msra.mxu0 0.0
      %2461 = vmatprep.subr.mxu0 0.0
      %2462 = vmatpush1.msra.mxu0 0.0
      %2463 = vmatprep.subr.mxu0 %v2423
      %2464 = vmatpush1.msra.mxu0 %v2422
      %2465 = vmatprep.subr.mxu0 %v2421
      %2466 = vmatpush1.msra.mxu0 %v2420
      %2467 = vmatprep.subr.mxu0 %v2419
      %2468 = vmatpush1.msra.mxu0 %v2418
      %2469 = vmatprep.subr.mxu0 %v2417
      %2470 = vmatpush1.msra.mxu0 %v2416
      %2471 = vmatprep.subr.mxu0 %v2415
      %2472 = vmatpush1.msra.mxu0 %v2414
      %2473 = vmatprep.subr.mxu0 %v2413
      %2474 = vmatpush1.msra.mxu0 %v2412
      %2475 = vmatprep.subr.mxu0 %v2411
      %2476 = vmatpush1.msra.mxu0 %v2410
      %2477 = vmatprep.subr.mxu0 %v2409
      %2478 = vmatpush1.msra.mxu0 %v2408
      %2479 = vmatprep.subr.mxu0 0.0
      %2480 = vmatpush2.msra.mxu0 0.0
      %2481 = vmatprep.subr.mxu0 0.0
      %2482 = vmatpush2.msra.mxu0 0.0
      %2483 = vmatprep.subr.mxu0 0.0
      %2484 = vmatpush2.msra.mxu0 0.0
      %2485 = vmatprep.subr.mxu0 0.0
      %2486 = vmatpush2.msra.mxu0 0.0
      %2487 = vmatprep.subr.mxu0 0.0
      %2488 = vmatpush2.msra.mxu0 0.0
      %2489 = vmatprep.subr.mxu0 0.0
      %2490 = vmatpush2.msra.mxu0 0.0
      %2491 = vmatprep.subr.mxu0 0.0
      %2492 = vmatpush2.msra.mxu0 0.0
      %2493 = vmatprep.subr.mxu0 0.0
      %2494 = vmatpush2.msra.mxu0 0.0
      %2495 = vmatprep.subr.mxu0 0.0
      %2496 = vmatpush2.msra.mxu0 0.0
      %2497 = vmatprep.subr.mxu0 0.0
      %2498 = vmatpush2.msra.mxu0 0.0
      %2499 = vmatprep.subr.mxu0 0.0
      %2500 = vmatpush2.msra.mxu0 0.0
      %2501 = vmatprep.subr.mxu0 0.0
      %2502 = vmatpush2.msra.mxu0 0.0
      %2503 = vmatprep.subr.mxu0 0.0
      %2504 = vmatpush2.msra.mxu0 0.0
      %2505 = vmatprep.subr.mxu0 0.0
      %2506 = vmatpush2.msra.mxu0 0.0
      %2507 = vmatprep.subr.mxu0 0.0
      %2508 = vmatpush2.msra.mxu0 0.0
      %2509 = vmatprep.subr.mxu0 0.0
      %2510 = vmatpush2.msra.mxu0 0.0
      %2511 = vmatprep.mubr.f32.mxu0 0.0
      %2512 = vmatmul.mubr.f32.gmra.mxu0 %v2439
      %v2513 = vpop.f32.mrf.mxu0
      %v2514 = vadd.f32 %v2431, %v2513
      %v2515 = vpop.f32.mrf.mxu0
      %v2516 = vadd.f32 %v2435, %v2515
      %2517 = vmatprep.mubr.f32.mxu0 0.0
      %2518 = vmatmul.mubr.f32.gmra.mxu0 %v2442
      %v2519 = vpop.f32.mrf.mxu0
      %v2520 = vadd.f32 %v2431, %v2519
      %v2521 = vpop.f32.mrf.mxu0
      %v2522 = vadd.f32 %v2435, %v2521
      %2523 = vmatprep.mubr.f32.mxu0 0.0
      %2524 = vmatmul.mubr.f32.gmra.mxu0 %v2445
      %v2525 = vpop.f32.mrf.mxu0
      %v2526 = vadd.f32 %v2431, %v2525
      %v2527 = vpop.f32.mrf.mxu0
      %v2528 = vadd.f32 %v2435, %v2527
      %2529 = vdwg.mxu0
      %v2530 = vmul.f32 %v2514, 0.5
      %v2531 = vmul.f32 %v2516, 0.5
      %v2532 = vmul.f32 %v2520, 0.5
      %v2533 = vmul.f32 %v2522, 0.5
      %v2534 = vmul.f32 %v2526, 0.5
      %v2535 = vmul.f32 %v2528, 0.5
      %v2536 = vmul.f32 %v2514, 0.70710677
      %v2537 = vmul.f32 %v2516, 0.70710677
      %v2538 = vmul.f32 %v2520, 0.70710677
      %v2539 = vmul.f32 %v2522, 0.70710677
      %v2540 = vmul.f32 %v2526, 0.70710677
      %v2541 = vmul.f32 %v2528, 0.70710677
      %vm2542 = vcmp.ge.f32.partialorder %v2536, 0.0
      %vm2543 = vcmp.ge.f32.partialorder %v2537, 0.0
      %vm2544 = vcmp.ge.f32.partialorder %v2538, 0.0
      %vm2545 = vcmp.ge.f32.partialorder %v2539, 0.0
      %vm2546 = vcmp.ge.f32.partialorder %v2540, 0.0
      %vm2547 = vcmp.ge.f32.partialorder %v2541, 0.0
      %v2548 = vsel %vm2542, 1.0, -1.0
      %v2549 = vsel %vm2543, 1.0, -1.0
      %v2550 = vsel %vm2544, 1.0, -1.0
      %v2551 = vsel %vm2545, 1.0, -1.0
      %v2552 = vsel %vm2546, 1.0, -1.0
      %v2553 = vsel %vm2547, 1.0, -1.0
      %v2554 = vand.u32 2147483647, %v2536
      %v2555 = vand.u32 2147483647, %v2537
      %v2556 = vand.u32 2147483647, %v2538
      %v2557 = vand.u32 2147483647, %v2539
      %v2558 = vand.u32 2147483647, %v2540
      %v2559 = vand.u32 2147483647, %v2541
      %v2560 = vmul.f32 %v2554, 0.3275911
      %v2561 = vmul.f32 %v2555, 0.3275911
      %v2562 = vmul.f32 %v2556, 0.3275911
      %v2563 = vmul.f32 %v2557, 0.3275911
      %v2564 = vmul.f32 %v2558, 0.3275911
      %v2565 = vmul.f32 %v2559, 0.3275911
      %v2566 = vadd.f32 %v2560, 1.0
      %v2567 = vadd.f32 %v2561, 1.0
      %v2568 = vadd.f32 %v2562, 1.0
      %v2569 = vadd.f32 %v2563, 1.0
      %v2570 = vadd.f32 %v2564, 1.0
      %v2571 = vadd.f32 %v2565, 1.0
      %v2572 = vrcp.pop %v2566
      %v2573 = vmul.f32 1.0, %v2572
      %v2574 = vrcp.pop %v2567
      %v2575 = vmul.f32 1.0, %v2574
      %v2576 = vrcp.pop %v2568
      %v2577 = vmul.f32 1.0, %v2576
      %v2578 = vrcp.pop %v2569
      %v2579 = vmul.f32 1.0, %v2578
      %v2580 = vrcp.pop %v2570
      %v2581 = vmul.f32 1.0, %v2580
      %v2582 = vrcp.pop %v2571
      %v2583 = vmul.f32 1.0, %v2582
      %v2584 = vmul.f32 %v2573, 1.0614054
      %v2585 = vmul.f32 %v2575, 1.0614054
      %v2586 = vmul.f32 %v2577, 1.0614054
      %v2587 = vmul.f32 %v2579, 1.0614054
      %v2588 = vmul.f32 %v2581, 1.0614054
      %v2589 = vmul.f32 %v2583, 1.0614054
      %v2590 = vadd.f32 %v2584, -1.4531521
      %v2591 = vadd.f32 %v2585, -1.4531521
      %v2592 = vadd.f32 %v2586, -1.4531521
      %v2593 = vadd.f32 %v2587, -1.4531521
      %v2594 = vadd.f32 %v2588, -1.4531521
      %v2595 = vadd.f32 %v2589, -1.4531521
      %v2596 = vmul.f32 %v2590, %v2573
      %v2597 = vmul.f32 %v2591, %v2575
      %v2598 = vmul.f32 %v2592, %v2577
      %v2599 = vmul.f32 %v2593, %v2579
      %v2600 = vmul.f32 %v2594, %v2581
      %v2601 = vmul.f32 %v2595, %v2583
      %v2602 = vadd.f32 %v2596, 1.4214138
      %v2603 = vadd.f32 %v2597, 1.4214138
      %v2604 = vadd.f32 %v2598, 1.4214138
      %v2605 = vadd.f32 %v2599, 1.4214138
      %v2606 = vadd.f32 %v2600, 1.4214138
      %v2607 = vadd.f32 %v2601, 1.4214138
      %v2608 = vmul.f32 %v2602, %v2573
      %v2609 = vmul.f32 %v2603, %v2575
      %v2610 = vmul.f32 %v2604, %v2577
      %v2611 = vmul.f32 %v2605, %v2579
      %v2612 = vmul.f32 %v2606, %v2581
      %v2613 = vmul.f32 %v2607, %v2583
      %v2614 = vadd.f32 %v2608, -0.28449672
      %v2615 = vadd.f32 %v2609, -0.28449672
      %v2616 = vadd.f32 %v2610, -0.28449672
      %v2617 = vadd.f32 %v2611, -0.28449672
      %v2618 = vadd.f32 %v2612, -0.28449672
      %v2619 = vadd.f32 %v2613, -0.28449672
      %v2620 = vmul.f32 %v2614, %v2573
      %v2621 = vmul.f32 %v2615, %v2575
      %v2622 = vmul.f32 %v2616, %v2577
      %v2623 = vmul.f32 %v2617, %v2579
      %v2624 = vmul.f32 %v2618, %v2581
      %v2625 = vmul.f32 %v2619, %v2583
      %v2626 = vadd.f32 %v2620, 0.2548296
      %v2627 = vadd.f32 %v2621, 0.2548296
      %v2628 = vadd.f32 %v2622, 0.2548296
      %v2629 = vadd.f32 %v2623, 0.2548296
      %v2630 = vadd.f32 %v2624, 0.2548296
      %v2631 = vadd.f32 %v2625, 0.2548296
      %v2632 = vmul.f32 %v2626, %v2573
      %v2633 = vmul.f32 %v2627, %v2575
      %v2634 = vmul.f32 %v2628, %v2577
      %v2635 = vmul.f32 %v2629, %v2579
      %v2636 = vmul.f32 %v2630, %v2581
      %v2637 = vmul.f32 %v2631, %v2583
      %v2638 = vsub.f32 0.0, %v2554
      %v2639 = vsub.f32 0.0, %v2555
      %v2640 = vsub.f32 0.0, %v2556
      %v2641 = vsub.f32 0.0, %v2557
      %v2642 = vsub.f32 0.0, %v2558
      %v2643 = vsub.f32 0.0, %v2559
      %v2644 = vmul.f32 %v2638, %v2554
      %v2645 = vmul.f32 %v2639, %v2555
      %v2646 = vmul.f32 %v2640, %v2556
      %v2647 = vmul.f32 %v2641, %v2557
      %v2648 = vmul.f32 %v2642, %v2558
      %v2649 = vmul.f32 %v2643, %v2559
      %v2650 = vmul.f32 %v2644, 1.442695
      %v2651 = vpow.pop %v2650
      %v2652 = vmul.f32 %v2645, 1.442695
      %v2653 = vpow.pop %v2652
      %v2654 = vmul.f32 %v2646, 1.442695
      %v2655 = vpow.pop %v2654
      %v2656 = vmul.f32 %v2647, 1.442695
      %v2657 = vpow.pop %v2656
      %v2658 = vmul.f32 %v2648, 1.442695
      %v2659 = vpow.pop %v2658
      %v2660 = vmul.f32 %v2649, 1.442695
      %v2661 = vpow.pop %v2660
      %v2662 = vmul.f32 %v2632, %v2651
      %v2663 = vmul.f32 %v2633, %v2653
      %v2664 = vmul.f32 %v2634, %v2655
      %v2665 = vmul.f32 %v2635, %v2657
      %v2666 = vmul.f32 %v2636, %v2659
      %v2667 = vmul.f32 %v2637, %v2661
      %v2668 = vsub.f32 1.0, %v2662
      %v2669 = vsub.f32 1.0, %v2663
      %v2670 = vsub.f32 1.0, %v2664
      %v2671 = vsub.f32 1.0, %v2665
      %v2672 = vsub.f32 1.0, %v2666
      %v2673 = vsub.f32 1.0, %v2667
      %v2674 = vmul.f32 %v2548, %v2668
      %v2675 = vmul.f32 %v2549, %v2669
      %v2676 = vmul.f32 %v2550, %v2670
      %v2677 = vmul.f32 %v2551, %v2671
      %v2678 = vmul.f32 %v2552, %v2672
      %v2679 = vmul.f32 %v2553, %v2673
      %v2680 = vadd.f32 %v2674, 1.0
      %v2681 = vadd.f32 %v2675, 1.0
      %v2682 = vadd.f32 %v2676, 1.0
      %v2683 = vadd.f32 %v2677, 1.0
      %v2684 = vadd.f32 %v2678, 1.0
      %v2685 = vadd.f32 %v2679, 1.0
      %v2686 = vmul.f32 %v2530, %v2680
      %v2687 = vmul.f32 %v2531, %v2681
      %v2688 = vmul.f32 %v2532, %v2682
      %v2689 = vmul.f32 %v2533, %v2683
      %v2690 = vmul.f32 %v2534, %v2684
      %v2691 = vmul.f32 %v2535, %v2685
      %s2692 = smul.u32 %s35, 256
      %s2693 = scalar_lea.vmem %s13, %s2692
      %v2694 = vld [vmem:[%s2693] sm:$0xff]
      %v2695 = vld [vmem:[%s2693 + $0x8] sm:$0xff]
      %v2696 = vld [vmem:[%s2693 + $0x10] sm:$0xff]
      %v2697 = vld [vmem:[%s2693 + $0x18] sm:$0xff]
      %v2698 = vld [vmem:[%s2693 + $0x20] sm:$0xff]
      %v2699 = vld [vmem:[%s2693 + $0x28] sm:$0xff]
      %v2700 = vld [vmem:[%s2693 + $0x30] sm:$0xff]
      %v2701 = vld [vmem:[%s2693 + $0x38] sm:$0xff]
      %v2702 = vld [vmem:[%s2693 + $0x40] sm:$0xff]
      %v2703 = vld [vmem:[%s2693 + $0x48] sm:$0xff]
      %v2704 = vld [vmem:[%s2693 + $0x50] sm:$0xff]
      %v2705 = vld [vmem:[%s2693 + $0x58] sm:$0xff]
      %v2706 = vld [vmem:[%s2693 + $0x60] sm:$0xff]
      %v2707 = vld [vmem:[%s2693 + $0x68] sm:$0xff]
      %v2708 = vld [vmem:[%s2693 + $0x70] sm:$0xff]
      %v2709 = vld [vmem:[%s2693 + $0x78] sm:$0xff]
      %v2710 = vld [vmem:[%s2693 + $0x80] sm:$0xff]
      %v2711 = vld [vmem:[%s2693 + $0x88] sm:$0xff]
      %v2712 = vld [vmem:[%s2693 + $0x90] sm:$0xff]
      %v2713 = vld [vmem:[%s2693 + $0x98] sm:$0xff]
      %v2714 = vld [vmem:[%s2693 + $0xa0] sm:$0xff]
      %v2715 = vld [vmem:[%s2693 + $0xa8] sm:$0xff]
      %v2716 = vld [vmem:[%s2693 + $0xb0] sm:$0xff]
      %v2717 = vld [vmem:[%s2693 + $0xb8] sm:$0xff]
      %v2718 = vld [vmem:[%s2693 + $0xc0] sm:$0xff]
      %v2719 = vld [vmem:[%s2693 + $0xc8] sm:$0xff]
      %v2720 = vld [vmem:[%s2693 + $0xd0] sm:$0xff]
      %v2721 = vld [vmem:[%s2693 + $0xd8] sm:$0xff]
      %v2722 = vld [vmem:[%s2693 + $0xe0] sm:$0xff]
      %v2723 = vld [vmem:[%s2693 + $0xe8] sm:$0xff]
      %v2724 = vld [vmem:[%s2693 + $0xf0] sm:$0xff]
      %v2725 = vld [vmem:[%s2693 + $0xf8] sm:$0xff]
      %s2726 = scalar_lea.vmem %s14, %s35
      %v2727 = vld [vmem:[%s2726] sm:$0x1]
      %v2729 = vlaneseq
      %v2730 = vshrl.u32 %v2729, 7
      %v2731 = vsub.s32 0, %v2730
      %v2732 = vrot.slane %v2727, %v2731
      %2734 = vmatprep.subr.mxu0 0.0
      %2735 = vmatpush1.msra.mxu0 %v2709
      %2736 = vmatprep.subr.mxu0 0.0
      %2737 = vmatpush1.msra.mxu0 %v2708
      %2738 = vmatprep.subr.mxu0 0.0
      %2739 = vmatpush1.msra.mxu0 %v2707
      %2740 = vmatprep.subr.mxu0 0.0
      %2741 = vmatpush1.msra.mxu0 %v2706
      %2742 = vmatprep.subr.mxu0 0.0
      %2743 = vmatpush1.msra.mxu0 %v2705
      %2744 = vmatprep.subr.mxu0 0.0
      %2745 = vmatpush1.msra.mxu0 %v2704
      %2746 = vmatprep.subr.mxu0 0.0
      %2747 = vmatpush1.msra.mxu0 %v2703
      %2748 = vmatprep.subr.mxu0 0.0
      %2749 = vmatpush1.msra.mxu0 %v2702
      %2750 = vmatprep.subr.mxu0 0.0
      %2751 = vmatpush1.msra.mxu0 %v2701
      %2752 = vmatprep.subr.mxu0 0.0
      %2753 = vmatpush1.msra.mxu0 %v2700
      %2754 = vmatprep.subr.mxu0 0.0
      %2755 = vmatpush1.msra.mxu0 %v2699
      %2756 = vmatprep.subr.mxu0 0.0
      %2757 = vmatpush1.msra.mxu0 %v2698
      %2758 = vmatprep.subr.mxu0 0.0
      %2759 = vmatpush1.msra.mxu0 %v2697
      %2760 = vmatprep.subr.mxu0 0.0
      %2761 = vmatpush1.msra.mxu0 %v2696
      %2762 = vmatprep.subr.mxu0 0.0
      %2763 = vmatpush1.msra.mxu0 %v2695
      %2764 = vmatprep.subr.mxu0 0.0
      %2765 = vmatpush1.msra.mxu0 %v2694
      %2766 = vmatprep.subr.mxu0 0.0
      %2767 = vmatpush2.msra.mxu0 %v2725
      %2768 = vmatprep.subr.mxu0 0.0
      %2769 = vmatpush2.msra.mxu0 %v2724
      %2770 = vmatprep.subr.mxu0 0.0
      %2771 = vmatpush2.msra.mxu0 %v2723
      %2772 = vmatprep.subr.mxu0 0.0
      %2773 = vmatpush2.msra.mxu0 %v2722
      %2774 = vmatprep.subr.mxu0 0.0
      %2775 = vmatpush2.msra.mxu0 %v2721
      %2776 = vmatprep.subr.mxu0 0.0
      %2777 = vmatpush2.msra.mxu0 %v2720
      %2778 = vmatprep.subr.mxu0 0.0
      %2779 = vmatpush2.msra.mxu0 %v2719
      %2780 = vmatprep.subr.mxu0 0.0
      %2781 = vmatpush2.msra.mxu0 %v2718
      %2782 = vmatprep.subr.mxu0 0.0
      %2783 = vmatpush2.msra.mxu0 %v2717
      %2784 = vmatprep.subr.mxu0 0.0
      %2785 = vmatpush2.msra.mxu0 %v2716
      %2786 = vmatprep.subr.mxu0 0.0
      %2787 = vmatpush2.msra.mxu0 %v2715
      %2788 = vmatprep.subr.mxu0 0.0
      %2789 = vmatpush2.msra.mxu0 %v2714
      %2790 = vmatprep.subr.mxu0 0.0
      %2791 = vmatpush2.msra.mxu0 %v2713
      %2792 = vmatprep.subr.mxu0 0.0
      %2793 = vmatpush2.msra.mxu0 %v2712
      %2794 = vmatprep.subr.mxu0 0.0
      %2795 = vmatpush2.msra.mxu0 %v2711
      %2796 = vmatprep.subr.mxu0 0.0
      %2797 = vmatpush2.msra.mxu0 %v2710
      %2798 = vmatprep.mubr.f32.mxu0 %v2687
      %2799 = vmatmul.mubr.f32.gmra.mxu0 %v2686
      %v2800 = vpop.f32.mrf.mxu0
      %v2801 = vadd.f32 %v2732, %v2800
      %v2802 = vpop.f32.mrf.mxu0
      %2803 = vmatprep.mubr.f32.mxu0 %v2689
      %2804 = vmatmul.mubr.f32.gmra.mxu0 %v2688
      %v2805 = vpop.f32.mrf.mxu0
      %v2806 = vadd.f32 %v2732, %v2805
      %v2807 = vpop.f32.mrf.mxu0
      %2808 = vmatprep.mubr.f32.mxu0 %v2691
      %2809 = vmatmul.mubr.f32.gmra.mxu0 %v2690
      %v2810 = vpop.f32.mrf.mxu0
      %v2811 = vadd.f32 %v2732, %v2810
      %v2812 = vpop.f32.mrf.mxu0
      %2813 = vdwg.mxu0
      %v2814 = vadd.f32 %v2341, %v2801
      %v2815 = vadd.f32 %v2342, %v2806
      %v2816 = vadd.f32 %v2343, %v2811
      %2817 = vst.msk [vmem:[#allocation2] sm:$0xff] %vm679, %v2814
      %2818 = vst.msk [vmem:[#allocation2 + $0x8] sm:$0xff] %vm679, %v2815
      %2819 = vst.msk [vmem:[#allocation2 + $0x10] sm:$0xff] %vm679, %v2816
      %p2820 = scmp.eq.s32.totalorder %s35, 1
      // Predicated region
      $region101: #{vjepa2_predictor_forward.3} parent=95 // pred_check
        %p2821 = pneg %p2820
      $region102: #{vjepa2_predictor_forward.3} parent=95 // pred_check_branch
        %2823 = sbr.rel (%p2821) target = $region104
      $region103: #{vjepa2_predictor_forward.3} parent=95 // pred_region
        %v2824 = vld [vmem:[%s15] sm:$0x1]
        %v2825 = vld [vmem:[%s16] sm:$0x1]
        %v2826 = vsel %vm679, %v2814, 0.0
        %2827 = vadd.xlane.f32.xlu0 %v2826
        %v2828 = vpop.xlane.xlu0 %2827
        %v2829 = vsel %vm679, %v2815, 0.0
        %2830 = vadd.xlane.f32.xlu0 %v2829
        %v2831 = vpop.xlane.xlu0 %2830
        %v2832 = vsel %vm679, %v2816, 0.0
        %2833 = vadd.xlane.f32.xlu0 %v2832
        %v2834 = vpop.xlane.xlu0 %2833
        %v2835 = vmul.f32 %v2828, %v689
        %v2836 = vmul.f32 %v2831, %v689
        %v2837 = vmul.f32 %v2834, %v689
        %v2838 = vsub.f32 %v2814, %v2835
        %v2839 = vsub.f32 %v2815, %v2836
        %v2840 = vsub.f32 %v2816, %v2837
        %v2841 = vmul.f32 %v2838, %v2838
        %v2842 = vmul.f32 %v2839, %v2839
        %v2843 = vmul.f32 %v2840, %v2840
        %v2844 = vsel %vm679, %v2841, 0.0
        %2845 = vadd.xlane.f32.xlu0 %v2844
        %v2846 = vpop.xlane.xlu0 %2845
        %v2847 = vsel %vm679, %v2842, 0.0
        %2848 = vadd.xlane.f32.xlu0 %v2847
        %v2849 = vpop.xlane.xlu0 %2848
        %v2850 = vsel %vm679, %v2843, 0.0
        %2851 = vadd.xlane.f32.xlu0 %v2850
        %v2852 = vpop.xlane.xlu0 %2851
        %v2853 = vmul.f32 %v2846, %v689
        %v2854 = vmul.f32 %v2849, %v689
        %v2855 = vmul.f32 %v2852, %v689
        %v2856 = vadd.f32 %v2853, 1e-06
        %v2857 = vadd.f32 %v2854, 1e-06
        %v2858 = vadd.f32 %v2855, 1e-06
        %v2859 = vrsqrt.pop %v2856
        %v2860 = vrsqrt.pop %v2857
        %v2861 = vrsqrt.pop %v2858
        %v2862 = vmul.f32 %v2838, %v2859
        %v2863 = vmul.f32 %v2839, %v2860
        %v2864 = vmul.f32 %v2840, %v2861
        %v2866 = vlaneseq
        %v2867 = vshrl.u32 %v2866, 7
        %v2868 = vsub.s32 0, %v2867
        %v2869 = vrot.slane %v2824, %v2868
        %v2871 = vmul.f32 %v2862, %v2869
        %v2872 = vmul.f32 %v2863, %v2869
        %v2873 = vmul.f32 %v2864, %v2869
        %v2875 = vlaneseq
        %v2876 = vshrl.u32 %v2875, 7
        %v2877 = vsub.s32 0, %v2876
        %v2878 = vrot.slane %v2825, %v2877
        %v2880 = vadd.f32 %v2871, %v2878
        %v2881 = vadd.f32 %v2872, %v2878
        %v2882 = vadd.f32 %v2873, %v2878
        %v2883 = vld [vmem:[%s17] sm:$0xff]
        %v2884 = vld [vmem:[%s17 + $0x8] sm:$0xff]
        %v2885 = vld [vmem:[%s17 + $0x10] sm:$0xff]
        %v2886 = vld [vmem:[%s17 + $0x18] sm:$0xff]
        %v2887 = vld [vmem:[%s17 + $0x20] sm:$0xff]
        %v2888 = vld [vmem:[%s17 + $0x28] sm:$0xff]
        %v2889 = vld [vmem:[%s17 + $0x30] sm:$0xff]
        %v2890 = vld [vmem:[%s17 + $0x38] sm:$0xff]
        %v2891 = vld [vmem:[%s18] sm:$0x1]
        %v2893 = vlaneseq
        %v2894 = vshrl.u32 %v2893, 7
        %v2895 = vsub.s32 0, %v2894
        %v2896 = vrot.slane %v2891, %v2895
        %v2899 = vsel %vm679, %v2880, 0
        %v2902 = vsel %vm679, %v2881, 0
        %v2905 = vsel %vm679, %v2882, 0
        %2907 = vmatprep.subr.mxu0 0.0
        %2908 = vmatpush1.msra.mxu0 0.0
        %2909 = vmatprep.subr.mxu0 0.0
        %2910 = vmatpush1.msra.mxu0 0.0
        %2911 = vmatprep.subr.mxu0 0.0
        %2912 = vmatpush1.msra.mxu0 0.0
        %2913 = vmatprep.subr.mxu0 0.0
        %2914 = vmatpush1.msra.mxu0 0.0
        %2915 = vmatprep.subr.mxu0 0.0
        %2916 = vmatpush1.msra.mxu0 0.0
        %2917 = vmatprep.subr.mxu0 0.0
        %2918 = vmatpush1.msra.mxu0 0.0
        %2919 = vmatprep.subr.mxu0 0.0
        %2920 = vmatpush1.msra.mxu0 0.0
        %2921 = vmatprep.subr.mxu0 0.0
        %2922 = vmatpush1.msra.mxu0 0.0
        %2923 = vmatprep.subr.mxu0 0.0
        %2924 = vmatpush1.msra.mxu0 %v2890
        %2925 = vmatprep.subr.mxu0 0.0
        %2926 = vmatpush1.msra.mxu0 %v2889
        %2927 = vmatprep.subr.mxu0 0.0
        %2928 = vmatpush1.msra.mxu0 %v2888
        %2929 = vmatprep.subr.mxu0 0.0
        %2930 = vmatpush1.msra.mxu0 %v2887
        %2931 = vmatprep.subr.mxu0 0.0
        %2932 = vmatpush1.msra.mxu0 %v2886
        %2933 = vmatprep.subr.mxu0 0.0
        %2934 = vmatpush1.msra.mxu0 %v2885
        %2935 = vmatprep.subr.mxu0 0.0
        %2936 = vmatpush1.msra.mxu0 %v2884
        %2937 = vmatprep.subr.mxu0 0.0
        %2938 = vmatpush1.msra.mxu0 %v2883
        %2939 = vmatprep.subr.mxu0 0.0
        %2940 = vmatpush2.msra.mxu0 0.0
        %2941 = vmatprep.subr.mxu0 0.0
        %2942 = vmatpush2.msra.mxu0 0.0
        %2943 = vmatprep.subr.mxu0 0.0
        %2944 = vmatpush2.msra.mxu0 0.0
        %2945 = vmatprep.subr.mxu0 0.0
        %2946 = vmatpush2.msra.mxu0 0.0
        %2947 = vmatprep.subr.mxu0 0.0
        %2948 = vmatpush2.msra.mxu0 0.0
        %2949 = vmatprep.subr.mxu0 0.0
        %2950 = vmatpush2.msra.mxu0 0.0
        %2951 = vmatprep.subr.mxu0 0.0
        %2952 = vmatpush2.msra.mxu0 0.0
        %2953 = vmatprep.subr.mxu0 0.0
        %2954 = vmatpush2.msra.mxu0 0.0
        %2955 = vmatprep.subr.mxu0 0.0
        %2956 = vmatpush2.msra.mxu0 0.0
        %2957 = vmatprep.subr.mxu0 0.0
        %2958 = vmatpush2.msra.mxu0 0.0
        %2959 = vmatprep.subr.mxu0 0.0
        %2960 = vmatpush2.msra.mxu0 0.0
        %2961 = vmatprep.subr.mxu0 0.0
        %2962 = vmatpush2.msra.mxu0 0.0
        %2963 = vmatprep.subr.mxu0 0.0
        %2964 = vmatpush2.msra.mxu0 0.0
        %2965 = vmatprep.subr.mxu0 0.0
        %2966 = vmatpush2.msra.mxu0 0.0
        %2967 = vmatprep.subr.mxu0 0.0
        %2968 = vmatpush2.msra.mxu0 0.0
        %2969 = vmatprep.subr.mxu0 0.0
        %2970 = vmatpush2.msra.mxu0 0.0
        %2971 = vmatprep.mubr.f32.mxu0 0.0
        %2972 = vmatmul.mubr.f32.gmra.mxu0 %v2899
        %v2973 = vpop.f32.mrf.mxu0
        %v2974 = vadd.f32 %v2896, %v2973
        %v2975 = vpop.f32.mrf.mxu0
        %2976 = vmatprep.mubr.f32.mxu0 0.0
        %2977 = vmatmul.mubr.f32.gmra.mxu0 %v2902
        %v2978 = vpop.f32.mrf.mxu0
        %v2979 = vadd.f32 %v2896, %v2978
        %v2980 = vpop.f32.mrf.mxu0
        %2981 = vmatprep.mubr.f32.mxu0 0.0
        %2982 = vmatmul.mubr.f32.gmra.mxu0 %v2905
        %v2983 = vpop.f32.mrf.mxu0
        %v2984 = vadd.f32 %v2896, %v2983
        %v2985 = vpop.f32.mrf.mxu0
        %2986 = vdwg.mxu0
        %vm2987 = vcmask 261120
        %2988 = vst.msk [vmem:[%s654] sm:$0xff] %vm2987, %v2974
        %2989 = vst.msk [vmem:[%s654 + $0x8] sm:$0xff] %vm2987, %v2979
        %2990 = vst.msk [vmem:[%s654 + $0x10] sm:$0xff] %vm2987, %v2984
      $region104: #{vjepa2_predictor_forward.3} parent=95 // pred_fallthru
        _
      %p2991 = scmp.lt.s32.totalorder %s34, 1
      %s2992 = scalar_select %p2991, %s34, 1
      %s2993 = smul.addr %s2992, 3
      %s2994 = smul.addr %s2993, 8
      %s2995 = scalar_lea.vmem %s19, %s2994
      // Predicated region
      $region105: #{vjepa2_predictor_forward.3} parent=95 // pred_check
        %p2996 = pneg %p474
      $region106: #{vjepa2_predictor_forward.3} parent=95 // pred_check_branch
        %2998 = sbr.rel (%p2996) target = $region108
      $region107: #{vjepa2_predictor_forward.3} parent=95 // pred_region
        _
      $region108: #{vjepa2_predictor_forward.3} parent=95 // pred_fallthru
        _
    $region96: #{vjepa2_predictor_forward.3} parent=5 // pred_fallthru
      _
    %p2999 = scmp.le.s32.totalorder 2, %s25
    // Predicated region
    $region109: #{vjepa2_predictor_forward.3} parent=5 // pred_check
      %p3000 = pneg %p2999
    $region110: #{vjepa2_predictor_forward.3} parent=5 // pred_check_branch
      %3002 = sbr.rel (%p3000) target = $region112
    $region111: #{vjepa2_predictor_forward.3} parent=5 // pred_region
      %s3003 = ssub.s32 %s25, 2
      // Predicated region
      $region113: #{vjepa2_predictor_forward.3} parent=111 // pred_check
        %p3004 = pneg %p480
      $region114: #{vjepa2_predictor_forward.3} parent=111 // pred_check_branch
        %3006 = sbr.rel (%p3004) target = $region116
      $region115: #{vjepa2_predictor_forward.3} parent=111 // pred_region
        %p3007 = scmp.lt.s32.totalorder %s36, 1
        %s3008 = scalar_select %p3007, %s36, 1
        %s3009 = smul.addr %s3008, 3
        %s3010 = smul.addr %s3009, 8
        %s3011 = scalar_lea.vmem %s19, %s3010
      $region116: #{vjepa2_predictor_forward.3} parent=111 // pred_fallthru
        _
    $region112: #{vjepa2_predictor_forward.3} parent=5 // pred_fallthru
      _
  $region6: #{vjepa2_predictor_forward.3} parent=0 // loop_footer
    %s29 = sadd.s32 1, %s25
  $region7: #{vjepa2_predictor_forward.3} parent=0 // loop_footer_branch
    %24 = sbr.rel target = $region3
  $region8: #{vjepa2_predictor_forward.3} parent=0 // loop_exit
    _

</llo_original>
